<compile_context>
chip_gen: v5e
topology: v5e:2x2
jax: 0.10.0
libtpu: 0.0.40
codegen_flags: <defaults>
</compile_context>

<pallas_src>
import functools

import jax
import jax.numpy as jnp
from jax.experimental import pallas as pl
from jax.experimental.pallas import tpu as pltpu

INPUT_SIZE = 28
NUM_CLASSES = 9
C1, C2, C3 = 128, 64, 32          # conv1/conv2/conv3 output channels
K, STRIDE = 4, 2                  # kernel size / stride shared by all convs
L1 = (INPUT_SIZE - K) // STRIDE + 1   # 13
L2 = (L1 - K) // STRIDE + 1           # 5
L3 = (L2 - K) // STRIDE + 1           # 1  (so squeeze(-1) + Linear(32,.) works)
assert L3 == 1

# Live (non-dead) positions actually needed to produce the output.
N_POS2 = K                        # conv2 positions 0..3 feed conv3's single window
N_POS1 = STRIDE * (N_POS2 - 1) + K    # 10 conv1 positions feed those (h1[10..12] dead)
W1_COLS = N_POS1 * C1             # 1280
PAIR_K = (K + STRIDE) * C1        # 768: 6 conv1 positions cover a pair of conv2 outputs
OUT_PAD = 128                     # lane-dense output slab; columns 9..127 are zero


def _sigmoid(v):
    # sigmoid(x) = 0.5 * tanh(0.5 * x) + 0.5 : single EUP op instead of exp + divide.
    return 0.5 * jnp.tanh(0.5 * v) + 0.5


def _conv1d_pose_kernel(x_ref, w1_ref, w2_ref, w3_ref, w4_ref,
                        b1_ref, b2_ref, b3_ref, b4_ref, o_ref):
    """One batch tile: x_ref [TB, 28] -> o_ref [TB, 128] (first 9 lanes valid)."""
    f32 = jnp.float32
    bf16 = jnp.bfloat16

    xb = x_ref[...].astype(bf16)                                        # [TB, 28]

    # conv1: single block-banded matmul producing all 10 live positions side by side.
    # h1 lanes [128*p : 128*(p+1)] hold position p (this IS the im2col slab for conv2).
    pre1 = jnp.dot(xb, w1_ref[...], preferred_element_type=f32) + b1_ref[...]
    h1 = _sigmoid(pre1).astype(bf16)                                    # [TB, 1280]

    # conv2: positions paired (0,1) and (2,3) via one shared overlapped-K weight
    # [768, 128]; inputs are 128-aligned static lane windows of the h1 slab.
    w2p = w2_ref[...]
    b2 = b2_ref[...]
    preA = jnp.dot(h1[:, 0:PAIR_K], w2p, preferred_element_type=f32) + b2
    preB = jnp.dot(h1[:, 2 * STRIDE * C1:W1_COLS], w2p,
                   preferred_element_type=f32) + b2
    h2 = jnp.concatenate([_sigmoid(preA).astype(bf16),
                          _sigmoid(preB).astype(bf16)], axis=1)         # [TB, 256]

    # conv3 (single live output position): [TB,256] @ [256,32].
    pre3 = jnp.dot(h2, w3_ref[...], preferred_element_type=f32) + b3_ref[...]
    h3 = _sigmoid(pre3).astype(bf16)                                    # [TB, 32]

    # fc4 (lane-padded to 128 output columns) + the module's final activation, which is
    # named `softmax` but is actually nn.ReLU().
    logits = jnp.dot(h3, w4_ref[...], preferred_element_type=f32) + b4_ref[...]
    o_ref[...] = jnp.maximum(logits, 0.0)


def pack_params(params):
    """Repack PyTorch-layout weights into the kernel's matmul operands."""
    bf16 = jnp.bfloat16
    w1 = params["conv1_w"]            # [128, 1, 4]
    w2 = params["conv2_w"]            # [64, 128, 4]
    w3 = params["conv3_w"]            # [32, 64, 4]
    w4 = params["fc4_w"]              # [9, 32]

    # conv1 block-banded weight [28, 1280]: column block t holds w1^T in rows 2t..2t+3.
    w1r = jnp.transpose(w1[:, 0, :], (1, 0))                            # [4, 128]
    w1_band = jnp.zeros((INPUT_SIZE, W1_COLS), jnp.float32)
    for t in range(N_POS1):
        w1_band = w1_band.at[STRIDE * t:STRIDE * t + K,
                             t * C1:(t + 1) * C1].set(w1r)

    # conv2 paired weight [768, 128]: cols 0:64 = position t (rows 0:512),
    # cols 64:128 = position t+1 (rows 256:768).
    w2r = jnp.transpose(w2, (2, 1, 0)).reshape(K * C1, C2)              # [512, 64]
    w2_pair = jnp.zeros((PAIR_K, 2 * C2), jnp.float32)
    w2_pair = w2_pair.at[0:K * C1, 0:C2].set(w2r)
    w2_pair = w2_pair.at[STRIDE * C1:STRIDE * C1 + K * C1, C2:2 * C2].set(w2r)

    w3r = jnp.transpose(w3, (2, 1, 0)).reshape(K * C2, C3)              # [256, 32]
    w4p = jnp.zeros((C3, OUT_PAD), jnp.float32).at[:, :NUM_CLASSES].set(
        jnp.transpose(w4, (1, 0)))                                      # [32, 128]

    b1t = jnp.tile(params["conv1_b"], (N_POS1,))[None, :]               # [1, 1280]
    b2p = jnp.tile(params["conv2_b"], (2,))[None, :]                    # [1, 128]
    b3 = params["conv3_b"][None, :]                                     # [1, 32]
    b4 = jnp.zeros((1, OUT_PAD), jnp.float32).at[0, :NUM_CLASSES].set(
        params["fc4_b"])                                                # [1, 128]

    return {
        "w1": w1_band.astype(bf16), "w2": w2_pair.astype(bf16),
        "w3": w3r.astype(bf16), "w4": w4p.astype(bf16),
        "b1": b1t, "b2": b2p, "b3": b3, "b4": b4,
    }


def _pick_tile(batch, block_b):
    """Batch tile: multiple of 16 (unless it equals B) and >=2 grid steps when B>=32."""
    tb = min(block_b, batch)
    if tb == batch:
        if batch >= 32:
            # Split into >= 2 tiles so both v7x TensorCores get work.
            tb = ((batch + 1) // 2 + 15) // 16 * 16
    else:
        tb = max(16, (tb // 16) * 16)
    return tb


@functools.partial(jax.jit, static_argnames=("block_b",))
def conv1d_pose_classifier(x, packed, *, block_b=1024):
    """x: [B, 28] float32 -> [B, 9] float32 (Conv1DPoseClassifier.forward, eval)."""
    B = x.shape[0]
    tb = _pick_tile(B, block_b)
    grid = (pl.cdiv(B, tb),)

    const = lambda i: (0, 0)       # weights/biases: single block, VMEM-resident
    flops_per_row = 2 * (INPUT_SIZE * W1_COLS + 2 * PAIR_K * 2 * C2
                         + K * C2 * C3 + C3 * OUT_PAD)
    trans_per_row = W1_COLS + 2 * 2 * C2 + C3
    weight_bytes = 2 * (INPUT_SIZE * W1_COLS + PAIR_K * 2 * C2 + K * C2 * C3
                        + C3 * OUT_PAD)

    out = pl.pallas_call(
        _conv1d_pose_kernel,
        out_shape=jax.ShapeDtypeStruct((B, OUT_PAD), jnp.float32),
        grid=grid,
        in_specs=[
            pl.BlockSpec((tb, INPUT_SIZE), lambda i: (i, 0)),           # batch-tiled input
            pl.BlockSpec((INPUT_SIZE, W1_COLS), const),                 # conv1 banded W
            pl.BlockSpec((PAIR_K, 2 * C2), const),                      # conv2 paired W
            pl.BlockSpec((K * C2, C3), const),                          # conv3 W
            pl.BlockSpec((C3, OUT_PAD), const),                         # fc4 W (padded)
            pl.BlockSpec((1, W1_COLS), const),                          # conv1 bias (tiled)
            pl.BlockSpec((1, 2 * C2), const),                           # conv2 bias (paired)
            pl.BlockSpec((1, C3), const),                               # conv3 bias
            pl.BlockSpec((1, OUT_PAD), const),                          # fc4 bias (padded)
        ],
        out_specs=pl.BlockSpec((tb, OUT_PAD), lambda i: (i, 0)),        # lane-dense slab
        compiler_params=pltpu.CompilerParams(
            dimension_semantics=("parallel",),
            vmem_limit_bytes=48 * 1024 * 1024),
        cost_estimate=pl.CostEstimate(
            flops=B * flops_per_row,
            transcendentals=B * trans_per_row,
            bytes_accessed=B * (INPUT_SIZE + OUT_PAD) * 4 + weight_bytes),
    )(x, packed["w1"], packed["w2"], packed["w3"], packed["w4"],
      packed["b1"], packed["b2"], packed["b3"], packed["b4"])
    return out[:, :NUM_CLASSES]


def init_params(key):
    """Deterministic parameters (fan-in scaled conv init; fc4 mirrors _initialize_weights)."""
    ks = jax.random.split(key, 8)

    def uniform(k, shape, fan_in):
        bound = 1.0 / float(fan_in) ** 0.5
        return jax.random.uniform(k, shape, jnp.float32, -bound, bound)

    return {
        "conv1_w": uniform(ks[0], (C1, 1, K), 1 * K),
        "conv1_b": uniform(ks[1], (C1,), 1 * K),
        "conv2_w": uniform(ks[2], (C2, C1, K), C1 * K),
        "conv2_b": uniform(ks[3], (C2,), C1 * K),
        "conv3_w": uniform(ks[4], (C3, C2, K), C2 * K),
        "conv3_b": uniform(ks[5], (C3,), C2 * K),
        # fc4 per _initialize_weights(): weight ~ N(0, 1), bias zero.
        "fc4_w": jax.random.normal(ks[6], (NUM_CLASSES, C3), jnp.float32),
        "fc4_b": jnp.zeros((NUM_CLASSES,), jnp.float32),
    }


def reference_forward(x, params):
    """Plain-JAX reference using real Conv1d ops, mirroring the kernel's mixed precision
    (bf16 matmul inputs, f32 accumulation, f32 elementwise)."""
    bf16 = jnp.bfloat16

    def conv1d(h, w, b):                           # h: [B, Cin, L], w: [Cout, Cin, K]
        y = jax.lax.conv_general_dilated(
            h.astype(bf16), w.astype(bf16),
            window_strides=(STRIDE,), padding="VALID",
            dimension_numbers=("NCH", "OIH", "NCH"),
            preferred_element_type=jnp.float32)
        return y + b[None, :, None]

    h = x[:, None, :]                                                   # unsqueeze(1)
    h = jax.nn.sigmoid(conv1d(h, params["conv1_w"], params["conv1_b"]))
    h = jax.nn.sigmoid(conv1d(h, params["conv2_w"], params["conv2_b"]))
    h = jax.nn.sigmoid(conv1d(h, params["conv3_w"], params["conv3_b"]))
    h = h[:, :, 0]                                                      # squeeze(-1)
    logits = jnp.dot(h.astype(bf16), params["fc4_w"].astype(bf16).T,
                     preferred_element_type=jnp.float32) + params["fc4_b"]
    return jnp.maximum(logits, 0.0)                # module's `softmax` attr is nn.ReLU()


if __name__ == "__main__":
    key = jax.random.PRNGKey(0)
    k_x, k_p = jax.random.split(key)

    B = 256                                        # small demo batch -> 2 grid steps of 128
    x = jax.random.normal(k_x, (B, INPUT_SIZE), dtype=jnp.float32)
    params = init_params(k_p)
    packed = pack_params(params)

    out = conv1d_pose_classifier(x, packed)
    out = jax.block_until_ready(out)

    ref = reference_forward(x, params)
    assert out.shape == (B, NUM_CLASSES)
    max_err = float(jnp.max(jnp.abs(out - ref)))
    assert jnp.allclose(out, ref, atol=1e-2, rtol=1e-2), f"max abs err {max_err}"

    print("KERNEL_OK")
</pallas_src>

<mosaic_0001>
module attributes {stable_mosaic.version = 11 : i64} {
  func.func @_conv1d_pose_kernel(%arg0: i32, %arg1: memref<128x28xf32, #tpu.memory_space<vmem>>, %arg2: memref<28x1280xbf16, #tpu.memory_space<vmem>>, %arg3: memref<768x128xbf16, #tpu.memory_space<vmem>>, %arg4: memref<256x32xbf16, #tpu.memory_space<vmem>>, %arg5: memref<32x128xbf16, #tpu.memory_space<vmem>>, %arg6: memref<1x1280xf32, #tpu.memory_space<vmem>>, %arg7: memref<1x128xf32, #tpu.memory_space<vmem>>, %arg8: memref<1x32xf32, #tpu.memory_space<vmem>>, %arg9: memref<1x128xf32, #tpu.memory_space<vmem>>, %arg10: memref<128x128xf32, #tpu.memory_space<vmem>>) attributes {dimension_semantics = [#tpu.dimension_semantics<parallel>], iteration_bounds = array<i64: 2>, scalar_prefetch = 0 : i64, scratch_operands = 0 : i64, tpu.core_type = #tpu.core_type<tc>, window_params = [{transform_indices = @transform_0, window_bounds = array<i64: 128, 28>}, {pipeline_mode = #tpu.pipeline_mode<synchronous>, transform_indices = @transform_1, window_bounds = array<i64: 28, 1280>}, {pipeline_mode = #tpu.pipeline_mode<synchronous>, transform_indices = @transform_2, window_bounds = array<i64: 768, 128>}, {pipeline_mode = #tpu.pipeline_mode<synchronous>, transform_indices = @transform_3, window_bounds = array<i64: 256, 32>}, {pipeline_mode = #tpu.pipeline_mode<synchronous>, transform_indices = @transform_4, window_bounds = array<i64: 32, 128>}, {pipeline_mode = #tpu.pipeline_mode<synchronous>, transform_indices = @transform_5, window_bounds = array<i64: 1, 1280>}, {pipeline_mode = #tpu.pipeline_mode<synchronous>, transform_indices = @transform_6, window_bounds = array<i64: 1, 128>}, {pipeline_mode = #tpu.pipeline_mode<synchronous>, transform_indices = @transform_7, window_bounds = array<i64: 1, 32>}, {pipeline_mode = #tpu.pipeline_mode<synchronous>, transform_indices = @transform_8, window_bounds = array<i64: 1, 128>}, {transform_indices = @transform_9, window_bounds = array<i64: 128, 128>}]} {
    %c0 = arith.constant 0 : index
    %c0_0 = arith.constant 0 : index
    %0 = vector.load %arg1[%c0, %c0_0] : memref<128x28xf32, #tpu.memory_space<vmem>>, vector<128x28xf32>
    %1 = arith.truncf %0 : vector<128x28xf32> to vector<128x28xbf16>
    %c0_1 = arith.constant 0 : index
    %c0_2 = arith.constant 0 : index
    %2 = vector.load %arg2[%c0_1, %c0_2] : memref<28x1280xbf16, #tpu.memory_space<vmem>>, vector<28x1280xbf16>
    %cst = arith.constant dense<0.000000e+00> : vector<128x1280xf32>
    %3 = tpu.matmul %1, %2, %cst {dimension_numbers = #tpu.dot_dimension_numbers<[1], [0], [0], [1], [0, 0, 1, 1], [], []>} : vector<128x28xbf16>, vector<28x1280xbf16>, vector<128x1280xf32> -> vector<128x1280xf32>
    %c0_3 = arith.constant 0 : index
    %c0_4 = arith.constant 0 : index
    %4 = vector.load %arg6[%c0_3, %c0_4] : memref<1x1280xf32, #tpu.memory_space<vmem>>, vector<1x1280xf32>
    %5 = vector.broadcast %4 : vector<1x1280xf32> to vector<128x1280xf32>
    %6 = arith.addf %3, %5 : vector<128x1280xf32>
    %cst_5 = arith.constant 5.000000e-01 : f32
    %7 = vector.broadcast %cst_5 : f32 to vector<128x1280xf32>
    %8 = arith.mulf %7, %6 : vector<128x1280xf32>
    %9 = math.tanh %8 : vector<128x1280xf32>
    %cst_6 = arith.constant 5.000000e-01 : f32
    %10 = vector.broadcast %cst_6 : f32 to vector<128x1280xf32>
    %11 = arith.mulf %10, %9 : vector<128x1280xf32>
    %cst_7 = arith.constant 5.000000e-01 : f32
    %12 = vector.broadcast %cst_7 : f32 to vector<128x1280xf32>
    %13 = arith.addf %11, %12 : vector<128x1280xf32>
    %14 = arith.truncf %13 : vector<128x1280xf32> to vector<128x1280xbf16>
    %c0_8 = arith.constant 0 : index
    %c0_9 = arith.constant 0 : index
    %15 = vector.load %arg3[%c0_8, %c0_9] : memref<768x128xbf16, #tpu.memory_space<vmem>>, vector<768x128xbf16>
    %c0_10 = arith.constant 0 : index
    %c0_11 = arith.constant 0 : index
    %16 = vector.load %arg7[%c0_10, %c0_11] : memref<1x128xf32, #tpu.memory_space<vmem>>, vector<1x128xf32>
    %17 = vector.extract_strided_slice %14 {offsets = [0, 0], sizes = [128, 768], strides = [1, 1]} : vector<128x1280xbf16> to vector<128x768xbf16>
    %cst_12 = arith.constant dense<0.000000e+00> : vector<128x128xf32>
    %18 = tpu.matmul %17, %15, %cst_12 {dimension_numbers = #tpu.dot_dimension_numbers<[1], [0], [0], [1], [0, 0, 1, 1], [], []>} : vector<128x768xbf16>, vector<768x128xbf16>, vector<128x128xf32> -> vector<128x128xf32>
    %19 = vector.broadcast %16 : vector<1x128xf32> to vector<128x128xf32>
    %20 = arith.addf %18, %19 : vector<128x128xf32>
    %21 = vector.extract_strided_slice %14 {offsets = [0, 512], sizes = [128, 768], strides = [1, 1]} : vector<128x1280xbf16> to vector<128x768xbf16>
    %cst_13 = arith.constant dense<0.000000e+00> : vector<128x128xf32>
    %22 = tpu.matmul %21, %15, %cst_13 {dimension_numbers = #tpu.dot_dimension_numbers<[1], [0], [0], [1], [0, 0, 1, 1], [], []>} : vector<128x768xbf16>, vector<768x128xbf16>, vector<128x128xf32> -> vector<128x128xf32>
    %23 = vector.broadcast %16 : vector<1x128xf32> to vector<128x128xf32>
    %24 = arith.addf %22, %23 : vector<128x128xf32>
    %cst_14 = arith.constant 5.000000e-01 : f32
    %25 = vector.broadcast %cst_14 : f32 to vector<128x128xf32>
    %26 = arith.mulf %25, %20 : vector<128x128xf32>
    %27 = math.tanh %26 : vector<128x128xf32>
    %cst_15 = arith.constant 5.000000e-01 : f32
    %28 = vector.broadcast %cst_15 : f32 to vector<128x128xf32>
    %29 = arith.mulf %28, %27 : vector<128x128xf32>
    %cst_16 = arith.constant 5.000000e-01 : f32
    %30 = vector.broadcast %cst_16 : f32 to vector<128x128xf32>
    %31 = arith.addf %29, %30 : vector<128x128xf32>
    %32 = arith.truncf %31 : vector<128x128xf32> to vector<128x128xbf16>
    %cst_17 = arith.constant 5.000000e-01 : f32
    %33 = vector.broadcast %cst_17 : f32 to vector<128x128xf32>
    %34 = arith.mulf %33, %24 : vector<128x128xf32>
    %35 = math.tanh %34 : vector<128x128xf32>
    %cst_18 = arith.constant 5.000000e-01 : f32
    %36 = vector.broadcast %cst_18 : f32 to vector<128x128xf32>
    %37 = arith.mulf %36, %35 : vector<128x128xf32>
    %cst_19 = arith.constant 5.000000e-01 : f32
    %38 = vector.broadcast %cst_19 : f32 to vector<128x128xf32>
    %39 = arith.addf %37, %38 : vector<128x128xf32>
    %40 = arith.truncf %39 : vector<128x128xf32> to vector<128x128xbf16>
    %41 = tpu.concatenate %32, %40 in 1 : vector<128x128xbf16>, vector<128x128xbf16> -> vector<128x256xbf16>
    %c0_20 = arith.constant 0 : index
    %c0_21 = arith.constant 0 : index
    %42 = vector.load %arg4[%c0_20, %c0_21] : memref<256x32xbf16, #tpu.memory_space<vmem>>, vector<256x32xbf16>
    %cst_22 = arith.constant dense<0.000000e+00> : vector<128x32xf32>
    %43 = tpu.matmul %41, %42, %cst_22 {dimension_numbers = #tpu.dot_dimension_numbers<[1], [0], [0], [1], [0, 0, 1, 1], [], []>} : vector<128x256xbf16>, vector<256x32xbf16>, vector<128x32xf32> -> vector<128x32xf32>
    %c0_23 = arith.constant 0 : index
    %c0_24 = arith.constant 0 : index
    %44 = vector.load %arg8[%c0_23, %c0_24] : memref<1x32xf32, #tpu.memory_space<vmem>>, vector<1x32xf32>
    %45 = vector.broadcast %44 : vector<1x32xf32> to vector<128x32xf32>
    %46 = arith.addf %43, %45 : vector<128x32xf32>
    %cst_25 = arith.constant 5.000000e-01 : f32
    %47 = vector.broadcast %cst_25 : f32 to vector<128x32xf32>
    %48 = arith.mulf %47, %46 : vector<128x32xf32>
    %49 = math.tanh %48 : vector<128x32xf32>
    %cst_26 = arith.constant 5.000000e-01 : f32
    %50 = vector.broadcast %cst_26 : f32 to vector<128x32xf32>
    %51 = arith.mulf %50, %49 : vector<128x32xf32>
    %cst_27 = arith.constant 5.000000e-01 : f32
    %52 = vector.broadcast %cst_27 : f32 to vector<128x32xf32>
    %53 = arith.addf %51, %52 : vector<128x32xf32>
    %54 = arith.truncf %53 : vector<128x32xf32> to vector<128x32xbf16>
    %c0_28 = arith.constant 0 : index
    %c0_29 = arith.constant 0 : index
    %55 = vector.load %arg5[%c0_28, %c0_29] : memref<32x128xbf16, #tpu.memory_space<vmem>>, vector<32x128xbf16>
    %cst_30 = arith.constant dense<0.000000e+00> : vector<128x128xf32>
    %56 = tpu.matmul %54, %55, %cst_30 {dimension_numbers = #tpu.dot_dimension_numbers<[1], [0], [0], [1], [0, 0, 1, 1], [], []>} : vector<128x32xbf16>, vector<32x128xbf16>, vector<128x128xf32> -> vector<128x128xf32>
    %c0_31 = arith.constant 0 : index
    %c0_32 = arith.constant 0 : index
    %57 = vector.load %arg9[%c0_31, %c0_32] : memref<1x128xf32, #tpu.memory_space<vmem>>, vector<1x128xf32>
    %58 = vector.broadcast %57 : vector<1x128xf32> to vector<128x128xf32>
    %59 = arith.addf %56, %58 : vector<128x128xf32>
    %cst_33 = arith.constant 0.000000e+00 : f32
    %60 = vector.broadcast %cst_33 : f32 to vector<128x128xf32>
    %61 = arith.maximumf %59, %60 : vector<128x128xf32>
    %c0_34 = arith.constant 0 : index
    %c0_35 = arith.constant 0 : index
    %62 = vector.load %arg10[%c0_34, %c0_35] : memref<128x128xf32, #tpu.memory_space<vmem>>, vector<128x128xf32>
    tpu.vector_store %arg10[%c0_34, %c0_35], %61 {strides = array<i32>} : memref<128x128xf32, #tpu.memory_space<vmem>>, vector<128x128xf32>,
    return
  }
  func.func @transform_0(%arg0: i32) -> (i32, i32) {
    %c0_i32 = arith.constant 0 : i32
    %c0_i32_0 = arith.constant 0 : i32
    return %arg0, %c0_i32 : i32, i32
  }
  func.func @transform_1(%arg0: i32) -> (i32, i32) {
    %c0_i32 = arith.constant 0 : i32
    %c0_i32_0 = arith.constant 0 : i32
    %c0_i32_1 = arith.constant 0 : i32
    return %c0_i32, %c0_i32_0 : i32, i32
  }
  func.func @transform_2(%arg0: i32) -> (i32, i32) {
    %c0_i32 = arith.constant 0 : i32
    %c0_i32_0 = arith.constant 0 : i32
    %c0_i32_1 = arith.constant 0 : i32
    return %c0_i32, %c0_i32_0 : i32, i32
  }
  func.func @transform_3(%arg0: i32) -> (i32, i32) {
    %c0_i32 = arith.constant 0 : i32
    %c0_i32_0 = arith.constant 0 : i32
    %c0_i32_1 = arith.constant 0 : i32
    return %c0_i32, %c0_i32_0 : i32, i32
  }
  func.func @transform_4(%arg0: i32) -> (i32, i32) {
    %c0_i32 = arith.constant 0 : i32
    %c0_i32_0 = arith.constant 0 : i32
    %c0_i32_1 = arith.constant 0 : i32
    return %c0_i32, %c0_i32_0 : i32, i32
  }
  func.func @transform_5(%arg0: i32) -> (i32, i32) {
    %c0_i32 = arith.constant 0 : i32
    %c0_i32_0 = arith.constant 0 : i32
    %c0_i32_1 = arith.constant 0 : i32
    return %c0_i32, %c0_i32_0 : i32, i32
  }
  func.func @transform_6(%arg0: i32) -> (i32, i32) {
    %c0_i32 = arith.constant 0 : i32
    %c0_i32_0 = arith.constant 0 : i32
    %c0_i32_1 = arith.constant 0 : i32
    return %c0_i32, %c0_i32_0 : i32, i32
  }
  func.func @transform_7(%arg0: i32) -> (i32, i32) {
    %c0_i32 = arith.constant 0 : i32
    %c0_i32_0 = arith.constant 0 : i32
    %c0_i32_1 = arith.constant 0 : i32
    return %c0_i32, %c0_i32_0 : i32, i32
  }
  func.func @transform_8(%arg0: i32) -> (i32, i32) {
    %c0_i32 = arith.constant 0 : i32
    %c0_i32_0 = arith.constant 0 : i32
    %c0_i32_1 = arith.constant 0 : i32
    return %c0_i32, %c0_i32_0 : i32, i32
  }
  func.func @transform_9(%arg0: i32) -> (i32, i32) {
    %c0_i32 = arith.constant 0 : i32
    %c0_i32_0 = arith.constant 0 : i32
    return %arg0, %c0_i32 : i32, i32
  }
}

</mosaic_0001>

<llo_original>
// kernel: conv1d_pose_classifier.1
$region0: #{conv1d_pose_classifier.1}
  #allocation0 [shape = 'u32[]', space=smem, size = 0x4, offset = 0x4, fixed_abs, tag = 'smem constant byte address 0x4 - core index']
  #allocation1 [shape = 'u32[72,128]{1,0:T(1,128)}', space=vmem, size = 0x9000, scoped, tag = 'internal scratch']
  %s0 = inlined_call_operand.vmem [shape: f32[256,28], index: 0, kind: input, shape index: {}]
  %s1 = inlined_call_operand.hbm [shape: bf16[28,1280], index: 1, kind: input, shape index: {}]
  %s2 = inlined_call_operand.vmem [shape: bf16[768,128], index: 2, kind: input, shape index: {}]
  %s3 = inlined_call_operand.vmem [shape: bf16[256,32], index: 3, kind: input, shape index: {}]
  %s4 = inlined_call_operand.vmem [shape: bf16[32,128], index: 4, kind: input, shape index: {}]
  %s5 = inlined_call_operand.vmem [shape: f32[1,1280], index: 5, kind: input, shape index: {}]
  %s6 = inlined_call_operand.vmem [shape: f32[1,128], index: 6, kind: input, shape index: {}]
  %s7 = inlined_call_operand.vmem [shape: f32[1,32], index: 7, kind: input, shape index: {}]
  %s8 = inlined_call_operand.vmem [shape: f32[1,128], index: 8, kind: input, shape index: {}]
  %s9 = inlined_call_operand.vmem [shape: f32[256,128], index: 9, kind: output, shape index: {}]
  %s10 = sld [smem:[#allocation0]]
  $region73: #{conv1d_pose_classifier.1} parent=0
    _
  %s12 = ssub.s32 1, %s10
  %s13 = scalar_select 0, %s12, %s10
  $region1: #{conv1d_pose_classifier.1} parent=0
    #allocation2 [shape = 'u8[81920]{0}', space=vmem, size = 0x14000, scoped, tag = 'input window, operand 1, single buffered']
    #allocation3 [shape = 's32[2]{0}', space=sflag, size = 0x8, scoped, tag = 'scoped memory for conv1d_pose_classifier.1']
    %14 = vsyncpa [#allocation3], 0
    loop: start=0, step=1, limit=4
    $region2: #{conv1d_pose_classifier.1} parent=1 // loop_pre_header
      _
    $region3: #{conv1d_pose_classifier.1} parent=1 // loop_header
      %s16 = sphi 0, %s20
      %p17 = scmp.ge.s32.totalorder %s16, 4
      %s26 = sphi 0, %s28
      %s29 = sphi 0, %s26
      %s30 = sphi 0, %s29
      %s46 = sphi 0, %s30
      %s50 = sphi 0, %s50
      %s52 = sphi 0, %s50
      %s53 = sphi 0, %s52
      %s67 = sphi 0, %s53
      %s71 = sphi 0, %s71
      %s73 = sphi 0, %s71
      %s74 = sphi 0, %s73
      %s88 = sphi 0, %s74
      %s92 = sphi 0, %s92
      %s94 = sphi 0, %s92
      %s95 = sphi 0, %s94
      %s109 = sphi 0, %s95
      %s113 = sphi 0, %s113
      %s115 = sphi 0, %s113
      %s116 = sphi 0, %s115
      %s130 = sphi 0, %s116
      %s134 = sphi 0, %s134
      %s136 = sphi 0, %s134
      %s137 = sphi 0, %s136
      %s151 = sphi 0, %s137
      %s155 = sphi 0, %s155
      %s157 = sphi 0, %s155
      %s158 = sphi 0, %s157
      %s172 = sphi 0, %s158
      %s176 = sphi 0, %s176
      %s178 = sphi 0, %s176
      %s179 = sphi 0, %s178
      %s193 = sphi 0, %s179
      %s197 = sphi 0, %s197
      %s199 = sphi 0, %s197
      %s200 = sphi 0, %s199
      %s214 = sphi 0, %s200
      %s220 = sphi 0, %s222
      %s223 = sphi 0, %s220
      %s224 = sphi 0, %s223
      %s240 = sphi 0, %s224
    $region4: #{conv1d_pose_classifier.1} parent=1 // loop_header_branch
      %19 = sbr.rel (%p17) target = $region8
    $region5: #{conv1d_pose_classifier.1} parent=1 // loop_body
      %s21 = ssub.s32 %s16, 1
      %s22 = ssub.s32 %s16, 2
      %s23 = sadd.s32 %s16, 1
      %s24 = ssub.s32 %s16, %s23
      %p25 = scmp.eq.s32.totalorder %s24, 0
      %s27 = sadd.s32 %s26, 1
      %s28 = scalar_select %p25, %s26, %s27
      %p31 = pneg %p25
      %p32 = scmp.eq.s32.totalorder %s16, 1
      %p33 = por %p31, %p32
      %p34 = scmp.ne.s32.totalorder %s26, %s29
      %p35 = scmp.eq.s32.totalorder %s16, 0
      %p36 = por %p34, %p35
      %p37 = scmp.ne.s32.totalorder %s26, %s29
      %p38 = scmp.eq.s32.totalorder %s21, 1
      %p39 = por %p37, %p38
      %p40 = scmp.ne.s32.totalorder %s29, %s30
      %p41 = scmp.eq.s32.totalorder %s21, 0
      %p42 = por %p40, %p41
      %p43 = scmp.ne.s32.totalorder %s29, %s30
      %p44 = scmp.eq.s32.totalorder %s22, 1
      %p45 = por %p43, %p44
      %p47 = scmp.ne.s32.totalorder %s30, %s46
      %p48 = scmp.eq.s32.totalorder %s22, 0
      %p49 = por %p47, %p48
      %s51 = sadd.s32 %s50, 1
      %p54 = scmp.eq.s32.totalorder %s16, 1
      %p55 = scmp.ne.s32.totalorder %s50, %s52
      %p56 = scmp.eq.s32.totalorder %s16, 0
      %p57 = por %p55, %p56
      %p58 = scmp.ne.s32.totalorder %s50, %s52
      %p59 = scmp.eq.s32.totalorder %s21, 1
      %p60 = por %p58, %p59
      %p61 = scmp.ne.s32.totalorder %s52, %s53
      %p62 = scmp.eq.s32.totalorder %s21, 0
      %p63 = por %p61, %p62
      %p64 = scmp.ne.s32.totalorder %s52, %s53
      %p65 = scmp.eq.s32.totalorder %s22, 1
      %p66 = por %p64, %p65
      %p68 = scmp.ne.s32.totalorder %s53, %s67
      %p69 = scmp.eq.s32.totalorder %s22, 0
      %p70 = por %p68, %p69
      %s72 = sadd.s32 %s71, 1
      %p75 = scmp.eq.s32.totalorder %s16, 1
      %p76 = scmp.ne.s32.totalorder %s71, %s73
      %p77 = scmp.eq.s32.totalorder %s16, 0
      %p78 = por %p76, %p77
      %p79 = scmp.ne.s32.totalorder %s71, %s73
      %p80 = scmp.eq.s32.totalorder %s21, 1
      %p81 = por %p79, %p80
      %p82 = scmp.ne.s32.totalorder %s73, %s74
      %p83 = scmp.eq.s32.totalorder %s21, 0
      %p84 = por %p82, %p83
      %p85 = scmp.ne.s32.totalorder %s73, %s74
      %p86 = scmp.eq.s32.totalorder %s22, 1
      %p87 = por %p85, %p86
      %p89 = scmp.ne.s32.totalorder %s74, %s88
      %p90 = scmp.eq.s32.totalorder %s22, 0
      %p91 = por %p89, %p90
      %s93 = sadd.s32 %s92, 1
      %p96 = scmp.eq.s32.totalorder %s16, 1
      %p97 = scmp.ne.s32.totalorder %s92, %s94
      %p98 = scmp.eq.s32.totalorder %s16, 0
      %p99 = por %p97, %p98
      %p100 = scmp.ne.s32.totalorder %s92, %s94
      %p101 = scmp.eq.s32.totalorder %s21, 1
      %p102 = por %p100, %p101
      %p103 = scmp.ne.s32.totalorder %s94, %s95
      %p104 = scmp.eq.s32.totalorder %s21, 0
      %p105 = por %p103, %p104
      %p106 = scmp.ne.s32.totalorder %s94, %s95
      %p107 = scmp.eq.s32.totalorder %s22, 1
      %p108 = por %p106, %p107
      %p110 = scmp.ne.s32.totalorder %s95, %s109
      %p111 = scmp.eq.s32.totalorder %s22, 0
      %p112 = por %p110, %p111
      %s114 = sadd.s32 %s113, 1
      %p117 = scmp.eq.s32.totalorder %s16, 1
      %p118 = scmp.ne.s32.totalorder %s113, %s115
      %p119 = scmp.eq.s32.totalorder %s16, 0
      %p120 = por %p118, %p119
      %p121 = scmp.ne.s32.totalorder %s113, %s115
      %p122 = scmp.eq.s32.totalorder %s21, 1
      %p123 = por %p121, %p122
      %p124 = scmp.ne.s32.totalorder %s115, %s116
      %p125 = scmp.eq.s32.totalorder %s21, 0
      %p126 = por %p124, %p125
      %p127 = scmp.ne.s32.totalorder %s115, %s116
      %p128 = scmp.eq.s32.totalorder %s22, 1
      %p129 = por %p127, %p128
      %p131 = scmp.ne.s32.totalorder %s116, %s130
      %p132 = scmp.eq.s32.totalorder %s22, 0
      %p133 = por %p131, %p132
      %s135 = sadd.s32 %s134, 1
      %p138 = scmp.eq.s32.totalorder %s16, 1
      %p139 = scmp.ne.s32.totalorder %s134, %s136
      %p140 = scmp.eq.s32.totalorder %s16, 0
      %p141 = por %p139, %p140
      %p142 = scmp.ne.s32.totalorder %s134, %s136
      %p143 = scmp.eq.s32.totalorder %s21, 1
      %p144 = por %p142, %p143
      %p145 = scmp.ne.s32.totalorder %s136, %s137
      %p146 = scmp.eq.s32.totalorder %s21, 0
      %p147 = por %p145, %p146
      %p148 = scmp.ne.s32.totalorder %s136, %s137
      %p149 = scmp.eq.s32.totalorder %s22, 1
      %p150 = por %p148, %p149
      %p152 = scmp.ne.s32.totalorder %s137, %s151
      %p153 = scmp.eq.s32.totalorder %s22, 0
      %p154 = por %p152, %p153
      %s156 = sadd.s32 %s155, 1
      %p159 = scmp.eq.s32.totalorder %s16, 1
      %p160 = scmp.ne.s32.totalorder %s155, %s157
      %p161 = scmp.eq.s32.totalorder %s16, 0
      %p162 = por %p160, %p161
      %p163 = scmp.ne.s32.totalorder %s155, %s157
      %p164 = scmp.eq.s32.totalorder %s21, 1
      %p165 = por %p163, %p164
      %p166 = scmp.ne.s32.totalorder %s157, %s158
      %p167 = scmp.eq.s32.totalorder %s21, 0
      %p168 = por %p166, %p167
      %p169 = scmp.ne.s32.totalorder %s157, %s158
      %p170 = scmp.eq.s32.totalorder %s22, 1
      %p171 = por %p169, %p170
      %p173 = scmp.ne.s32.totalorder %s158, %s172
      %p174 = scmp.eq.s32.totalorder %s22, 0
      %p175 = por %p173, %p174
      %s177 = sadd.s32 %s176, 1
      %p180 = scmp.eq.s32.totalorder %s16, 1
      %p181 = scmp.ne.s32.totalorder %s176, %s178
      %p182 = scmp.eq.s32.totalorder %s16, 0
      %p183 = por %p181, %p182
      %p184 = scmp.ne.s32.totalorder %s176, %s178
      %p185 = scmp.eq.s32.totalorder %s21, 1
      %p186 = por %p184, %p185
      %p187 = scmp.ne.s32.totalorder %s178, %s179
      %p188 = scmp.eq.s32.totalorder %s21, 0
      %p189 = por %p187, %p188
      %p190 = scmp.ne.s32.totalorder %s178, %s179
      %p191 = scmp.eq.s32.totalorder %s22, 1
      %p192 = por %p190, %p191
      %p194 = scmp.ne.s32.totalorder %s179, %s193
      %p195 = scmp.eq.s32.totalorder %s22, 0
      %p196 = por %p194, %p195
      %s198 = sadd.s32 %s197, 1
      %p201 = scmp.eq.s32.totalorder %s16, 1
      %p202 = scmp.ne.s32.totalorder %s197, %s199
      %p203 = scmp.eq.s32.totalorder %s16, 0
      %p204 = por %p202, %p203
      %p205 = scmp.ne.s32.totalorder %s197, %s199
      %p206 = scmp.eq.s32.totalorder %s21, 1
      %p207 = por %p205, %p206
      %p208 = scmp.ne.s32.totalorder %s199, %s200
      %p209 = scmp.eq.s32.totalorder %s21, 0
      %p210 = por %p208, %p209
      %p211 = scmp.ne.s32.totalorder %s199, %s200
      %p212 = scmp.eq.s32.totalorder %s22, 1
      %p213 = por %p211, %p212
      %p215 = scmp.ne.s32.totalorder %s200, %s214
      %p216 = scmp.eq.s32.totalorder %s22, 0
      %p217 = por %p215, %p216
      %s218 = ssub.s32 %s16, %s23
      %p219 = scmp.eq.s32.totalorder %s218, 0
      %s221 = sadd.s32 %s220, 1
      %s222 = scalar_select %p219, %s220, %s221
      %p225 = pneg %p219
      %p226 = scmp.eq.s32.totalorder %s16, 1
      %p227 = por %p225, %p226
      %p228 = scmp.ne.s32.totalorder %s220, %s223
      %p229 = scmp.eq.s32.totalorder %s16, 0
      %p230 = por %p228, %p229
      %p231 = scmp.ne.s32.totalorder %s220, %s223
      %p232 = scmp.eq.s32.totalorder %s21, 1
      %p233 = por %p231, %p232
      %p234 = scmp.ne.s32.totalorder %s223, %s224
      %p235 = scmp.eq.s32.totalorder %s21, 0
      %p236 = por %p234, %p235
      %p237 = scmp.ne.s32.totalorder %s223, %s224
      %p238 = scmp.eq.s32.totalorder %s22, 1
      %p239 = por %p237, %p238
      %p241 = scmp.ne.s32.totalorder %s224, %s240
      %p242 = scmp.eq.s32.totalorder %s22, 0
      %p243 = por %p241, %p242
      %p244 = scmp.le.s32.totalorder 1, %s16
      %p245 = scmp.lt.s32.totalorder %s16, 3
      %p246 = pnand %p244, %p245
      %p247 = pneg %p246
      // Predicated region
      $region9: #{conv1d_pose_classifier.1} parent=5 // pred_check
        _
      $region10: #{conv1d_pose_classifier.1} parent=5 // pred_check_branch
        %249 = sbr.rel (%p246) target = $region12
      $region11: #{conv1d_pose_classifier.1} parent=5 // pred_region
        %s250 = ssub.s32 %s16, 1
        // Predicated region
        $region13: #{conv1d_pose_classifier.1} parent=11 // pred_check
          %p251 = pneg %p63
        $region14: #{conv1d_pose_classifier.1} parent=11 // pred_check_branch
          %253 = sbr.rel (%p251) target = $region16
        $region15: #{conv1d_pose_classifier.1} parent=11 // pred_region
          %255 = vsyncadd [#allocation3], 0
          %s256 = sshll.u32 %s1, 4
          %s257 = int_to_ptr.hbm [resolvable:$true] %s256
          %s258 = sshll.u32 [#allocation2], 4
          %s259 = int_to_ptr.vmem [resolvable:$true] %s258
          %264 = dma.hbm_to_vmem [thread:$0]  %s257, 2560, %s259, [#allocation3], 640, 640, 40
        $region16: #{conv1d_pose_classifier.1} parent=11 // pred_fallthru
          _
        // Predicated region
        $region17: #{conv1d_pose_classifier.1} parent=11 // pred_check
          %p265 = pneg %p84
        $region18: #{conv1d_pose_classifier.1} parent=11 // pred_check_branch
          %267 = sbr.rel (%p265) target = $region20
        $region19: #{conv1d_pose_classifier.1} parent=11 // pred_region
          _
        $region20: #{conv1d_pose_classifier.1} parent=11 // pred_fallthru
          _
        // Predicated region
        $region21: #{conv1d_pose_classifier.1} parent=11 // pred_check
          %p268 = pneg %p105
        $region22: #{conv1d_pose_classifier.1} parent=11 // pred_check_branch
          %270 = sbr.rel (%p268) target = $region24
        $region23: #{conv1d_pose_classifier.1} parent=11 // pred_region
          _
        $region24: #{conv1d_pose_classifier.1} parent=11 // pred_fallthru
          _
        // Predicated region
        $region25: #{conv1d_pose_classifier.1} parent=11 // pred_check
          %p271 = pneg %p126
        $region26: #{conv1d_pose_classifier.1} parent=11 // pred_check_branch
          %273 = sbr.rel (%p271) target = $region28
        $region27: #{conv1d_pose_classifier.1} parent=11 // pred_region
          _
        $region28: #{conv1d_pose_classifier.1} parent=11 // pred_fallthru
          _
        // Predicated region
        $region29: #{conv1d_pose_classifier.1} parent=11 // pred_check
          %p274 = pneg %p147
        $region30: #{conv1d_pose_classifier.1} parent=11 // pred_check_branch
          %276 = sbr.rel (%p274) target = $region32
        $region31: #{conv1d_pose_classifier.1} parent=11 // pred_region
          _
        $region32: #{conv1d_pose_classifier.1} parent=11 // pred_fallthru
          _
        // Predicated region
        $region33: #{conv1d_pose_classifier.1} parent=11 // pred_check
          %p277 = pneg %p168
        $region34: #{conv1d_pose_classifier.1} parent=11 // pred_check_branch
          %279 = sbr.rel (%p277) target = $region36
        $region35: #{conv1d_pose_classifier.1} parent=11 // pred_region
          _
        $region36: #{conv1d_pose_classifier.1} parent=11 // pred_fallthru
          _
        // Predicated region
        $region37: #{conv1d_pose_classifier.1} parent=11 // pred_check
          %p280 = pneg %p189
        $region38: #{conv1d_pose_classifier.1} parent=11 // pred_check_branch
          %282 = sbr.rel (%p280) target = $region40
        $region39: #{conv1d_pose_classifier.1} parent=11 // pred_region
          _
        $region40: #{conv1d_pose_classifier.1} parent=11 // pred_fallthru
          _
        // Predicated region
        $region41: #{conv1d_pose_classifier.1} parent=11 // pred_check
          %p283 = pneg %p210
        $region42: #{conv1d_pose_classifier.1} parent=11 // pred_check_branch
          %285 = sbr.rel (%p283) target = $region44
        $region43: #{conv1d_pose_classifier.1} parent=11 // pred_region
          _
        $region44: #{conv1d_pose_classifier.1} parent=11 // pred_fallthru
          _
      $region12: #{conv1d_pose_classifier.1} parent=5 // pred_fallthru
        _
      %p286 = scmp.lt.s32.totalorder %s16, 2
      // Predicated region
      $region45: #{conv1d_pose_classifier.1} parent=5 // pred_check
        %p287 = pneg %p286
      $region46: #{conv1d_pose_classifier.1} parent=5 // pred_check_branch
        %289 = sbr.rel (%p287) target = $region48
      $region47: #{conv1d_pose_classifier.1} parent=5 // pred_region
        // Predicated region
        $region49: #{conv1d_pose_classifier.1} parent=47 // pred_check
          %p290 = pneg %p36
        $region50: #{conv1d_pose_classifier.1} parent=47 // pred_check_branch
          %292 = sbr.rel (%p290) target = $region52
        $region51: #{conv1d_pose_classifier.1} parent=47 // pred_region
          %s293 = smul.u32 16, %s16
          %p294 = scmp.lt.s32.totalorder %s293, 31
          %s295 = scalar_select %p294, %s293, 31
          %s296 = smul.addr %s295, 8
          %s297 = scalar_lea.vmem %s0, %s296
          %s298 = smul.u32 16, %s16
        $region52: #{conv1d_pose_classifier.1} parent=47 // pred_fallthru
          _
      $region48: #{conv1d_pose_classifier.1} parent=5 // pred_fallthru
        _
      %p299 = scmp.le.s32.totalorder 1, %s16
      %p300 = scmp.lt.s32.totalorder %s16, 3
      %p301 = pnand %p299, %p300
      %p302 = pneg %p301
      // Predicated region
      $region53: #{conv1d_pose_classifier.1} parent=5 // pred_check
        _
      $region54: #{conv1d_pose_classifier.1} parent=5 // pred_check_branch
        %304 = sbr.rel (%p301) target = $region56
      $region55: #{conv1d_pose_classifier.1} parent=5 // pred_region
        %s305 = ssub.s32 %s16, 1
        // Predicated region
        $region57: #{conv1d_pose_classifier.1} parent=55 // pred_check
          %p306 = pneg %p63
        $region58: #{conv1d_pose_classifier.1} parent=55 // pred_check_branch
          %308 = sbr.rel (%p306) target = $region60
        $region59: #{conv1d_pose_classifier.1} parent=55 // pred_region
          %310 = dma.done [#allocation3], 2560
        $region60: #{conv1d_pose_classifier.1} parent=55 // pred_fallthru
          _
        %s311 = smul.u32 16, %s21
        %p312 = scmp.lt.s32.totalorder %s311, 31
        %s313 = scalar_select %p312, %s311, 31
        %s314 = smul.addr %s313, 8
        %s315 = scalar_lea.vmem %s0, %s314
        %p316 = pneg %p42
        %p317 = pneg %p39
        %p318 = pneg %p63
        %p319 = pneg %p60
        %p320 = pneg %p84
        %p321 = pneg %p81
        %p322 = pneg %p105
        %p323 = pneg %p102
        %p324 = pneg %p126
        %p325 = pneg %p123
        %p326 = pneg %p147
        %p327 = pneg %p144
        %p328 = pneg %p168
        %p329 = pneg %p165
        %p330 = pneg %p189
        %p331 = pneg %p186
        %p332 = pneg %p210
        %p333 = pneg %p207
        %p334 = pneg %p236
        %p335 = pneg %p233
        %s336 = smul.u32 16, %s21
        %p337 = scmp.lt.s32.totalorder %s336, 31
        %s338 = scalar_select %p337, %s336, 31
        %s339 = smul.addr %s338, 8
        %s340 = scalar_lea.vmem %s9, %s339
        %s341 = smul.u32 16, %s21
        %p342 = scmp.lt.s32.totalorder %s341, 31
        %s343 = scalar_select %p342, %s341, 31
        %s344 = smul.addr %s343, 8
        %s345 = scalar_lea.vmem %s0, %s344
        %s346 = smul.u32 16, %s21
        %s347 = smul.u32 16, %s21
        %p348 = scmp.lt.s32.totalorder %s347, 31
        %s349 = scalar_select %p348, %s347, 31
        %s350 = smul.addr %s349, 8
        %s351 = scalar_lea.vmem %s9, %s350
        %s352 = smul.u32 16, %s21
        %v354 = vld [vmem:[%s345] sm:$0xff]
        %v355 = vld [vmem:[%s345 + $0x8] sm:$0xff]
        %v356 = vld [vmem:[%s345 + $0x10] sm:$0xff]
        %v357 = vld [vmem:[%s345 + $0x18] sm:$0xff]
        %v358 = vld [vmem:[%s345 + $0x20] sm:$0xff]
        %v359 = vld [vmem:[%s345 + $0x28] sm:$0xff]
        %v360 = vld [vmem:[%s345 + $0x30] sm:$0xff]
        %v361 = vld [vmem:[%s345 + $0x38] sm:$0xff]
        %v362 = vld [vmem:[%s345 + $0x40] sm:$0xff]
        %v363 = vld [vmem:[%s345 + $0x48] sm:$0xff]
        %v364 = vld [vmem:[%s345 + $0x50] sm:$0xff]
        %v365 = vld [vmem:[%s345 + $0x58] sm:$0xff]
        %v366 = vld [vmem:[%s345 + $0x60] sm:$0xff]
        %v367 = vld [vmem:[%s345 + $0x68] sm:$0xff]
        %v368 = vld [vmem:[%s345 + $0x70] sm:$0xff]
        %v369 = vld [vmem:[%s345 + $0x78] sm:$0xff]
        %v370 = vpack.c.bf16 %v355, %v354
        %v371 = vpack.c.bf16 %v357, %v356
        %v372 = vpack.c.bf16 %v359, %v358
        %v373 = vpack.c.bf16 %v361, %v360
        %v374 = vpack.c.bf16 %v363, %v362
        %v375 = vpack.c.bf16 %v365, %v364
        %v376 = vpack.c.bf16 %v367, %v366
        %v377 = vpack.c.bf16 %v369, %v368
        %v378 = vld [vmem:[#allocation2] sm:$0xff]
        %v379 = vld [vmem:[#allocation2 + $0x8] sm:$0xff]
        %v380 = vld [vmem:[#allocation2 + $0x10] sm:$0xff]
        %v381 = vld [vmem:[#allocation2 + $0x18] sm:$0xff]
        %v382 = vld [vmem:[#allocation2 + $0x20] sm:$0xff]
        %v383 = vld [vmem:[#allocation2 + $0x28] sm:$0xff]
        %v384 = vld [vmem:[#allocation2 + $0x30] sm:$0xff]
        %v385 = vld [vmem:[#allocation2 + $0x38] sm:$0xff]
        %v386 = vld [vmem:[#allocation2 + $0x40] sm:$0xff]
        %v387 = vld [vmem:[#allocation2 + $0x48] sm:$0xff]
        %v388 = vld [vmem:[#allocation2 + $0x50] sm:$0xff]
        %v389 = vld [vmem:[#allocation2 + $0x58] sm:$0xff]
        %v390 = vld [vmem:[#allocation2 + $0x60] sm:$0xff]
        %v391 = vld [vmem:[#allocation2 + $0x68] sm:$0xff]
        %v392 = vld [vmem:[#allocation2 + $0x70] sm:$0xff]
        %v393 = vld [vmem:[#allocation2 + $0x78] sm:$0x33]
        %v394 = vld [vmem:[#allocation2 + $0x80] sm:$0x33]
        %v395 = vld [vmem:[#allocation2 + $0x88] sm:$0x33]
        %v396 = vld [vmem:[#allocation2 + $0x90] sm:$0x33]
        %v397 = vld [vmem:[#allocation2 + $0x98] sm:$0x33]
        %v398 = vld [vmem:[%s5] sm:$0xff]
        %v399 = vld [vmem:[%s5 + $0x8] sm:$0x3]
        %v402 = vperm.slane %v398, 0
        %v403 = vperm.slane %v398, 1
        %v404 = vperm.slane %v398, 2
        %v405 = vperm.slane %v398, 3
        %v406 = vperm.slane %v398, 4
        %v407 = vperm.slane %v398, 5
        %v408 = vperm.slane %v398, 6
        %v409 = vperm.slane %v398, 7
        %v410 = vperm.slane %v399, 0
        %v411 = vperm.slane %v399, 1
        %v442 = vunpack.c.l.b16 %v378
        %v443 = vunpack.c.h.b16 %v378
        %v444 = vunpack.c.l.b16 %v379
        %v445 = vunpack.c.h.b16 %v379
        %v446 = vunpack.c.l.b16 %v380
        %v447 = vunpack.c.h.b16 %v380
        %v448 = vunpack.c.l.b16 %v381
        %v449 = vunpack.c.h.b16 %v381
        %v450 = vunpack.c.l.b16 %v382
        %v451 = vunpack.c.h.b16 %v382
        %v452 = vunpack.c.l.b16 %v383
        %v453 = vunpack.c.h.b16 %v383
        %v454 = vunpack.c.l.b16 %v384
        %v455 = vunpack.c.h.b16 %v384
        %v456 = vunpack.c.l.b16 %v385
        %v457 = vunpack.c.h.b16 %v385
        %v458 = vunpack.c.l.b16 %v386
        %v459 = vunpack.c.h.b16 %v386
        %v460 = vunpack.c.l.b16 %v387
        %v461 = vunpack.c.h.b16 %v387
        %v462 = vunpack.c.l.b16 %v388
        %v463 = vunpack.c.h.b16 %v388
        %v464 = vunpack.c.l.b16 %v389
        %v465 = vunpack.c.h.b16 %v389
        %v466 = vunpack.c.l.b16 %v390
        %v467 = vunpack.c.h.b16 %v390
        %v468 = vunpack.c.l.b16 %v391
        %v469 = vunpack.c.h.b16 %v391
        %v470 = vunpack.c.l.b16 %v392
        %v471 = vunpack.c.h.b16 %v392
        %v472 = vunpack.c.l.b16 %v393
        %v473 = vunpack.c.h.b16 %v393
        %v474 = vunpack.c.l.b16 %v394
        %v475 = vunpack.c.h.b16 %v394
        %v476 = vunpack.c.l.b16 %v395
        %v477 = vunpack.c.h.b16 %v395
        %v478 = vunpack.c.l.b16 %v396
        %v479 = vunpack.c.h.b16 %v396
        %v480 = vunpack.c.l.b16 %v397
        %v481 = vunpack.c.h.b16 %v397
        %v482 = vpack.c.b16 %v452, %v442
        %v483 = vpack.c.b16 %v453, %v443
        %v484 = vpack.c.b16 %v454, %v444
        %v485 = vpack.c.b16 %v455, %v445
        %v486 = vpack.c.b16 %v456, %v446
        %v487 = vpack.c.b16 %v457, %v447
        %v488 = vpack.c.b16 %v458, %v448
        %v489 = vpack.c.b16 %v459, %v449
        %v490 = vpack.c.b16 %v460, %v450
        %v491 = vpack.c.b16 %v461, %v451
        %v492 = vpack.c.b16 %v472, %v462
        %v493 = vpack.c.b16 %v473, %v463
        %v494 = vpack.c.b16 %v474, %v464
        %v495 = vpack.c.b16 %v475, %v465
        %v496 = vpack.c.b16 %v476, %v466
        %v497 = vpack.c.b16 %v477, %v467
        %v498 = vpack.c.b16 %v478, %v468
        %v499 = vpack.c.b16 %v479, %v469
        %v500 = vpack.c.b16 %v480, %v470
        %v501 = vpack.c.b16 %v481, %v471
        %vm512 = vcmask 228352
        %v514 = vsel %vm512, %v370, 0
        %v517 = vsel %vm512, %v371, 0
        %v520 = vsel %vm512, %v372, 0
        %v523 = vsel %vm512, %v373, 0
        %v526 = vsel %vm512, %v374, 0
        %v529 = vsel %vm512, %v375, 0
        %v532 = vsel %vm512, %v376, 0
        %v535 = vsel %vm512, %v377, 0
        %vm537 = vcmask 1045504
        %v539 = vsel %vm537, %v492, 0
        %v542 = vsel %vm537, %v493, 0
        %v545 = vsel %vm537, %v494, 0
        %v548 = vsel %vm537, %v495, 0
        %v551 = vsel %vm537, %v496, 0
        %v554 = vsel %vm537, %v497, 0
        %v557 = vsel %vm537, %v498, 0
        %v560 = vsel %vm537, %v499, 0
        %v563 = vsel %vm537, %v500, 0
        %v566 = vsel %vm537, %v501, 0
        %568 = vmatpush.bf16.msra.mxu0 0
        %569 = vmatpush.bf16.msra.mxu0 0
        %570 = vmatpush.bf16.msra.mxu0 0
        %571 = vmatpush.bf16.msra.mxu0 0
        %572 = vmatpush.bf16.msra.mxu0 0
        %573 = vmatpush.bf16.msra.mxu0 0
        %574 = vmatpush.bf16.msra.mxu0 %v539
        %575 = vmatpush.bf16.msra.mxu0 %v482
        %576 = vmatmul.bf16.gmra.mxu0 %v514
        %v577 = vpop.f32.mrf.mxu0
        %v578 = vadd.f32 %v402, %v577
        %v579 = vpop.f32.mrf.mxu0
        %v580 = vadd.f32 %v402, %v579
        %581 = vmatmul.bf16.gmra.mxu0 %v517
        %v582 = vpop.f32.mrf.mxu0
        %v583 = vadd.f32 %v402, %v582
        %v584 = vpop.f32.mrf.mxu0
        %v585 = vadd.f32 %v402, %v584
        %586 = vmatmul.bf16.gmra.mxu0 %v520
        %v587 = vpop.f32.mrf.mxu0
        %v588 = vadd.f32 %v402, %v587
        %v589 = vpop.f32.mrf.mxu0
        %v590 = vadd.f32 %v402, %v589
        %591 = vmatmul.bf16.gmra.mxu0 %v523
        %v592 = vpop.f32.mrf.mxu0
        %v593 = vadd.f32 %v402, %v592
        %v594 = vpop.f32.mrf.mxu0
        %v595 = vadd.f32 %v402, %v594
        %596 = vmatmul.bf16.gmra.mxu0 %v526
        %v597 = vpop.f32.mrf.mxu0
        %v598 = vadd.f32 %v402, %v597
        %v599 = vpop.f32.mrf.mxu0
        %v600 = vadd.f32 %v402, %v599
        %601 = vmatmul.bf16.gmra.mxu0 %v529
        %v602 = vpop.f32.mrf.mxu0
        %v603 = vadd.f32 %v402, %v602
        %v604 = vpop.f32.mrf.mxu0
        %v605 = vadd.f32 %v402, %v604
        %606 = vmatmul.bf16.gmra.mxu0 %v532
        %v607 = vpop.f32.mrf.mxu0
        %v608 = vadd.f32 %v402, %v607
        %v609 = vpop.f32.mrf.mxu0
        %v610 = vadd.f32 %v402, %v609
        %611 = vmatmul.bf16.gmra.mxu0 %v535
        %v612 = vpop.f32.mrf.mxu0
        %v613 = vadd.f32 %v402, %v612
        %v614 = vpop.f32.mrf.mxu0
        %v615 = vadd.f32 %v402, %v614
        %616 = vdwg.mxu0
        %617 = vmatpush.bf16.msra.mxu0 0
        %618 = vmatpush.bf16.msra.mxu0 0
        %619 = vmatpush.bf16.msra.mxu0 0
        %620 = vmatpush.bf16.msra.mxu0 0
        %621 = vmatpush.bf16.msra.mxu0 0
        %622 = vmatpush.bf16.msra.mxu0 0
        %623 = vmatpush.bf16.msra.mxu0 %v542
        %624 = vmatpush.bf16.msra.mxu0 %v483
        %625 = vmatmul.bf16.gmra.mxu0 %v514
        %v626 = vpop.f32.mrf.mxu0
        %v627 = vadd.f32 %v403, %v626
        %v628 = vpop.f32.mrf.mxu0
        %v629 = vadd.f32 %v403, %v628
        %630 = vmatmul.bf16.gmra.mxu0 %v517
        %v631 = vpop.f32.mrf.mxu0
        %v632 = vadd.f32 %v403, %v631
        %v633 = vpop.f32.mrf.mxu0
        %v634 = vadd.f32 %v403, %v633
        %635 = vmatmul.bf16.gmra.mxu0 %v520
        %v636 = vpop.f32.mrf.mxu0
        %v637 = vadd.f32 %v403, %v636
        %v638 = vpop.f32.mrf.mxu0
        %v639 = vadd.f32 %v403, %v638
        %640 = vmatmul.bf16.gmra.mxu0 %v523
        %v641 = vpop.f32.mrf.mxu0
        %v642 = vadd.f32 %v403, %v641
        %v643 = vpop.f32.mrf.mxu0
        %v644 = vadd.f32 %v403, %v643
        %645 = vmatmul.bf16.gmra.mxu0 %v526
        %v646 = vpop.f32.mrf.mxu0
        %v647 = vadd.f32 %v403, %v646
        %v648 = vpop.f32.mrf.mxu0
        %v649 = vadd.f32 %v403, %v648
        %650 = vmatmul.bf16.gmra.mxu0 %v529
        %v651 = vpop.f32.mrf.mxu0
        %v652 = vadd.f32 %v403, %v651
        %v653 = vpop.f32.mrf.mxu0
        %v654 = vadd.f32 %v403, %v653
        %655 = vmatmul.bf16.gmra.mxu0 %v532
        %v656 = vpop.f32.mrf.mxu0
        %v657 = vadd.f32 %v403, %v656
        %v658 = vpop.f32.mrf.mxu0
        %v659 = vadd.f32 %v403, %v658
        %660 = vmatmul.bf16.gmra.mxu0 %v535
        %v661 = vpop.f32.mrf.mxu0
        %v662 = vadd.f32 %v403, %v661
        %v663 = vpop.f32.mrf.mxu0
        %v664 = vadd.f32 %v403, %v663
        %665 = vdwg.mxu0
        %666 = vmatpush.bf16.msra.mxu0 0
        %667 = vmatpush.bf16.msra.mxu0 0
        %668 = vmatpush.bf16.msra.mxu0 0
        %669 = vmatpush.bf16.msra.mxu0 0
        %670 = vmatpush.bf16.msra.mxu0 0
        %671 = vmatpush.bf16.msra.mxu0 0
        %672 = vmatpush.bf16.msra.mxu0 %v545
        %673 = vmatpush.bf16.msra.mxu0 %v484
        %674 = vmatmul.bf16.gmra.mxu0 %v514
        %v675 = vpop.f32.mrf.mxu0
        %v676 = vadd.f32 %v404, %v675
        %v677 = vpop.f32.mrf.mxu0
        %v678 = vadd.f32 %v404, %v677
        %679 = vmatmul.bf16.gmra.mxu0 %v517
        %v680 = vpop.f32.mrf.mxu0
        %v681 = vadd.f32 %v404, %v680
        %v682 = vpop.f32.mrf.mxu0
        %v683 = vadd.f32 %v404, %v682
        %684 = vmatmul.bf16.gmra.mxu0 %v520
        %v685 = vpop.f32.mrf.mxu0
        %v686 = vadd.f32 %v404, %v685
        %v687 = vpop.f32.mrf.mxu0
        %v688 = vadd.f32 %v404, %v687
        %689 = vmatmul.bf16.gmra.mxu0 %v523
        %v690 = vpop.f32.mrf.mxu0
        %v691 = vadd.f32 %v404, %v690
        %v692 = vpop.f32.mrf.mxu0
        %v693 = vadd.f32 %v404, %v692
        %694 = vmatmul.bf16.gmra.mxu0 %v526
        %v695 = vpop.f32.mrf.mxu0
        %v696 = vadd.f32 %v404, %v695
        %v697 = vpop.f32.mrf.mxu0
        %v698 = vadd.f32 %v404, %v697
        %699 = vmatmul.bf16.gmra.mxu0 %v529
        %v700 = vpop.f32.mrf.mxu0
        %v701 = vadd.f32 %v404, %v700
        %v702 = vpop.f32.mrf.mxu0
        %v703 = vadd.f32 %v404, %v702
        %704 = vmatmul.bf16.gmra.mxu0 %v532
        %v705 = vpop.f32.mrf.mxu0
        %v706 = vadd.f32 %v404, %v705
        %v707 = vpop.f32.mrf.mxu0
        %v708 = vadd.f32 %v404, %v707
        %709 = vmatmul.bf16.gmra.mxu0 %v535
        %v710 = vpop.f32.mrf.mxu0
        %v711 = vadd.f32 %v404, %v710
        %v712 = vpop.f32.mrf.mxu0
        %v713 = vadd.f32 %v404, %v712
        %714 = vdwg.mxu0
        %715 = vmatpush.bf16.msra.mxu0 0
        %716 = vmatpush.bf16.msra.mxu0 0
        %717 = vmatpush.bf16.msra.mxu0 0
        %718 = vmatpush.bf16.msra.mxu0 0
        %719 = vmatpush.bf16.msra.mxu0 0
        %720 = vmatpush.bf16.msra.mxu0 0
        %721 = vmatpush.bf16.msra.mxu0 %v548
        %722 = vmatpush.bf16.msra.mxu0 %v485
        %723 = vmatmul.bf16.gmra.mxu0 %v514
        %v724 = vpop.f32.mrf.mxu0
        %v725 = vadd.f32 %v405, %v724
        %v726 = vpop.f32.mrf.mxu0
        %v727 = vadd.f32 %v405, %v726
        %728 = vmatmul.bf16.gmra.mxu0 %v517
        %v729 = vpop.f32.mrf.mxu0
        %v730 = vadd.f32 %v405, %v729
        %v731 = vpop.f32.mrf.mxu0
        %v732 = vadd.f32 %v405, %v731
        %733 = vmatmul.bf16.gmra.mxu0 %v520
        %v734 = vpop.f32.mrf.mxu0
        %v735 = vadd.f32 %v405, %v734
        %v736 = vpop.f32.mrf.mxu0
        %v737 = vadd.f32 %v405, %v736
        %738 = vmatmul.bf16.gmra.mxu0 %v523
        %v739 = vpop.f32.mrf.mxu0
        %v740 = vadd.f32 %v405, %v739
        %v741 = vpop.f32.mrf.mxu0
        %v742 = vadd.f32 %v405, %v741
        %743 = vmatmul.bf16.gmra.mxu0 %v526
        %v744 = vpop.f32.mrf.mxu0
        %v745 = vadd.f32 %v405, %v744
        %v746 = vpop.f32.mrf.mxu0
        %v747 = vadd.f32 %v405, %v746
        %748 = vmatmul.bf16.gmra.mxu0 %v529
        %v749 = vpop.f32.mrf.mxu0
        %v750 = vadd.f32 %v405, %v749
        %v751 = vpop.f32.mrf.mxu0
        %v752 = vadd.f32 %v405, %v751
        %753 = vmatmul.bf16.gmra.mxu0 %v532
        %v754 = vpop.f32.mrf.mxu0
        %v755 = vadd.f32 %v405, %v754
        %v756 = vpop.f32.mrf.mxu0
        %v757 = vadd.f32 %v405, %v756
        %758 = vmatmul.bf16.gmra.mxu0 %v535
        %v759 = vpop.f32.mrf.mxu0
        %v760 = vadd.f32 %v405, %v759
        %v761 = vpop.f32.mrf.mxu0
        %v762 = vadd.f32 %v405, %v761
        %763 = vdwg.mxu0
        %764 = vmatpush.bf16.msra.mxu0 0
        %765 = vmatpush.bf16.msra.mxu0 0
        %766 = vmatpush.bf16.msra.mxu0 0
        %767 = vmatpush.bf16.msra.mxu0 0
        %768 = vmatpush.bf16.msra.mxu0 0
        %769 = vmatpush.bf16.msra.mxu0 0
        %770 = vmatpush.bf16.msra.mxu0 %v551
        %771 = vmatpush.bf16.msra.mxu0 %v486
        %772 = vmatmul.bf16.gmra.mxu0 %v514
        %v773 = vpop.f32.mrf.mxu0
        %v774 = vadd.f32 %v406, %v773
        %v775 = vpop.f32.mrf.mxu0
        %v776 = vadd.f32 %v406, %v775
        %777 = vmatmul.bf16.gmra.mxu0 %v517
        %v778 = vpop.f32.mrf.mxu0
        %v779 = vadd.f32 %v406, %v778
        %v780 = vpop.f32.mrf.mxu0
        %v781 = vadd.f32 %v406, %v780
        %782 = vmatmul.bf16.gmra.mxu0 %v520
        %v783 = vpop.f32.mrf.mxu0
        %v784 = vadd.f32 %v406, %v783
        %v785 = vpop.f32.mrf.mxu0
        %v786 = vadd.f32 %v406, %v785
        %787 = vmatmul.bf16.gmra.mxu0 %v523
        %v788 = vpop.f32.mrf.mxu0
        %v789 = vadd.f32 %v406, %v788
        %v790 = vpop.f32.mrf.mxu0
        %v791 = vadd.f32 %v406, %v790
        %792 = vmatmul.bf16.gmra.mxu0 %v526
        %v793 = vpop.f32.mrf.mxu0
        %v794 = vadd.f32 %v406, %v793
        %v795 = vpop.f32.mrf.mxu0
        %v796 = vadd.f32 %v406, %v795
        %797 = vmatmul.bf16.gmra.mxu0 %v529
        %v798 = vpop.f32.mrf.mxu0
        %v799 = vadd.f32 %v406, %v798
        %v800 = vpop.f32.mrf.mxu0
        %v801 = vadd.f32 %v406, %v800
        %802 = vmatmul.bf16.gmra.mxu0 %v532
        %v803 = vpop.f32.mrf.mxu0
        %v804 = vadd.f32 %v406, %v803
        %v805 = vpop.f32.mrf.mxu0
        %v806 = vadd.f32 %v406, %v805
        %807 = vmatmul.bf16.gmra.mxu0 %v535
        %v808 = vpop.f32.mrf.mxu0
        %v809 = vadd.f32 %v406, %v808
        %v810 = vpop.f32.mrf.mxu0
        %v811 = vadd.f32 %v406, %v810
        %812 = vdwg.mxu0
        %813 = vmatpush.bf16.msra.mxu0 0
        %814 = vmatpush.bf16.msra.mxu0 0
        %815 = vmatpush.bf16.msra.mxu0 0
        %816 = vmatpush.bf16.msra.mxu0 0
        %817 = vmatpush.bf16.msra.mxu0 0
        %818 = vmatpush.bf16.msra.mxu0 0
        %819 = vmatpush.bf16.msra.mxu0 %v554
        %820 = vmatpush.bf16.msra.mxu0 %v487
        %821 = vmatmul.bf16.gmra.mxu0 %v514
        %v822 = vpop.f32.mrf.mxu0
        %v823 = vadd.f32 %v407, %v822
        %v824 = vpop.f32.mrf.mxu0
        %v825 = vadd.f32 %v407, %v824
        %826 = vmatmul.bf16.gmra.mxu0 %v517
        %v827 = vpop.f32.mrf.mxu0
        %v828 = vadd.f32 %v407, %v827
        %v829 = vpop.f32.mrf.mxu0
        %v830 = vadd.f32 %v407, %v829
        %831 = vmatmul.bf16.gmra.mxu0 %v520
        %v832 = vpop.f32.mrf.mxu0
        %v833 = vadd.f32 %v407, %v832
        %v834 = vpop.f32.mrf.mxu0
        %v835 = vadd.f32 %v407, %v834
        %836 = vmatmul.bf16.gmra.mxu0 %v523
        %v837 = vpop.f32.mrf.mxu0
        %v838 = vadd.f32 %v407, %v837
        %v839 = vpop.f32.mrf.mxu0
        %v840 = vadd.f32 %v407, %v839
        %841 = vmatmul.bf16.gmra.mxu0 %v526
        %v842 = vpop.f32.mrf.mxu0
        %v843 = vadd.f32 %v407, %v842
        %v844 = vpop.f32.mrf.mxu0
        %v845 = vadd.f32 %v407, %v844
        %846 = vmatmul.bf16.gmra.mxu0 %v529
        %v847 = vpop.f32.mrf.mxu0
        %v848 = vadd.f32 %v407, %v847
        %v849 = vpop.f32.mrf.mxu0
        %v850 = vadd.f32 %v407, %v849
        %851 = vmatmul.bf16.gmra.mxu0 %v532
        %v852 = vpop.f32.mrf.mxu0
        %v853 = vadd.f32 %v407, %v852
        %v854 = vpop.f32.mrf.mxu0
        %v855 = vadd.f32 %v407, %v854
        %856 = vmatmul.bf16.gmra.mxu0 %v535
        %v857 = vpop.f32.mrf.mxu0
        %v858 = vadd.f32 %v407, %v857
        %v859 = vpop.f32.mrf.mxu0
        %v860 = vadd.f32 %v407, %v859
        %861 = vdwg.mxu0
        %862 = vmatpush.bf16.msra.mxu0 0
        %863 = vmatpush.bf16.msra.mxu0 0
        %864 = vmatpush.bf16.msra.mxu0 0
        %865 = vmatpush.bf16.msra.mxu0 0
        %866 = vmatpush.bf16.msra.mxu0 0
        %867 = vmatpush.bf16.msra.mxu0 0
        %868 = vmatpush.bf16.msra.mxu0 %v557
        %869 = vmatpush.bf16.msra.mxu0 %v488
        %870 = vmatmul.bf16.gmra.mxu0 %v514
        %v871 = vpop.f32.mrf.mxu0
        %v872 = vadd.f32 %v408, %v871
        %v873 = vpop.f32.mrf.mxu0
        %v874 = vadd.f32 %v408, %v873
        %875 = vmatmul.bf16.gmra.mxu0 %v517
        %v876 = vpop.f32.mrf.mxu0
        %v877 = vadd.f32 %v408, %v876
        %v878 = vpop.f32.mrf.mxu0
        %v879 = vadd.f32 %v408, %v878
        %880 = vmatmul.bf16.gmra.mxu0 %v520
        %v881 = vpop.f32.mrf.mxu0
        %v882 = vadd.f32 %v408, %v881
        %v883 = vpop.f32.mrf.mxu0
        %v884 = vadd.f32 %v408, %v883
        %885 = vmatmul.bf16.gmra.mxu0 %v523
        %v886 = vpop.f32.mrf.mxu0
        %v887 = vadd.f32 %v408, %v886
        %v888 = vpop.f32.mrf.mxu0
        %v889 = vadd.f32 %v408, %v888
        %890 = vmatmul.bf16.gmra.mxu0 %v526
        %v891 = vpop.f32.mrf.mxu0
        %v892 = vadd.f32 %v408, %v891
        %v893 = vpop.f32.mrf.mxu0
        %v894 = vadd.f32 %v408, %v893
        %895 = vmatmul.bf16.gmra.mxu0 %v529
        %v896 = vpop.f32.mrf.mxu0
        %v897 = vadd.f32 %v408, %v896
        %v898 = vpop.f32.mrf.mxu0
        %v899 = vadd.f32 %v408, %v898
        %900 = vmatmul.bf16.gmra.mxu0 %v532
        %v901 = vpop.f32.mrf.mxu0
        %v902 = vadd.f32 %v408, %v901
        %v903 = vpop.f32.mrf.mxu0
        %v904 = vadd.f32 %v408, %v903
        %905 = vmatmul.bf16.gmra.mxu0 %v535
        %v906 = vpop.f32.mrf.mxu0
        %v907 = vadd.f32 %v408, %v906
        %v908 = vpop.f32.mrf.mxu0
        %v909 = vadd.f32 %v408, %v908
        %910 = vdwg.mxu0
        %911 = vmatpush.bf16.msra.mxu0 0
        %912 = vmatpush.bf16.msra.mxu0 0
        %913 = vmatpush.bf16.msra.mxu0 0
        %914 = vmatpush.bf16.msra.mxu0 0
        %915 = vmatpush.bf16.msra.mxu0 0
        %916 = vmatpush.bf16.msra.mxu0 0
        %917 = vmatpush.bf16.msra.mxu0 %v560
        %918 = vmatpush.bf16.msra.mxu0 %v489
        %919 = vmatmul.bf16.gmra.mxu0 %v514
        %v920 = vpop.f32.mrf.mxu0
        %v921 = vadd.f32 %v409, %v920
        %v922 = vpop.f32.mrf.mxu0
        %v923 = vadd.f32 %v409, %v922
        %924 = vmatmul.bf16.gmra.mxu0 %v517
        %v925 = vpop.f32.mrf.mxu0
        %v926 = vadd.f32 %v409, %v925
        %v927 = vpop.f32.mrf.mxu0
        %v928 = vadd.f32 %v409, %v927
        %929 = vmatmul.bf16.gmra.mxu0 %v520
        %v930 = vpop.f32.mrf.mxu0
        %v931 = vadd.f32 %v409, %v930
        %v932 = vpop.f32.mrf.mxu0
        %v933 = vadd.f32 %v409, %v932
        %934 = vmatmul.bf16.gmra.mxu0 %v523
        %v935 = vpop.f32.mrf.mxu0
        %v936 = vadd.f32 %v409, %v935
        %v937 = vpop.f32.mrf.mxu0
        %v938 = vadd.f32 %v409, %v937
        %939 = vmatmul.bf16.gmra.mxu0 %v526
        %v940 = vpop.f32.mrf.mxu0
        %v941 = vadd.f32 %v409, %v940
        %v942 = vpop.f32.mrf.mxu0
        %v943 = vadd.f32 %v409, %v942
        %944 = vmatmul.bf16.gmra.mxu0 %v529
        %v945 = vpop.f32.mrf.mxu0
        %v946 = vadd.f32 %v409, %v945
        %v947 = vpop.f32.mrf.mxu0
        %v948 = vadd.f32 %v409, %v947
        %949 = vmatmul.bf16.gmra.mxu0 %v532
        %v950 = vpop.f32.mrf.mxu0
        %v951 = vadd.f32 %v409, %v950
        %v952 = vpop.f32.mrf.mxu0
        %v953 = vadd.f32 %v409, %v952
        %954 = vmatmul.bf16.gmra.mxu0 %v535
        %v955 = vpop.f32.mrf.mxu0
        %v956 = vadd.f32 %v409, %v955
        %v957 = vpop.f32.mrf.mxu0
        %v958 = vadd.f32 %v409, %v957
        %959 = vdwg.mxu0
        %960 = vmatpush.bf16.msra.mxu0 0
        %961 = vmatpush.bf16.msra.mxu0 0
        %962 = vmatpush.bf16.msra.mxu0 0
        %963 = vmatpush.bf16.msra.mxu0 0
        %964 = vmatpush.bf16.msra.mxu0 0
        %965 = vmatpush.bf16.msra.mxu0 0
        %966 = vmatpush.bf16.msra.mxu0 %v563
        %967 = vmatpush.bf16.msra.mxu0 %v490
        %968 = vmatmul.bf16.gmra.mxu0 %v514
        %v969 = vpop.f32.mrf.mxu0
        %v970 = vadd.f32 %v410, %v969
        %v971 = vpop.f32.mrf.mxu0
        %v972 = vadd.f32 %v410, %v971
        %973 = vmatmul.bf16.gmra.mxu0 %v517
        %v974 = vpop.f32.mrf.mxu0
        %v975 = vadd.f32 %v410, %v974
        %v976 = vpop.f32.mrf.mxu0
        %v977 = vadd.f32 %v410, %v976
        %978 = vmatmul.bf16.gmra.mxu0 %v520
        %v979 = vpop.f32.mrf.mxu0
        %v980 = vadd.f32 %v410, %v979
        %v981 = vpop.f32.mrf.mxu0
        %v982 = vadd.f32 %v410, %v981
        %983 = vmatmul.bf16.gmra.mxu0 %v523
        %v984 = vpop.f32.mrf.mxu0
        %v985 = vadd.f32 %v410, %v984
        %v986 = vpop.f32.mrf.mxu0
        %v987 = vadd.f32 %v410, %v986
        %988 = vmatmul.bf16.gmra.mxu0 %v526
        %v989 = vpop.f32.mrf.mxu0
        %v990 = vadd.f32 %v410, %v989
        %v991 = vpop.f32.mrf.mxu0
        %v992 = vadd.f32 %v410, %v991
        %993 = vmatmul.bf16.gmra.mxu0 %v529
        %v994 = vpop.f32.mrf.mxu0
        %v995 = vadd.f32 %v410, %v994
        %v996 = vpop.f32.mrf.mxu0
        %v997 = vadd.f32 %v410, %v996
        %998 = vmatmul.bf16.gmra.mxu0 %v532
        %v999 = vpop.f32.mrf.mxu0
        %v1000 = vadd.f32 %v410, %v999
        %v1001 = vpop.f32.mrf.mxu0
        %v1002 = vadd.f32 %v410, %v1001
        %1003 = vmatmul.bf16.gmra.mxu0 %v535
        %v1004 = vpop.f32.mrf.mxu0
        %v1005 = vadd.f32 %v410, %v1004
        %v1006 = vpop.f32.mrf.mxu0
        %v1007 = vadd.f32 %v410, %v1006
        %1008 = vdwg.mxu0
        %1009 = vmatpush.bf16.msra.mxu0 0
        %1010 = vmatpush.bf16.msra.mxu0 0
        %1011 = vmatpush.bf16.msra.mxu0 0
        %1012 = vmatpush.bf16.msra.mxu0 0
        %1013 = vmatpush.bf16.msra.mxu0 0
        %1014 = vmatpush.bf16.msra.mxu0 0
        %1015 = vmatpush.bf16.msra.mxu0 %v566
        %1016 = vmatpush.bf16.msra.mxu0 %v491
        %1017 = vmatmul.bf16.gmra.mxu0 %v514
        %v1018 = vpop.f32.mrf.mxu0
        %v1019 = vadd.f32 %v411, %v1018
        %v1020 = vpop.f32.mrf.mxu0
        %v1021 = vadd.f32 %v411, %v1020
        %1022 = vmatmul.bf16.gmra.mxu0 %v517
        %v1023 = vpop.f32.mrf.mxu0
        %v1024 = vadd.f32 %v411, %v1023
        %v1025 = vpop.f32.mrf.mxu0
        %v1026 = vadd.f32 %v411, %v1025
        %1027 = vmatmul.bf16.gmra.mxu0 %v520
        %v1028 = vpop.f32.mrf.mxu0
        %v1029 = vadd.f32 %v411, %v1028
        %v1030 = vpop.f32.mrf.mxu0
        %v1031 = vadd.f32 %v411, %v1030
        %1032 = vmatmul.bf16.gmra.mxu0 %v523
        %v1033 = vpop.f32.mrf.mxu0
        %v1034 = vadd.f32 %v411, %v1033
        %v1035 = vpop.f32.mrf.mxu0
        %v1036 = vadd.f32 %v411, %v1035
        %1037 = vmatmul.bf16.gmra.mxu0 %v526
        %v1038 = vpop.f32.mrf.mxu0
        %v1039 = vadd.f32 %v411, %v1038
        %v1040 = vpop.f32.mrf.mxu0
        %v1041 = vadd.f32 %v411, %v1040
        %1042 = vmatmul.bf16.gmra.mxu0 %v529
        %v1043 = vpop.f32.mrf.mxu0
        %v1044 = vadd.f32 %v411, %v1043
        %v1045 = vpop.f32.mrf.mxu0
        %v1046 = vadd.f32 %v411, %v1045
        %1047 = vmatmul.bf16.gmra.mxu0 %v532
        %v1048 = vpop.f32.mrf.mxu0
        %v1049 = vadd.f32 %v411, %v1048
        %v1050 = vpop.f32.mrf.mxu0
        %v1051 = vadd.f32 %v411, %v1050
        %1052 = vmatmul.bf16.gmra.mxu0 %v535
        %v1053 = vpop.f32.mrf.mxu0
        %v1054 = vadd.f32 %v411, %v1053
        %v1055 = vpop.f32.mrf.mxu0
        %v1056 = vadd.f32 %v411, %v1055
        %1057 = vdwg.mxu0
        %v1058 = vmul.f32 %v578, 0.5
        %v1059 = vmul.f32 %v627, 0.5
        %v1060 = vmul.f32 %v676, 0.5
        %v1061 = vmul.f32 %v725, 0.5
        %v1062 = vmul.f32 %v774, 0.5
        %v1063 = vmul.f32 %v823, 0.5
        %v1064 = vmul.f32 %v872, 0.5
        %v1065 = vmul.f32 %v921, 0.5
        %v1066 = vmul.f32 %v970, 0.5
        %v1067 = vmul.f32 %v1019, 0.5
        %v1068 = vmul.f32 %v580, 0.5
        %v1069 = vmul.f32 %v629, 0.5
        %v1070 = vmul.f32 %v678, 0.5
        %v1071 = vmul.f32 %v727, 0.5
        %v1072 = vmul.f32 %v776, 0.5
        %v1073 = vmul.f32 %v825, 0.5
        %v1074 = vmul.f32 %v874, 0.5
        %v1075 = vmul.f32 %v923, 0.5
        %v1076 = vmul.f32 %v972, 0.5
        %v1077 = vmul.f32 %v1021, 0.5
        %v1078 = vmul.f32 %v583, 0.5
        %v1079 = vmul.f32 %v632, 0.5
        %v1080 = vmul.f32 %v681, 0.5
        %v1081 = vmul.f32 %v730, 0.5
        %v1082 = vmul.f32 %v779, 0.5
        %v1083 = vmul.f32 %v828, 0.5
        %v1084 = vmul.f32 %v877, 0.5
        %v1085 = vmul.f32 %v926, 0.5
        %v1086 = vmul.f32 %v975, 0.5
        %v1087 = vmul.f32 %v1024, 0.5
        %v1088 = vmul.f32 %v585, 0.5
        %v1089 = vmul.f32 %v634, 0.5
        %v1090 = vmul.f32 %v683, 0.5
        %v1091 = vmul.f32 %v732, 0.5
        %v1092 = vmul.f32 %v781, 0.5
        %v1093 = vmul.f32 %v830, 0.5
        %v1094 = vmul.f32 %v879, 0.5
        %v1095 = vmul.f32 %v928, 0.5
        %v1096 = vmul.f32 %v977, 0.5
        %v1097 = vmul.f32 %v1026, 0.5
        %v1098 = vmul.f32 %v588, 0.5
        %v1099 = vmul.f32 %v637, 0.5
        %v1100 = vmul.f32 %v686, 0.5
        %v1101 = vmul.f32 %v735, 0.5
        %v1102 = vmul.f32 %v784, 0.5
        %v1103 = vmul.f32 %v833, 0.5
        %v1104 = vmul.f32 %v882, 0.5
        %v1105 = vmul.f32 %v931, 0.5
        %v1106 = vmul.f32 %v980, 0.5
        %v1107 = vmul.f32 %v1029, 0.5
        %v1108 = vmul.f32 %v590, 0.5
        %v1109 = vmul.f32 %v639, 0.5
        %v1110 = vmul.f32 %v688, 0.5
        %v1111 = vmul.f32 %v737, 0.5
        %v1112 = vmul.f32 %v786, 0.5
        %v1113 = vmul.f32 %v835, 0.5
        %v1114 = vmul.f32 %v884, 0.5
        %v1115 = vmul.f32 %v933, 0.5
        %v1116 = vmul.f32 %v982, 0.5
        %v1117 = vmul.f32 %v1031, 0.5
        %v1118 = vmul.f32 %v593, 0.5
        %v1119 = vmul.f32 %v642, 0.5
        %v1120 = vmul.f32 %v691, 0.5
        %v1121 = vmul.f32 %v740, 0.5
        %v1122 = vmul.f32 %v789, 0.5
        %v1123 = vmul.f32 %v838, 0.5
        %v1124 = vmul.f32 %v887, 0.5
        %v1125 = vmul.f32 %v936, 0.5
        %v1126 = vmul.f32 %v985, 0.5
        %v1127 = vmul.f32 %v1034, 0.5
        %v1128 = vmul.f32 %v595, 0.5
        %v1129 = vmul.f32 %v644, 0.5
        %v1130 = vmul.f32 %v693, 0.5
        %v1131 = vmul.f32 %v742, 0.5
        %v1132 = vmul.f32 %v791, 0.5
        %v1133 = vmul.f32 %v840, 0.5
        %v1134 = vmul.f32 %v889, 0.5
        %v1135 = vmul.f32 %v938, 0.5
        %v1136 = vmul.f32 %v987, 0.5
        %v1137 = vmul.f32 %v1036, 0.5
        %v1138 = vmul.f32 %v598, 0.5
        %v1139 = vmul.f32 %v647, 0.5
        %v1140 = vmul.f32 %v696, 0.5
        %v1141 = vmul.f32 %v745, 0.5
        %v1142 = vmul.f32 %v794, 0.5
        %v1143 = vmul.f32 %v843, 0.5
        %v1144 = vmul.f32 %v892, 0.5
        %v1145 = vmul.f32 %v941, 0.5
        %v1146 = vmul.f32 %v990, 0.5
        %v1147 = vmul.f32 %v1039, 0.5
        %v1148 = vmul.f32 %v600, 0.5
        %v1149 = vmul.f32 %v649, 0.5
        %v1150 = vmul.f32 %v698, 0.5
        %v1151 = vmul.f32 %v747, 0.5
        %v1152 = vmul.f32 %v796, 0.5
        %v1153 = vmul.f32 %v845, 0.5
        %v1154 = vmul.f32 %v894, 0.5
        %v1155 = vmul.f32 %v943, 0.5
        %v1156 = vmul.f32 %v992, 0.5
        %v1157 = vmul.f32 %v1041, 0.5
        %v1158 = vmul.f32 %v603, 0.5
        %v1159 = vmul.f32 %v652, 0.5
        %v1160 = vmul.f32 %v701, 0.5
        %v1161 = vmul.f32 %v750, 0.5
        %v1162 = vmul.f32 %v799, 0.5
        %v1163 = vmul.f32 %v848, 0.5
        %v1164 = vmul.f32 %v897, 0.5
        %v1165 = vmul.f32 %v946, 0.5
        %v1166 = vmul.f32 %v995, 0.5
        %v1167 = vmul.f32 %v1044, 0.5
        %v1168 = vmul.f32 %v605, 0.5
        %v1169 = vmul.f32 %v654, 0.5
        %v1170 = vmul.f32 %v703, 0.5
        %v1171 = vmul.f32 %v752, 0.5
        %v1172 = vmul.f32 %v801, 0.5
        %v1173 = vmul.f32 %v850, 0.5
        %v1174 = vmul.f32 %v899, 0.5
        %v1175 = vmul.f32 %v948, 0.5
        %v1176 = vmul.f32 %v997, 0.5
        %v1177 = vmul.f32 %v1046, 0.5
        %v1178 = vmul.f32 %v608, 0.5
        %v1179 = vmul.f32 %v657, 0.5
        %v1180 = vmul.f32 %v706, 0.5
        %v1181 = vmul.f32 %v755, 0.5
        %v1182 = vmul.f32 %v804, 0.5
        %v1183 = vmul.f32 %v853, 0.5
        %v1184 = vmul.f32 %v902, 0.5
        %v1185 = vmul.f32 %v951, 0.5
        %v1186 = vmul.f32 %v1000, 0.5
        %v1187 = vmul.f32 %v1049, 0.5
        %v1188 = vmul.f32 %v610, 0.5
        %v1189 = vmul.f32 %v659, 0.5
        %v1190 = vmul.f32 %v708, 0.5
        %v1191 = vmul.f32 %v757, 0.5
        %v1192 = vmul.f32 %v806, 0.5
        %v1193 = vmul.f32 %v855, 0.5
        %v1194 = vmul.f32 %v904, 0.5
        %v1195 = vmul.f32 %v953, 0.5
        %v1196 = vmul.f32 %v1002, 0.5
        %v1197 = vmul.f32 %v1051, 0.5
        %v1198 = vmul.f32 %v613, 0.5
        %v1199 = vmul.f32 %v662, 0.5
        %v1200 = vmul.f32 %v711, 0.5
        %v1201 = vmul.f32 %v760, 0.5
        %v1202 = vmul.f32 %v809, 0.5
        %v1203 = vmul.f32 %v858, 0.5
        %v1204 = vmul.f32 %v907, 0.5
        %v1205 = vmul.f32 %v956, 0.5
        %v1206 = vmul.f32 %v1005, 0.5
        %v1207 = vmul.f32 %v1054, 0.5
        %v1208 = vmul.f32 %v615, 0.5
        %v1209 = vmul.f32 %v664, 0.5
        %v1210 = vmul.f32 %v713, 0.5
        %v1211 = vmul.f32 %v762, 0.5
        %v1212 = vmul.f32 %v811, 0.5
        %v1213 = vmul.f32 %v860, 0.5
        %v1214 = vmul.f32 %v909, 0.5
        %v1215 = vmul.f32 %v958, 0.5
        %v1216 = vmul.f32 %v1007, 0.5
        %v1217 = vmul.f32 %v1056, 0.5
        %v1218 = vtanh.pop %v1058
        %v1219 = vtanh.pop %v1059
        %v1220 = vtanh.pop %v1060
        %v1221 = vtanh.pop %v1061
        %v1222 = vtanh.pop %v1062
        %v1223 = vtanh.pop %v1063
        %v1224 = vtanh.pop %v1064
        %v1225 = vtanh.pop %v1065
        %v1226 = vtanh.pop %v1066
        %v1227 = vtanh.pop %v1067
        %v1228 = vtanh.pop %v1068
        %v1229 = vtanh.pop %v1069
        %v1230 = vtanh.pop %v1070
        %v1231 = vtanh.pop %v1071
        %v1232 = vtanh.pop %v1072
        %v1233 = vtanh.pop %v1073
        %v1234 = vtanh.pop %v1074
        %v1235 = vtanh.pop %v1075
        %v1236 = vtanh.pop %v1076
        %v1237 = vtanh.pop %v1077
        %v1238 = vtanh.pop %v1078
        %v1239 = vtanh.pop %v1079
        %v1240 = vtanh.pop %v1080
        %v1241 = vtanh.pop %v1081
        %v1242 = vtanh.pop %v1082
        %v1243 = vtanh.pop %v1083
        %v1244 = vtanh.pop %v1084
        %v1245 = vtanh.pop %v1085
        %v1246 = vtanh.pop %v1086
        %v1247 = vtanh.pop %v1087
        %v1248 = vtanh.pop %v1088
        %v1249 = vtanh.pop %v1089
        %v1250 = vtanh.pop %v1090
        %v1251 = vtanh.pop %v1091
        %v1252 = vtanh.pop %v1092
        %v1253 = vtanh.pop %v1093
        %v1254 = vtanh.pop %v1094
        %v1255 = vtanh.pop %v1095
        %v1256 = vtanh.pop %v1096
        %v1257 = vtanh.pop %v1097
        %v1258 = vtanh.pop %v1098
        %v1259 = vtanh.pop %v1099
        %v1260 = vtanh.pop %v1100
        %v1261 = vtanh.pop %v1101
        %v1262 = vtanh.pop %v1102
        %v1263 = vtanh.pop %v1103
        %v1264 = vtanh.pop %v1104
        %v1265 = vtanh.pop %v1105
        %v1266 = vtanh.pop %v1106
        %v1267 = vtanh.pop %v1107
        %v1268 = vtanh.pop %v1108
        %v1269 = vtanh.pop %v1109
        %v1270 = vtanh.pop %v1110
        %v1271 = vtanh.pop %v1111
        %v1272 = vtanh.pop %v1112
        %v1273 = vtanh.pop %v1113
        %v1274 = vtanh.pop %v1114
        %v1275 = vtanh.pop %v1115
        %v1276 = vtanh.pop %v1116
        %v1277 = vtanh.pop %v1117
        %v1278 = vtanh.pop %v1118
        %v1279 = vtanh.pop %v1119
        %v1280 = vtanh.pop %v1120
        %v1281 = vtanh.pop %v1121
        %v1282 = vtanh.pop %v1122
        %v1283 = vtanh.pop %v1123
        %v1284 = vtanh.pop %v1124
        %v1285 = vtanh.pop %v1125
        %v1286 = vtanh.pop %v1126
        %v1287 = vtanh.pop %v1127
        %v1288 = vtanh.pop %v1128
        %v1289 = vtanh.pop %v1129
        %v1290 = vtanh.pop %v1130
        %v1291 = vtanh.pop %v1131
        %v1292 = vtanh.pop %v1132
        %v1293 = vtanh.pop %v1133
        %v1294 = vtanh.pop %v1134
        %v1295 = vtanh.pop %v1135
        %v1296 = vtanh.pop %v1136
        %v1297 = vtanh.pop %v1137
        %v1298 = vtanh.pop %v1138
        %v1299 = vtanh.pop %v1139
        %v1300 = vtanh.pop %v1140
        %v1301 = vtanh.pop %v1141
        %v1302 = vtanh.pop %v1142
        %v1303 = vtanh.pop %v1143
        %v1304 = vtanh.pop %v1144
        %v1305 = vtanh.pop %v1145
        %v1306 = vtanh.pop %v1146
        %v1307 = vtanh.pop %v1147
        %v1308 = vtanh.pop %v1148
        %v1309 = vtanh.pop %v1149
        %v1310 = vtanh.pop %v1150
        %v1311 = vtanh.pop %v1151
        %v1312 = vtanh.pop %v1152
        %v1313 = vtanh.pop %v1153
        %v1314 = vtanh.pop %v1154
        %v1315 = vtanh.pop %v1155
        %v1316 = vtanh.pop %v1156
        %v1317 = vtanh.pop %v1157
        %v1318 = vtanh.pop %v1158
        %v1319 = vtanh.pop %v1159
        %v1320 = vtanh.pop %v1160
        %v1321 = vtanh.pop %v1161
        %v1322 = vtanh.pop %v1162
        %v1323 = vtanh.pop %v1163
        %v1324 = vtanh.pop %v1164
        %v1325 = vtanh.pop %v1165
        %v1326 = vtanh.pop %v1166
        %v1327 = vtanh.pop %v1167
        %v1328 = vtanh.pop %v1168
        %v1329 = vtanh.pop %v1169
        %v1330 = vtanh.pop %v1170
        %v1331 = vtanh.pop %v1171
        %v1332 = vtanh.pop %v1172
        %v1333 = vtanh.pop %v1173
        %v1334 = vtanh.pop %v1174
        %v1335 = vtanh.pop %v1175
        %v1336 = vtanh.pop %v1176
        %v1337 = vtanh.pop %v1177
        %v1338 = vtanh.pop %v1178
        %v1339 = vtanh.pop %v1179
        %v1340 = vtanh.pop %v1180
        %v1341 = vtanh.pop %v1181
        %v1342 = vtanh.pop %v1182
        %v1343 = vtanh.pop %v1183
        %v1344 = vtanh.pop %v1184
        %v1345 = vtanh.pop %v1185
        %v1346 = vtanh.pop %v1186
        %v1347 = vtanh.pop %v1187
        %v1348 = vtanh.pop %v1188
        %v1349 = vtanh.pop %v1189
        %v1350 = vtanh.pop %v1190
        %v1351 = vtanh.pop %v1191
        %v1352 = vtanh.pop %v1192
        %v1353 = vtanh.pop %v1193
        %v1354 = vtanh.pop %v1194
        %v1355 = vtanh.pop %v1195
        %v1356 = vtanh.pop %v1196
        %v1357 = vtanh.pop %v1197
        %v1358 = vtanh.pop %v1198
        %v1359 = vtanh.pop %v1199
        %v1360 = vtanh.pop %v1200
        %v1361 = vtanh.pop %v1201
        %v1362 = vtanh.pop %v1202
        %v1363 = vtanh.pop %v1203
        %v1364 = vtanh.pop %v1204
        %v1365 = vtanh.pop %v1205
        %v1366 = vtanh.pop %v1206
        %v1367 = vtanh.pop %v1207
        %v1368 = vtanh.pop %v1208
        %v1369 = vtanh.pop %v1209
        %v1370 = vtanh.pop %v1210
        %v1371 = vtanh.pop %v1211
        %v1372 = vtanh.pop %v1212
        %v1373 = vtanh.pop %v1213
        %v1374 = vtanh.pop %v1214
        %v1375 = vtanh.pop %v1215
        %v1376 = vtanh.pop %v1216
        %v1377 = vtanh.pop %v1217
        %v1378 = vmul.f32 %v1218, 0.5
        %v1379 = vmul.f32 %v1219, 0.5
        %v1380 = vmul.f32 %v1220, 0.5
        %v1381 = vmul.f32 %v1221, 0.5
        %v1382 = vmul.f32 %v1222, 0.5
        %v1383 = vmul.f32 %v1223, 0.5
        %v1384 = vmul.f32 %v1224, 0.5
        %v1385 = vmul.f32 %v1225, 0.5
        %v1386 = vmul.f32 %v1226, 0.5
        %v1387 = vmul.f32 %v1227, 0.5
        %v1388 = vmul.f32 %v1228, 0.5
        %v1389 = vmul.f32 %v1229, 0.5
        %v1390 = vmul.f32 %v1230, 0.5
        %v1391 = vmul.f32 %v1231, 0.5
        %v1392 = vmul.f32 %v1232, 0.5
        %v1393 = vmul.f32 %v1233, 0.5
        %v1394 = vmul.f32 %v1234, 0.5
        %v1395 = vmul.f32 %v1235, 0.5
        %v1396 = vmul.f32 %v1236, 0.5
        %v1397 = vmul.f32 %v1237, 0.5
        %v1398 = vmul.f32 %v1238, 0.5
        %v1399 = vmul.f32 %v1239, 0.5
        %v1400 = vmul.f32 %v1240, 0.5
        %v1401 = vmul.f32 %v1241, 0.5
        %v1402 = vmul.f32 %v1242, 0.5
        %v1403 = vmul.f32 %v1243, 0.5
        %v1404 = vmul.f32 %v1244, 0.5
        %v1405 = vmul.f32 %v1245, 0.5
        %v1406 = vmul.f32 %v1246, 0.5
        %v1407 = vmul.f32 %v1247, 0.5
        %v1408 = vmul.f32 %v1248, 0.5
        %v1409 = vmul.f32 %v1249, 0.5
        %v1410 = vmul.f32 %v1250, 0.5
        %v1411 = vmul.f32 %v1251, 0.5
        %v1412 = vmul.f32 %v1252, 0.5
        %v1413 = vmul.f32 %v1253, 0.5
        %v1414 = vmul.f32 %v1254, 0.5
        %v1415 = vmul.f32 %v1255, 0.5
        %v1416 = vmul.f32 %v1256, 0.5
        %v1417 = vmul.f32 %v1257, 0.5
        %v1418 = vmul.f32 %v1258, 0.5
        %v1419 = vmul.f32 %v1259, 0.5
        %v1420 = vmul.f32 %v1260, 0.5
        %v1421 = vmul.f32 %v1261, 0.5
        %v1422 = vmul.f32 %v1262, 0.5
        %v1423 = vmul.f32 %v1263, 0.5
        %v1424 = vmul.f32 %v1264, 0.5
        %v1425 = vmul.f32 %v1265, 0.5
        %v1426 = vmul.f32 %v1266, 0.5
        %v1427 = vmul.f32 %v1267, 0.5
        %v1428 = vmul.f32 %v1268, 0.5
        %v1429 = vmul.f32 %v1269, 0.5
        %v1430 = vmul.f32 %v1270, 0.5
        %v1431 = vmul.f32 %v1271, 0.5
        %v1432 = vmul.f32 %v1272, 0.5
        %v1433 = vmul.f32 %v1273, 0.5
        %v1434 = vmul.f32 %v1274, 0.5
        %v1435 = vmul.f32 %v1275, 0.5
        %v1436 = vmul.f32 %v1276, 0.5
        %v1437 = vmul.f32 %v1277, 0.5
        %v1438 = vmul.f32 %v1278, 0.5
        %v1439 = vmul.f32 %v1279, 0.5
        %v1440 = vmul.f32 %v1280, 0.5
        %v1441 = vmul.f32 %v1281, 0.5
        %v1442 = vmul.f32 %v1282, 0.5
        %v1443 = vmul.f32 %v1283, 0.5
        %v1444 = vmul.f32 %v1284, 0.5
        %v1445 = vmul.f32 %v1285, 0.5
        %v1446 = vmul.f32 %v1286, 0.5
        %v1447 = vmul.f32 %v1287, 0.5
        %v1448 = vmul.f32 %v1288, 0.5
        %v1449 = vmul.f32 %v1289, 0.5
        %v1450 = vmul.f32 %v1290, 0.5
        %v1451 = vmul.f32 %v1291, 0.5
        %v1452 = vmul.f32 %v1292, 0.5
        %v1453 = vmul.f32 %v1293, 0.5
        %v1454 = vmul.f32 %v1294, 0.5
        %v1455 = vmul.f32 %v1295, 0.5
        %v1456 = vmul.f32 %v1296, 0.5
        %v1457 = vmul.f32 %v1297, 0.5
        %v1458 = vmul.f32 %v1298, 0.5
        %v1459 = vmul.f32 %v1299, 0.5
        %v1460 = vmul.f32 %v1300, 0.5
        %v1461 = vmul.f32 %v1301, 0.5
        %v1462 = vmul.f32 %v1302, 0.5
        %v1463 = vmul.f32 %v1303, 0.5
        %v1464 = vmul.f32 %v1304, 0.5
        %v1465 = vmul.f32 %v1305, 0.5
        %v1466 = vmul.f32 %v1306, 0.5
        %v1467 = vmul.f32 %v1307, 0.5
        %v1468 = vmul.f32 %v1308, 0.5
        %v1469 = vmul.f32 %v1309, 0.5
        %v1470 = vmul.f32 %v1310, 0.5
        %v1471 = vmul.f32 %v1311, 0.5
        %v1472 = vmul.f32 %v1312, 0.5
        %v1473 = vmul.f32 %v1313, 0.5
        %v1474 = vmul.f32 %v1314, 0.5
        %v1475 = vmul.f32 %v1315, 0.5
        %v1476 = vmul.f32 %v1316, 0.5
        %v1477 = vmul.f32 %v1317, 0.5
        %v1478 = vmul.f32 %v1318, 0.5
        %v1479 = vmul.f32 %v1319, 0.5
        %v1480 = vmul.f32 %v1320, 0.5
        %v1481 = vmul.f32 %v1321, 0.5
        %v1482 = vmul.f32 %v1322, 0.5
        %v1483 = vmul.f32 %v1323, 0.5
        %v1484 = vmul.f32 %v1324, 0.5
        %v1485 = vmul.f32 %v1325, 0.5
        %v1486 = vmul.f32 %v1326, 0.5
        %v1487 = vmul.f32 %v1327, 0.5
        %v1488 = vmul.f32 %v1328, 0.5
        %v1489 = vmul.f32 %v1329, 0.5
        %v1490 = vmul.f32 %v1330, 0.5
        %v1491 = vmul.f32 %v1331, 0.5
        %v1492 = vmul.f32 %v1332, 0.5
        %v1493 = vmul.f32 %v1333, 0.5
        %v1494 = vmul.f32 %v1334, 0.5
        %v1495 = vmul.f32 %v1335, 0.5
        %v1496 = vmul.f32 %v1336, 0.5
        %v1497 = vmul.f32 %v1337, 0.5
        %v1498 = vmul.f32 %v1338, 0.5
        %v1499 = vmul.f32 %v1339, 0.5
        %v1500 = vmul.f32 %v1340, 0.5
        %v1501 = vmul.f32 %v1341, 0.5
        %v1502 = vmul.f32 %v1342, 0.5
        %v1503 = vmul.f32 %v1343, 0.5
        %v1504 = vmul.f32 %v1344, 0.5
        %v1505 = vmul.f32 %v1345, 0.5
        %v1506 = vmul.f32 %v1346, 0.5
        %v1507 = vmul.f32 %v1347, 0.5
        %v1508 = vmul.f32 %v1348, 0.5
        %v1509 = vmul.f32 %v1349, 0.5
        %v1510 = vmul.f32 %v1350, 0.5
        %v1511 = vmul.f32 %v1351, 0.5
        %v1512 = vmul.f32 %v1352, 0.5
        %v1513 = vmul.f32 %v1353, 0.5
        %v1514 = vmul.f32 %v1354, 0.5
        %v1515 = vmul.f32 %v1355, 0.5
        %v1516 = vmul.f32 %v1356, 0.5
        %v1517 = vmul.f32 %v1357, 0.5
        %v1518 = vmul.f32 %v1358, 0.5
        %v1519 = vmul.f32 %v1359, 0.5
        %v1520 = vmul.f32 %v1360, 0.5
        %v1521 = vmul.f32 %v1361, 0.5
        %v1522 = vmul.f32 %v1362, 0.5
        %v1523 = vmul.f32 %v1363, 0.5
        %v1524 = vmul.f32 %v1364, 0.5
        %v1525 = vmul.f32 %v1365, 0.5
        %v1526 = vmul.f32 %v1366, 0.5
        %v1527 = vmul.f32 %v1367, 0.5
        %v1528 = vmul.f32 %v1368, 0.5
        %v1529 = vmul.f32 %v1369, 0.5
        %v1530 = vmul.f32 %v1370, 0.5
        %v1531 = vmul.f32 %v1371, 0.5
        %v1532 = vmul.f32 %v1372, 0.5
        %v1533 = vmul.f32 %v1373, 0.5
        %v1534 = vmul.f32 %v1374, 0.5
        %v1535 = vmul.f32 %v1375, 0.5
        %v1536 = vmul.f32 %v1376, 0.5
        %v1537 = vmul.f32 %v1377, 0.5
        %v1538 = vadd.f32 %v1378, 0.5
        %v1539 = vadd.f32 %v1379, 0.5
        %v1540 = vadd.f32 %v1380, 0.5
        %v1541 = vadd.f32 %v1381, 0.5
        %v1542 = vadd.f32 %v1382, 0.5
        %v1543 = vadd.f32 %v1383, 0.5
        %v1544 = vadd.f32 %v1384, 0.5
        %v1545 = vadd.f32 %v1385, 0.5
        %v1546 = vadd.f32 %v1386, 0.5
        %v1547 = vadd.f32 %v1387, 0.5
        %v1548 = vadd.f32 %v1388, 0.5
        %v1549 = vadd.f32 %v1389, 0.5
        %v1550 = vadd.f32 %v1390, 0.5
        %v1551 = vadd.f32 %v1391, 0.5
        %v1552 = vadd.f32 %v1392, 0.5
        %v1553 = vadd.f32 %v1393, 0.5
        %v1554 = vadd.f32 %v1394, 0.5
        %v1555 = vadd.f32 %v1395, 0.5
        %v1556 = vadd.f32 %v1396, 0.5
        %v1557 = vadd.f32 %v1397, 0.5
        %v1558 = vadd.f32 %v1398, 0.5
        %v1559 = vadd.f32 %v1399, 0.5
        %v1560 = vadd.f32 %v1400, 0.5
        %v1561 = vadd.f32 %v1401, 0.5
        %v1562 = vadd.f32 %v1402, 0.5
        %v1563 = vadd.f32 %v1403, 0.5
        %v1564 = vadd.f32 %v1404, 0.5
        %v1565 = vadd.f32 %v1405, 0.5
        %v1566 = vadd.f32 %v1406, 0.5
        %v1567 = vadd.f32 %v1407, 0.5
        %v1568 = vadd.f32 %v1408, 0.5
        %v1569 = vadd.f32 %v1409, 0.5
        %v1570 = vadd.f32 %v1410, 0.5
        %v1571 = vadd.f32 %v1411, 0.5
        %v1572 = vadd.f32 %v1412, 0.5
        %v1573 = vadd.f32 %v1413, 0.5
        %v1574 = vadd.f32 %v1414, 0.5
        %v1575 = vadd.f32 %v1415, 0.5
        %v1576 = vadd.f32 %v1416, 0.5
        %v1577 = vadd.f32 %v1417, 0.5
        %v1578 = vadd.f32 %v1418, 0.5
        %v1579 = vadd.f32 %v1419, 0.5
        %v1580 = vadd.f32 %v1420, 0.5
        %v1581 = vadd.f32 %v1421, 0.5
        %v1582 = vadd.f32 %v1422, 0.5
        %v1583 = vadd.f32 %v1423, 0.5
        %v1584 = vadd.f32 %v1424, 0.5
        %v1585 = vadd.f32 %v1425, 0.5
        %v1586 = vadd.f32 %v1426, 0.5
        %v1587 = vadd.f32 %v1427, 0.5
        %v1588 = vadd.f32 %v1428, 0.5
        %v1589 = vadd.f32 %v1429, 0.5
        %v1590 = vadd.f32 %v1430, 0.5
        %v1591 = vadd.f32 %v1431, 0.5
        %v1592 = vadd.f32 %v1432, 0.5
        %v1593 = vadd.f32 %v1433, 0.5
        %v1594 = vadd.f32 %v1434, 0.5
        %v1595 = vadd.f32 %v1435, 0.5
        %v1596 = vadd.f32 %v1436, 0.5
        %v1597 = vadd.f32 %v1437, 0.5
        %v1598 = vadd.f32 %v1438, 0.5
        %v1599 = vadd.f32 %v1439, 0.5
        %v1600 = vadd.f32 %v1440, 0.5
        %v1601 = vadd.f32 %v1441, 0.5
        %v1602 = vadd.f32 %v1442, 0.5
        %v1603 = vadd.f32 %v1443, 0.5
        %v1604 = vadd.f32 %v1444, 0.5
        %v1605 = vadd.f32 %v1445, 0.5
        %v1606 = vadd.f32 %v1446, 0.5
        %v1607 = vadd.f32 %v1447, 0.5
        %v1608 = vadd.f32 %v1448, 0.5
        %v1609 = vadd.f32 %v1449, 0.5
        %v1610 = vadd.f32 %v1450, 0.5
        %v1611 = vadd.f32 %v1451, 0.5
        %v1612 = vadd.f32 %v1452, 0.5
        %v1613 = vadd.f32 %v1453, 0.5
        %v1614 = vadd.f32 %v1454, 0.5
        %v1615 = vadd.f32 %v1455, 0.5
        %v1616 = vadd.f32 %v1456, 0.5
        %v1617 = vadd.f32 %v1457, 0.5
        %v1618 = vadd.f32 %v1458, 0.5
        %v1619 = vadd.f32 %v1459, 0.5
        %v1620 = vadd.f32 %v1460, 0.5
        %v1621 = vadd.f32 %v1461, 0.5
        %v1622 = vadd.f32 %v1462, 0.5
        %v1623 = vadd.f32 %v1463, 0.5
        %v1624 = vadd.f32 %v1464, 0.5
        %v1625 = vadd.f32 %v1465, 0.5
        %v1626 = vadd.f32 %v1466, 0.5
        %v1627 = vadd.f32 %v1467, 0.5
        %v1628 = vadd.f32 %v1468, 0.5
        %v1629 = vadd.f32 %v1469, 0.5
        %v1630 = vadd.f32 %v1470, 0.5
        %v1631 = vadd.f32 %v1471, 0.5
        %v1632 = vadd.f32 %v1472, 0.5
        %v1633 = vadd.f32 %v1473, 0.5
        %v1634 = vadd.f32 %v1474, 0.5
        %v1635 = vadd.f32 %v1475, 0.5
        %v1636 = vadd.f32 %v1476, 0.5
        %v1637 = vadd.f32 %v1477, 0.5
        %v1638 = vadd.f32 %v1478, 0.5
        %v1639 = vadd.f32 %v1479, 0.5
        %v1640 = vadd.f32 %v1480, 0.5
        %v1641 = vadd.f32 %v1481, 0.5
        %v1642 = vadd.f32 %v1482, 0.5
        %v1643 = vadd.f32 %v1483, 0.5
        %v1644 = vadd.f32 %v1484, 0.5
        %v1645 = vadd.f32 %v1485, 0.5
        %v1646 = vadd.f32 %v1486, 0.5
        %v1647 = vadd.f32 %v1487, 0.5
        %v1648 = vadd.f32 %v1488, 0.5
        %v1649 = vadd.f32 %v1489, 0.5
        %v1650 = vadd.f32 %v1490, 0.5
        %v1651 = vadd.f32 %v1491, 0.5
        %v1652 = vadd.f32 %v1492, 0.5
        %v1653 = vadd.f32 %v1493, 0.5
        %v1654 = vadd.f32 %v1494, 0.5
        %v1655 = vadd.f32 %v1495, 0.5
        %v1656 = vadd.f32 %v1496, 0.5
        %v1657 = vadd.f32 %v1497, 0.5
        %v1658 = vadd.f32 %v1498, 0.5
        %v1659 = vadd.f32 %v1499, 0.5
        %v1660 = vadd.f32 %v1500, 0.5
        %v1661 = vadd.f32 %v1501, 0.5
        %v1662 = vadd.f32 %v1502, 0.5
        %v1663 = vadd.f32 %v1503, 0.5
        %v1664 = vadd.f32 %v1504, 0.5
        %v1665 = vadd.f32 %v1505, 0.5
        %v1666 = vadd.f32 %v1506, 0.5
        %v1667 = vadd.f32 %v1507, 0.5
        %v1668 = vadd.f32 %v1508, 0.5
        %v1669 = vadd.f32 %v1509, 0.5
        %v1670 = vadd.f32 %v1510, 0.5
        %v1671 = vadd.f32 %v1511, 0.5
        %v1672 = vadd.f32 %v1512, 0.5
        %v1673 = vadd.f32 %v1513, 0.5
        %v1674 = vadd.f32 %v1514, 0.5
        %v1675 = vadd.f32 %v1515, 0.5
        %v1676 = vadd.f32 %v1516, 0.5
        %v1677 = vadd.f32 %v1517, 0.5
        %v1678 = vadd.f32 %v1518, 0.5
        %v1679 = vadd.f32 %v1519, 0.5
        %v1680 = vadd.f32 %v1520, 0.5
        %v1681 = vadd.f32 %v1521, 0.5
        %v1682 = vadd.f32 %v1522, 0.5
        %v1683 = vadd.f32 %v1523, 0.5
        %v1684 = vadd.f32 %v1524, 0.5
        %v1685 = vadd.f32 %v1525, 0.5
        %v1686 = vadd.f32 %v1526, 0.5
        %v1687 = vadd.f32 %v1527, 0.5
        %v1688 = vadd.f32 %v1528, 0.5
        %v1689 = vadd.f32 %v1529, 0.5
        %v1690 = vadd.f32 %v1530, 0.5
        %v1691 = vadd.f32 %v1531, 0.5
        %v1692 = vadd.f32 %v1532, 0.5
        %v1693 = vadd.f32 %v1533, 0.5
        %v1694 = vadd.f32 %v1534, 0.5
        %v1695 = vadd.f32 %v1535, 0.5
        %v1696 = vadd.f32 %v1536, 0.5
        %v1697 = vadd.f32 %v1537, 0.5
        %v1698 = vpack.c.bf16 %v1539, %v1538
        %v1699 = vpack.c.bf16 %v1541, %v1540
        %v1700 = vpack.c.bf16 %v1543, %v1542
        %v1701 = vpack.c.bf16 %v1545, %v1544
        %v1702 = vpack.c.bf16 %v1547, %v1546
        %v1703 = vpack.c.bf16 %v1549, %v1548
        %v1704 = vpack.c.bf16 %v1551, %v1550
        %v1705 = vpack.c.bf16 %v1553, %v1552
        %v1706 = vpack.c.bf16 %v1555, %v1554
        %v1707 = vpack.c.bf16 %v1557, %v1556
        %v1708 = vpack.c.bf16 %v1559, %v1558
        %v1709 = vpack.c.bf16 %v1561, %v1560
        %v1710 = vpack.c.bf16 %v1563, %v1562
        %v1711 = vpack.c.bf16 %v1565, %v1564
        %v1712 = vpack.c.bf16 %v1567, %v1566
        %v1713 = vpack.c.bf16 %v1569, %v1568
        %v1714 = vpack.c.bf16 %v1571, %v1570
        %v1715 = vpack.c.bf16 %v1573, %v1572
        %v1716 = vpack.c.bf16 %v1575, %v1574
        %v1717 = vpack.c.bf16 %v1577, %v1576
        %v1718 = vpack.c.bf16 %v1579, %v1578
        %v1719 = vpack.c.bf16 %v1581, %v1580
        %v1720 = vpack.c.bf16 %v1583, %v1582
        %v1721 = vpack.c.bf16 %v1585, %v1584
        %v1722 = vpack.c.bf16 %v1587, %v1586
        %v1723 = vpack.c.bf16 %v1589, %v1588
        %v1724 = vpack.c.bf16 %v1591, %v1590
        %v1725 = vpack.c.bf16 %v1593, %v1592
        %v1726 = vpack.c.bf16 %v1595, %v1594
        %v1727 = vpack.c.bf16 %v1597, %v1596
        %v1728 = vpack.c.bf16 %v1599, %v1598
        %v1729 = vpack.c.bf16 %v1601, %v1600
        %v1730 = vpack.c.bf16 %v1603, %v1602
        %v1731 = vpack.c.bf16 %v1605, %v1604
        %v1732 = vpack.c.bf16 %v1607, %v1606
        %v1733 = vpack.c.bf16 %v1609, %v1608
        %v1734 = vpack.c.bf16 %v1611, %v1610
        %v1735 = vpack.c.bf16 %v1613, %v1612
        %v1736 = vpack.c.bf16 %v1615, %v1614
        %v1737 = vpack.c.bf16 %v1617, %v1616
        %v1738 = vpack.c.bf16 %v1619, %v1618
        %v1739 = vpack.c.bf16 %v1621, %v1620
        %v1740 = vpack.c.bf16 %v1623, %v1622
        %v1741 = vpack.c.bf16 %v1625, %v1624
        %v1742 = vpack.c.bf16 %v1627, %v1626
        %v1743 = vpack.c.bf16 %v1629, %v1628
        %v1744 = vpack.c.bf16 %v1631, %v1630
        %v1745 = vpack.c.bf16 %v1633, %v1632
        %v1746 = vpack.c.bf16 %v1635, %v1634
        %v1747 = vpack.c.bf16 %v1637, %v1636
        %v1748 = vpack.c.bf16 %v1639, %v1638
        %v1749 = vpack.c.bf16 %v1641, %v1640
        %v1750 = vpack.c.bf16 %v1643, %v1642
        %v1751 = vpack.c.bf16 %v1645, %v1644
        %v1752 = vpack.c.bf16 %v1647, %v1646
        %v1753 = vpack.c.bf16 %v1649, %v1648
        %v1754 = vpack.c.bf16 %v1651, %v1650
        %v1755 = vpack.c.bf16 %v1653, %v1652
        %v1756 = vpack.c.bf16 %v1655, %v1654
        %v1757 = vpack.c.bf16 %v1657, %v1656
        %v1758 = vpack.c.bf16 %v1659, %v1658
        %v1759 = vpack.c.bf16 %v1661, %v1660
        %v1760 = vpack.c.bf16 %v1663, %v1662
        %v1761 = vpack.c.bf16 %v1665, %v1664
        %v1762 = vpack.c.bf16 %v1667, %v1666
        %v1763 = vpack.c.bf16 %v1669, %v1668
        %v1764 = vpack.c.bf16 %v1671, %v1670
        %v1765 = vpack.c.bf16 %v1673, %v1672
        %v1766 = vpack.c.bf16 %v1675, %v1674
        %v1767 = vpack.c.bf16 %v1677, %v1676
        %v1768 = vpack.c.bf16 %v1679, %v1678
        %v1769 = vpack.c.bf16 %v1681, %v1680
        %v1770 = vpack.c.bf16 %v1683, %v1682
        %v1771 = vpack.c.bf16 %v1685, %v1684
        %v1772 = vpack.c.bf16 %v1687, %v1686
        %v1773 = vpack.c.bf16 %v1689, %v1688
        %v1774 = vpack.c.bf16 %v1691, %v1690
        %v1775 = vpack.c.bf16 %v1693, %v1692
        %v1776 = vpack.c.bf16 %v1695, %v1694
        %v1777 = vpack.c.bf16 %v1697, %v1696
        %v1778 = vld [vmem:[%s2] sm:$0xf]
        %v1779 = vld [vmem:[%s2 + $0x4] sm:$0xf]
        %v1780 = vld [vmem:[%s2 + $0x8] sm:$0xf]
        %v1781 = vld [vmem:[%s2 + $0xc] sm:$0xf]
        %v1782 = vld [vmem:[%s2 + $0x10] sm:$0xf]
        %v1783 = vld [vmem:[%s2 + $0x14] sm:$0xf]
        %v1784 = vld [vmem:[%s2 + $0x18] sm:$0xf]
        %v1785 = vld [vmem:[%s2 + $0x1c] sm:$0xf]
        %v1786 = vld [vmem:[%s2 + $0x20] sm:$0xf]
        %v1787 = vld [vmem:[%s2 + $0x24] sm:$0xf]
        %v1788 = vld [vmem:[%s2 + $0x28] sm:$0xf]
        %v1789 = vld [vmem:[%s2 + $0x2c] sm:$0xf]
        %v1790 = vld [vmem:[%s2 + $0x30] sm:$0xf]
        %v1791 = vld [vmem:[%s2 + $0x34] sm:$0xf]
        %v1792 = vld [vmem:[%s2 + $0x38] sm:$0xf]
        %v1793 = vld [vmem:[%s2 + $0x3c] sm:$0xf]
        %v1794 = vld [vmem:[%s2 + $0x40] sm:$0xf]
        %v1795 = vld [vmem:[%s2 + $0x44] sm:$0xf]
        %v1796 = vld [vmem:[%s2 + $0x48] sm:$0xf]
        %v1797 = vld [vmem:[%s2 + $0x4c] sm:$0xf]
        %v1798 = vld [vmem:[%s2 + $0x50] sm:$0xf]
        %v1799 = vld [vmem:[%s2 + $0x54] sm:$0xf]
        %v1800 = vld [vmem:[%s2 + $0x58] sm:$0xf]
        %v1801 = vld [vmem:[%s2 + $0x5c] sm:$0xf]
        %v1802 = vld [vmem:[%s2 + $0x60] sm:$0xf]
        %v1803 = vld [vmem:[%s2 + $0x64] sm:$0xf]
        %v1804 = vld [vmem:[%s2 + $0x68] sm:$0xf]
        %v1805 = vld [vmem:[%s2 + $0x6c] sm:$0xf]
        %v1806 = vld [vmem:[%s2 + $0x70] sm:$0xf]
        %v1807 = vld [vmem:[%s2 + $0x74] sm:$0xf]
        %v1808 = vld [vmem:[%s2 + $0x78] sm:$0xf]
        %v1809 = vld [vmem:[%s2 + $0x7c] sm:$0xf]
        %v1810 = vld [vmem:[%s2 + $0x80] sm:$0xf]
        %v1811 = vld [vmem:[%s2 + $0x84] sm:$0xf]
        %v1812 = vld [vmem:[%s2 + $0x88] sm:$0xf]
        %v1813 = vld [vmem:[%s2 + $0x8c] sm:$0xf]
        %v1814 = vld [vmem:[%s2 + $0x90] sm:$0xf]
        %v1815 = vld [vmem:[%s2 + $0x94] sm:$0xf]
        %v1816 = vld [vmem:[%s2 + $0x98] sm:$0xf]
        %v1817 = vld [vmem:[%s2 + $0x9c] sm:$0xf]
        %v1818 = vld [vmem:[%s2 + $0xa0] sm:$0xf]
        %v1819 = vld [vmem:[%s2 + $0xa4] sm:$0xf]
        %v1820 = vld [vmem:[%s2 + $0xa8] sm:$0xf]
        %v1821 = vld [vmem:[%s2 + $0xac] sm:$0xf]
        %v1822 = vld [vmem:[%s2 + $0xb0] sm:$0xf]
        %v1823 = vld [vmem:[%s2 + $0xb4] sm:$0xf]
        %v1824 = vld [vmem:[%s2 + $0xb8] sm:$0xf]
        %v1825 = vld [vmem:[%s2 + $0xbc] sm:$0xf]
        %v1826 = vld [vmem:[%s2 + $0xc0] sm:$0xf]
        %v1827 = vld [vmem:[%s2 + $0xc4] sm:$0xf]
        %v1828 = vld [vmem:[%s2 + $0xc8] sm:$0xf]
        %v1829 = vld [vmem:[%s2 + $0xcc] sm:$0xf]
        %v1830 = vld [vmem:[%s2 + $0xd0] sm:$0xf]
        %v1831 = vld [vmem:[%s2 + $0xd4] sm:$0xf]
        %v1832 = vld [vmem:[%s2 + $0xd8] sm:$0xf]
        %v1833 = vld [vmem:[%s2 + $0xdc] sm:$0xf]
        %v1834 = vld [vmem:[%s2 + $0xe0] sm:$0xf]
        %v1835 = vld [vmem:[%s2 + $0xe4] sm:$0xf]
        %v1836 = vld [vmem:[%s2 + $0xe8] sm:$0xf]
        %v1837 = vld [vmem:[%s2 + $0xec] sm:$0xf]
        %v1838 = vld [vmem:[%s2 + $0xf0] sm:$0xf]
        %v1839 = vld [vmem:[%s2 + $0xf4] sm:$0xf]
        %v1840 = vld [vmem:[%s2 + $0xf8] sm:$0xf]
        %v1841 = vld [vmem:[%s2 + $0xfc] sm:$0xf]
        %v1842 = vld [vmem:[%s2 + $0x100] sm:$0xf]
        %v1843 = vld [vmem:[%s2 + $0x104] sm:$0xf]
        %v1844 = vld [vmem:[%s2 + $0x108] sm:$0xf]
        %v1845 = vld [vmem:[%s2 + $0x10c] sm:$0xf]
        %v1846 = vld [vmem:[%s2 + $0x110] sm:$0xf]
        %v1847 = vld [vmem:[%s2 + $0x114] sm:$0xf]
        %v1848 = vld [vmem:[%s2 + $0x118] sm:$0xf]
        %v1849 = vld [vmem:[%s2 + $0x11c] sm:$0xf]
        %v1850 = vld [vmem:[%s2 + $0x120] sm:$0xf]
        %v1851 = vld [vmem:[%s2 + $0x124] sm:$0xf]
        %v1852 = vld [vmem:[%s2 + $0x128] sm:$0xf]
        %v1853 = vld [vmem:[%s2 + $0x12c] sm:$0xf]
        %v1854 = vld [vmem:[%s2 + $0x130] sm:$0xf]
        %v1855 = vld [vmem:[%s2 + $0x134] sm:$0xf]
        %v1856 = vld [vmem:[%s2 + $0x138] sm:$0xf]
        %v1857 = vld [vmem:[%s2 + $0x13c] sm:$0xf]
        %v1858 = vld [vmem:[%s2 + $0x140] sm:$0xf]
        %v1859 = vld [vmem:[%s2 + $0x144] sm:$0xf]
        %v1860 = vld [vmem:[%s2 + $0x148] sm:$0xf]
        %v1861 = vld [vmem:[%s2 + $0x14c] sm:$0xf]
        %v1862 = vld [vmem:[%s2 + $0x150] sm:$0xf]
        %v1863 = vld [vmem:[%s2 + $0x154] sm:$0xf]
        %v1864 = vld [vmem:[%s2 + $0x158] sm:$0xf]
        %v1865 = vld [vmem:[%s2 + $0x15c] sm:$0xf]
        %v1866 = vld [vmem:[%s2 + $0x160] sm:$0xf]
        %v1867 = vld [vmem:[%s2 + $0x164] sm:$0xf]
        %v1868 = vld [vmem:[%s2 + $0x168] sm:$0xf]
        %v1869 = vld [vmem:[%s2 + $0x16c] sm:$0xf]
        %v1870 = vld [vmem:[%s2 + $0x170] sm:$0xf]
        %v1871 = vld [vmem:[%s2 + $0x174] sm:$0xf]
        %v1872 = vld [vmem:[%s2 + $0x178] sm:$0xf]
        %v1873 = vld [vmem:[%s2 + $0x17c] sm:$0xf]
        %v1874 = vld [vmem:[%s6] sm:$0x1]
        %v1876 = vperm.slane %v1874, 0
        %v1926 = vunpack.c.l.b16 %v1698
        %v1927 = vunpack.c.h.b16 %v1698
        %v1928 = vunpack.c.l.b16 %v1699
        %v1929 = vunpack.c.h.b16 %v1699
        %v1930 = vunpack.c.l.b16 %v1700
        %v1931 = vunpack.c.h.b16 %v1700
        %v1932 = vunpack.c.l.b16 %v1703
        %v1933 = vunpack.c.h.b16 %v1703
        %v1934 = vunpack.c.l.b16 %v1704
        %v1935 = vunpack.c.h.b16 %v1704
        %v1936 = vunpack.c.l.b16 %v1705
        %v1937 = vunpack.c.h.b16 %v1705
        %v1938 = vunpack.c.l.b16 %v1708
        %v1939 = vunpack.c.h.b16 %v1708
        %v1940 = vunpack.c.l.b16 %v1709
        %v1941 = vunpack.c.h.b16 %v1709
        %v1942 = vunpack.c.l.b16 %v1710
        %v1943 = vunpack.c.h.b16 %v1710
        %v1944 = vunpack.c.l.b16 %v1713
        %v1945 = vunpack.c.h.b16 %v1713
        %v1946 = vunpack.c.l.b16 %v1714
        %v1947 = vunpack.c.h.b16 %v1714
        %v1948 = vunpack.c.l.b16 %v1715
        %v1949 = vunpack.c.h.b16 %v1715
        %v1950 = vunpack.c.l.b16 %v1718
        %v1951 = vunpack.c.h.b16 %v1718
        %v1952 = vunpack.c.l.b16 %v1719
        %v1953 = vunpack.c.h.b16 %v1719
        %v1954 = vunpack.c.l.b16 %v1720
        %v1955 = vunpack.c.h.b16 %v1720
        %v1956 = vunpack.c.l.b16 %v1723
        %v1957 = vunpack.c.h.b16 %v1723
        %v1958 = vunpack.c.l.b16 %v1724
        %v1959 = vunpack.c.h.b16 %v1724
        %v1960 = vunpack.c.l.b16 %v1725
        %v1961 = vunpack.c.h.b16 %v1725
        %v1962 = vunpack.c.l.b16 %v1728
        %v1963 = vunpack.c.h.b16 %v1728
        %v1964 = vunpack.c.l.b16 %v1729
        %v1965 = vunpack.c.h.b16 %v1729
        %v1966 = vunpack.c.l.b16 %v1730
        %v1967 = vunpack.c.h.b16 %v1730
        %v1968 = vunpack.c.l.b16 %v1733
        %v1969 = vunpack.c.h.b16 %v1733
        %v1970 = vunpack.c.l.b16 %v1734
        %v1971 = vunpack.c.h.b16 %v1734
        %v1972 = vunpack.c.l.b16 %v1735
        %v1973 = vunpack.c.h.b16 %v1735
        %v1974 = vunpack.c.l.b16 %v1738
        %v1975 = vunpack.c.h.b16 %v1738
        %v1976 = vunpack.c.l.b16 %v1739
        %v1977 = vunpack.c.h.b16 %v1739
        %v1978 = vunpack.c.l.b16 %v1740
        %v1979 = vunpack.c.h.b16 %v1740
        %v1980 = vunpack.c.l.b16 %v1743
        %v1981 = vunpack.c.h.b16 %v1743
        %v1982 = vunpack.c.l.b16 %v1744
        %v1983 = vunpack.c.h.b16 %v1744
        %v1984 = vunpack.c.l.b16 %v1745
        %v1985 = vunpack.c.h.b16 %v1745
        %v1986 = vunpack.c.l.b16 %v1748
        %v1987 = vunpack.c.h.b16 %v1748
        %v1988 = vunpack.c.l.b16 %v1749
        %v1989 = vunpack.c.h.b16 %v1749
        %v1990 = vunpack.c.l.b16 %v1750
        %v1991 = vunpack.c.h.b16 %v1750
        %v1992 = vunpack.c.l.b16 %v1753
        %v1993 = vunpack.c.h.b16 %v1753
        %v1994 = vunpack.c.l.b16 %v1754
        %v1995 = vunpack.c.h.b16 %v1754
        %v1996 = vunpack.c.l.b16 %v1755
        %v1997 = vunpack.c.h.b16 %v1755
        %v1998 = vunpack.c.l.b16 %v1758
        %v1999 = vunpack.c.h.b16 %v1758
        %v2000 = vunpack.c.l.b16 %v1759
        %v2001 = vunpack.c.h.b16 %v1759
        %v2002 = vunpack.c.l.b16 %v1760
        %v2003 = vunpack.c.h.b16 %v1760
        %v2004 = vunpack.c.l.b16 %v1763
        %v2005 = vunpack.c.h.b16 %v1763
        %v2006 = vunpack.c.l.b16 %v1764
        %v2007 = vunpack.c.h.b16 %v1764
        %v2008 = vunpack.c.l.b16 %v1765
        %v2009 = vunpack.c.h.b16 %v1765
        %v2010 = vunpack.c.l.b16 %v1768
        %v2011 = vunpack.c.h.b16 %v1768
        %v2012 = vunpack.c.l.b16 %v1769
        %v2013 = vunpack.c.h.b16 %v1769
        %v2014 = vunpack.c.l.b16 %v1770
        %v2015 = vunpack.c.h.b16 %v1770
        %v2016 = vunpack.c.l.b16 %v1773
        %v2017 = vunpack.c.h.b16 %v1773
        %v2018 = vunpack.c.l.b16 %v1774
        %v2019 = vunpack.c.h.b16 %v1774
        %v2020 = vunpack.c.l.b16 %v1775
        %v2021 = vunpack.c.h.b16 %v1775
        %v2022 = vpack.c.b16 %v1932, %v1926
        %v2023 = vpack.c.b16 %v1933, %v1927
        %v2024 = vpack.c.b16 %v1934, %v1928
        %v2025 = vpack.c.b16 %v1935, %v1929
        %v2026 = vpack.c.b16 %v1936, %v1930
        %v2027 = vpack.c.b16 %v1937, %v1931
        %v2028 = vpack.c.b16 %v1944, %v1938
        %v2029 = vpack.c.b16 %v1945, %v1939
        %v2030 = vpack.c.b16 %v1946, %v1940
        %v2031 = vpack.c.b16 %v1947, %v1941
        %v2032 = vpack.c.b16 %v1948, %v1942
        %v2033 = vpack.c.b16 %v1949, %v1943
        %v2034 = vpack.c.b16 %v1956, %v1950
        %v2035 = vpack.c.b16 %v1957, %v1951
        %v2036 = vpack.c.b16 %v1958, %v1952
        %v2037 = vpack.c.b16 %v1959, %v1953
        %v2038 = vpack.c.b16 %v1960, %v1954
        %v2039 = vpack.c.b16 %v1961, %v1955
        %v2040 = vpack.c.b16 %v1968, %v1962
        %v2041 = vpack.c.b16 %v1969, %v1963
        %v2042 = vpack.c.b16 %v1970, %v1964
        %v2043 = vpack.c.b16 %v1971, %v1965
        %v2044 = vpack.c.b16 %v1972, %v1966
        %v2045 = vpack.c.b16 %v1973, %v1967
        %v2046 = vpack.c.b16 %v1980, %v1974
        %v2047 = vpack.c.b16 %v1981, %v1975
        %v2048 = vpack.c.b16 %v1982, %v1976
        %v2049 = vpack.c.b16 %v1983, %v1977
        %v2050 = vpack.c.b16 %v1984, %v1978
        %v2051 = vpack.c.b16 %v1985, %v1979
        %v2052 = vpack.c.b16 %v1992, %v1986
        %v2053 = vpack.c.b16 %v1993, %v1987
        %v2054 = vpack.c.b16 %v1994, %v1988
        %v2055 = vpack.c.b16 %v1995, %v1989
        %v2056 = vpack.c.b16 %v1996, %v1990
        %v2057 = vpack.c.b16 %v1997, %v1991
        %v2058 = vpack.c.b16 %v2004, %v1998
        %v2059 = vpack.c.b16 %v2005, %v1999
        %v2060 = vpack.c.b16 %v2006, %v2000
        %v2061 = vpack.c.b16 %v2007, %v2001
        %v2062 = vpack.c.b16 %v2008, %v2002
        %v2063 = vpack.c.b16 %v2009, %v2003
        %v2064 = vpack.c.b16 %v2016, %v2010
        %v2065 = vpack.c.b16 %v2017, %v2011
        %v2066 = vpack.c.b16 %v2018, %v2012
        %v2067 = vpack.c.b16 %v2019, %v2013
        %v2068 = vpack.c.b16 %v2020, %v2014
        %v2069 = vpack.c.b16 %v2021, %v2015
        %v2214 = vunpack.c.l.b16 %v1778
        %v2215 = vunpack.c.l.b16 %v1779
        %v2216 = vunpack.c.l.b16 %v1780
        %v2217 = vunpack.c.l.b16 %v1781
        %v2218 = vunpack.c.l.b16 %v1782
        %v2219 = vunpack.c.l.b16 %v1783
        %v2220 = vunpack.c.l.b16 %v1784
        %v2221 = vunpack.c.l.b16 %v1785
        %v2222 = vunpack.c.l.b16 %v1786
        %v2223 = vunpack.c.l.b16 %v1787
        %v2224 = vunpack.c.l.b16 %v1788
        %v2225 = vunpack.c.l.b16 %v1789
        %v2226 = vunpack.c.l.b16 %v1790
        %v2227 = vunpack.c.l.b16 %v1791
        %v2228 = vunpack.c.l.b16 %v1792
        %v2229 = vunpack.c.l.b16 %v1793
        %v2230 = vunpack.c.l.b16 %v1794
        %v2231 = vunpack.c.l.b16 %v1795
        %v2232 = vunpack.c.l.b16 %v1796
        %v2233 = vunpack.c.l.b16 %v1797
        %v2234 = vunpack.c.l.b16 %v1798
        %v2235 = vunpack.c.l.b16 %v1799
        %v2236 = vunpack.c.l.b16 %v1800
        %v2237 = vunpack.c.l.b16 %v1801
        %v2238 = vunpack.c.l.b16 %v1802
        %v2239 = vunpack.c.l.b16 %v1803
        %v2240 = vunpack.c.l.b16 %v1804
        %v2241 = vunpack.c.l.b16 %v1805
        %v2242 = vunpack.c.l.b16 %v1806
        %v2243 = vunpack.c.l.b16 %v1807
        %v2244 = vunpack.c.l.b16 %v1808
        %v2245 = vunpack.c.l.b16 %v1809
        %v2246 = vunpack.c.l.b16 %v1810
        %v2247 = vunpack.c.l.b16 %v1811
        %v2248 = vunpack.c.l.b16 %v1812
        %v2249 = vunpack.c.l.b16 %v1813
        %v2250 = vunpack.c.l.b16 %v1814
        %v2251 = vunpack.c.l.b16 %v1815
        %v2252 = vunpack.c.l.b16 %v1816
        %v2253 = vunpack.c.l.b16 %v1817
        %v2254 = vunpack.c.l.b16 %v1818
        %v2255 = vunpack.c.l.b16 %v1819
        %v2256 = vunpack.c.l.b16 %v1820
        %v2257 = vunpack.c.l.b16 %v1821
        %v2258 = vunpack.c.l.b16 %v1822
        %v2259 = vunpack.c.l.b16 %v1823
        %v2260 = vunpack.c.l.b16 %v1824
        %v2261 = vunpack.c.l.b16 %v1825
        %v2262 = vunpack.c.l.b16 %v1826
        %v2263 = vunpack.c.l.b16 %v1827
        %v2264 = vunpack.c.l.b16 %v1828
        %v2265 = vunpack.c.l.b16 %v1829
        %v2266 = vunpack.c.l.b16 %v1830
        %v2267 = vunpack.c.l.b16 %v1831
        %v2268 = vunpack.c.l.b16 %v1832
        %v2269 = vunpack.c.l.b16 %v1833
        %v2270 = vunpack.c.l.b16 %v1834
        %v2271 = vunpack.c.l.b16 %v1835
        %v2272 = vunpack.c.l.b16 %v1836
        %v2273 = vunpack.c.l.b16 %v1837
        %v2274 = vunpack.c.l.b16 %v1838
        %v2275 = vunpack.c.l.b16 %v1839
        %v2276 = vunpack.c.l.b16 %v1840
        %v2277 = vunpack.c.l.b16 %v1841
        %v2278 = vunpack.c.l.b16 %v1842
        %v2279 = vunpack.c.l.b16 %v1843
        %v2280 = vunpack.c.l.b16 %v1844
        %v2281 = vunpack.c.l.b16 %v1845
        %v2282 = vunpack.c.l.b16 %v1846
        %v2283 = vunpack.c.l.b16 %v1847
        %v2284 = vunpack.c.l.b16 %v1848
        %v2285 = vunpack.c.l.b16 %v1849
        %v2286 = vunpack.c.l.b16 %v1850
        %v2287 = vunpack.c.l.b16 %v1851
        %v2288 = vunpack.c.l.b16 %v1852
        %v2289 = vunpack.c.l.b16 %v1853
        %v2290 = vunpack.c.l.b16 %v1854
        %v2291 = vunpack.c.l.b16 %v1855
        %v2292 = vunpack.c.l.b16 %v1856
        %v2293 = vunpack.c.l.b16 %v1857
        %v2294 = vunpack.c.l.b16 %v1858
        %v2295 = vunpack.c.l.b16 %v1859
        %v2296 = vunpack.c.l.b16 %v1860
        %v2297 = vunpack.c.l.b16 %v1861
        %v2298 = vunpack.c.l.b16 %v1862
        %v2299 = vunpack.c.l.b16 %v1863
        %v2300 = vunpack.c.l.b16 %v1864
        %v2301 = vunpack.c.l.b16 %v1865
        %v2302 = vunpack.c.l.b16 %v1866
        %v2303 = vunpack.c.l.b16 %v1867
        %v2304 = vunpack.c.l.b16 %v1868
        %v2305 = vunpack.c.l.b16 %v1869
        %v2306 = vunpack.c.l.b16 %v1870
        %v2307 = vunpack.c.l.b16 %v1871
        %v2308 = vunpack.c.l.b16 %v1872
        %v2309 = vunpack.c.l.b16 %v1873
        %v2310 = vpack.c.b16 %v2215, %v2214
        %v2311 = vpack.c.b16 %v2217, %v2216
        %v2312 = vpack.c.b16 %v2219, %v2218
        %v2313 = vpack.c.b16 %v2221, %v2220
        %v2314 = vpack.c.b16 %v2223, %v2222
        %v2315 = vpack.c.b16 %v2225, %v2224
        %v2316 = vpack.c.b16 %v2227, %v2226
        %v2317 = vpack.c.b16 %v2229, %v2228
        %v2318 = vpack.c.b16 %v2231, %v2230
        %v2319 = vpack.c.b16 %v2233, %v2232
        %v2320 = vpack.c.b16 %v2235, %v2234
        %v2321 = vpack.c.b16 %v2237, %v2236
        %v2322 = vpack.c.b16 %v2239, %v2238
        %v2323 = vpack.c.b16 %v2241, %v2240
        %v2324 = vpack.c.b16 %v2243, %v2242
        %v2325 = vpack.c.b16 %v2245, %v2244
        %v2326 = vpack.c.b16 %v2247, %v2246
        %v2327 = vpack.c.b16 %v2249, %v2248
        %v2328 = vpack.c.b16 %v2251, %v2250
        %v2329 = vpack.c.b16 %v2253, %v2252
        %v2330 = vpack.c.b16 %v2255, %v2254
        %v2331 = vpack.c.b16 %v2257, %v2256
        %v2332 = vpack.c.b16 %v2259, %v2258
        %v2333 = vpack.c.b16 %v2261, %v2260
        %v2334 = vpack.c.b16 %v2263, %v2262
        %v2335 = vpack.c.b16 %v2265, %v2264
        %v2336 = vpack.c.b16 %v2267, %v2266
        %v2337 = vpack.c.b16 %v2269, %v2268
        %v2338 = vpack.c.b16 %v2271, %v2270
        %v2339 = vpack.c.b16 %v2273, %v2272
        %v2340 = vpack.c.b16 %v2275, %v2274
        %v2341 = vpack.c.b16 %v2277, %v2276
        %v2342 = vpack.c.b16 %v2279, %v2278
        %v2343 = vpack.c.b16 %v2281, %v2280
        %v2344 = vpack.c.b16 %v2283, %v2282
        %v2345 = vpack.c.b16 %v2285, %v2284
        %v2346 = vpack.c.b16 %v2287, %v2286
        %v2347 = vpack.c.b16 %v2289, %v2288
        %v2348 = vpack.c.b16 %v2291, %v2290
        %v2349 = vpack.c.b16 %v2293, %v2292
        %v2350 = vpack.c.b16 %v2295, %v2294
        %v2351 = vpack.c.b16 %v2297, %v2296
        %v2352 = vpack.c.b16 %v2299, %v2298
        %v2353 = vpack.c.b16 %v2301, %v2300
        %v2354 = vpack.c.b16 %v2303, %v2302
        %v2355 = vpack.c.b16 %v2305, %v2304
        %v2356 = vpack.c.b16 %v2307, %v2306
        %v2357 = vpack.c.b16 %v2309, %v2308
        %2406 = vmatpush.bf16.msra.mxu0 %v2317
        %2407 = vmatpush.bf16.msra.mxu0 %v2316
        %2408 = vmatpush.bf16.msra.mxu0 %v2315
        %2409 = vmatpush.bf16.msra.mxu0 %v2314
        %2410 = vmatpush.bf16.msra.mxu0 %v2313
        %2411 = vmatpush.bf16.msra.mxu0 %v2312
        %2412 = vmatpush.bf16.msra.mxu0 %v2311
        %2413 = vmatpush.bf16.msra.mxu0 %v2310
        %2414 = vmatmul.bf16.gmra.mxu0 %v2022
        %v2415 = vpop.f32.mrf.mxu0
        %v2416 = vadd.f32 %v1876, %v2415
        %v2417 = vpop.f32.mrf.mxu0
        %v2418 = vadd.f32 %v1876, %v2417
        %2419 = vmatmul.bf16.gmra.mxu0 %v2028
        %v2420 = vpop.f32.mrf.mxu0
        %v2421 = vadd.f32 %v1876, %v2420
        %v2422 = vpop.f32.mrf.mxu0
        %v2423 = vadd.f32 %v1876, %v2422
        %2424 = vmatmul.bf16.gmra.mxu0 %v2034
        %v2425 = vpop.f32.mrf.mxu0
        %v2426 = vadd.f32 %v1876, %v2425
        %v2427 = vpop.f32.mrf.mxu0
        %v2428 = vadd.f32 %v1876, %v2427
        %2429 = vmatmul.bf16.gmra.mxu0 %v2040
        %v2430 = vpop.f32.mrf.mxu0
        %v2431 = vadd.f32 %v1876, %v2430
        %v2432 = vpop.f32.mrf.mxu0
        %v2433 = vadd.f32 %v1876, %v2432
        %2434 = vmatmul.bf16.gmra.mxu0 %v2046
        %v2435 = vpop.f32.mrf.mxu0
        %v2436 = vadd.f32 %v1876, %v2435
        %v2437 = vpop.f32.mrf.mxu0
        %v2438 = vadd.f32 %v1876, %v2437
        %2439 = vmatmul.bf16.gmra.mxu0 %v2052
        %v2440 = vpop.f32.mrf.mxu0
        %v2441 = vadd.f32 %v1876, %v2440
        %v2442 = vpop.f32.mrf.mxu0
        %v2443 = vadd.f32 %v1876, %v2442
        %2444 = vmatmul.bf16.gmra.mxu0 %v2058
        %v2445 = vpop.f32.mrf.mxu0
        %v2446 = vadd.f32 %v1876, %v2445
        %v2447 = vpop.f32.mrf.mxu0
        %v2448 = vadd.f32 %v1876, %v2447
        %2449 = vmatmul.bf16.gmra.mxu0 %v2064
        %v2450 = vpop.f32.mrf.mxu0
        %v2451 = vadd.f32 %v1876, %v2450
        %v2452 = vpop.f32.mrf.mxu0
        %v2453 = vadd.f32 %v1876, %v2452
        %2454 = vdwg.mxu0
        %2455 = vmatpush.bf16.msra.mxu0 %v2325
        %2456 = vmatpush.bf16.msra.mxu0 %v2324
        %2457 = vmatpush.bf16.msra.mxu0 %v2323
        %2458 = vmatpush.bf16.msra.mxu0 %v2322
        %2459 = vmatpush.bf16.msra.mxu0 %v2321
        %2460 = vmatpush.bf16.msra.mxu0 %v2320
        %2461 = vmatpush.bf16.msra.mxu0 %v2319
        %2462 = vmatpush.bf16.msra.mxu0 %v2318
        %2463 = vmatmul.bf16.gmra.mxu0 %v2023
        %v2464 = vpop.f32.mrf.mxu0
        %v2465 = vadd.f32 %v2416, %v2464
        %v2466 = vpop.f32.mrf.mxu0
        %v2467 = vadd.f32 %v2418, %v2466
        %2468 = vmatmul.bf16.gmra.mxu0 %v2029
        %v2469 = vpop.f32.mrf.mxu0
        %v2470 = vadd.f32 %v2421, %v2469
        %v2471 = vpop.f32.mrf.mxu0
        %v2472 = vadd.f32 %v2423, %v2471
        %2473 = vmatmul.bf16.gmra.mxu0 %v2035
        %v2474 = vpop.f32.mrf.mxu0
        %v2475 = vadd.f32 %v2426, %v2474
        %v2476 = vpop.f32.mrf.mxu0
        %v2477 = vadd.f32 %v2428, %v2476
        %2478 = vmatmul.bf16.gmra.mxu0 %v2041
        %v2479 = vpop.f32.mrf.mxu0
        %v2480 = vadd.f32 %v2431, %v2479
        %v2481 = vpop.f32.mrf.mxu0
        %v2482 = vadd.f32 %v2433, %v2481
        %2483 = vmatmul.bf16.gmra.mxu0 %v2047
        %v2484 = vpop.f32.mrf.mxu0
        %v2485 = vadd.f32 %v2436, %v2484
        %v2486 = vpop.f32.mrf.mxu0
        %v2487 = vadd.f32 %v2438, %v2486
        %2488 = vmatmul.bf16.gmra.mxu0 %v2053
        %v2489 = vpop.f32.mrf.mxu0
        %v2490 = vadd.f32 %v2441, %v2489
        %v2491 = vpop.f32.mrf.mxu0
        %v2492 = vadd.f32 %v2443, %v2491
        %2493 = vmatmul.bf16.gmra.mxu0 %v2059
        %v2494 = vpop.f32.mrf.mxu0
        %v2495 = vadd.f32 %v2446, %v2494
        %v2496 = vpop.f32.mrf.mxu0
        %v2497 = vadd.f32 %v2448, %v2496
        %2498 = vmatmul.bf16.gmra.mxu0 %v2065
        %v2499 = vpop.f32.mrf.mxu0
        %v2500 = vadd.f32 %v2451, %v2499
        %v2501 = vpop.f32.mrf.mxu0
        %v2502 = vadd.f32 %v2453, %v2501
        %2503 = vdwg.mxu0
        %2504 = vmatpush.bf16.msra.mxu0 %v2333
        %2505 = vmatpush.bf16.msra.mxu0 %v2332
        %2506 = vmatpush.bf16.msra.mxu0 %v2331
        %2507 = vmatpush.bf16.msra.mxu0 %v2330
        %2508 = vmatpush.bf16.msra.mxu0 %v2329
        %2509 = vmatpush.bf16.msra.mxu0 %v2328
        %2510 = vmatpush.bf16.msra.mxu0 %v2327
        %2511 = vmatpush.bf16.msra.mxu0 %v2326
        %2512 = vmatmul.bf16.gmra.mxu0 %v2024
        %v2513 = vpop.f32.mrf.mxu0
        %v2514 = vadd.f32 %v2465, %v2513
        %v2515 = vpop.f32.mrf.mxu0
        %v2516 = vadd.f32 %v2467, %v2515
        %2517 = vmatmul.bf16.gmra.mxu0 %v2030
        %v2518 = vpop.f32.mrf.mxu0
        %v2519 = vadd.f32 %v2470, %v2518
        %v2520 = vpop.f32.mrf.mxu0
        %v2521 = vadd.f32 %v2472, %v2520
        %2522 = vmatmul.bf16.gmra.mxu0 %v2036
        %v2523 = vpop.f32.mrf.mxu0
        %v2524 = vadd.f32 %v2475, %v2523
        %v2525 = vpop.f32.mrf.mxu0
        %v2526 = vadd.f32 %v2477, %v2525
        %2527 = vmatmul.bf16.gmra.mxu0 %v2042
        %v2528 = vpop.f32.mrf.mxu0
        %v2529 = vadd.f32 %v2480, %v2528
        %v2530 = vpop.f32.mrf.mxu0
        %v2531 = vadd.f32 %v2482, %v2530
        %2532 = vmatmul.bf16.gmra.mxu0 %v2048
        %v2533 = vpop.f32.mrf.mxu0
        %v2534 = vadd.f32 %v2485, %v2533
        %v2535 = vpop.f32.mrf.mxu0
        %v2536 = vadd.f32 %v2487, %v2535
        %2537 = vmatmul.bf16.gmra.mxu0 %v2054
        %v2538 = vpop.f32.mrf.mxu0
        %v2539 = vadd.f32 %v2490, %v2538
        %v2540 = vpop.f32.mrf.mxu0
        %v2541 = vadd.f32 %v2492, %v2540
        %2542 = vmatmul.bf16.gmra.mxu0 %v2060
        %v2543 = vpop.f32.mrf.mxu0
        %v2544 = vadd.f32 %v2495, %v2543
        %v2545 = vpop.f32.mrf.mxu0
        %v2546 = vadd.f32 %v2497, %v2545
        %2547 = vmatmul.bf16.gmra.mxu0 %v2066
        %v2548 = vpop.f32.mrf.mxu0
        %v2549 = vadd.f32 %v2500, %v2548
        %v2550 = vpop.f32.mrf.mxu0
        %v2551 = vadd.f32 %v2502, %v2550
        %2552 = vdwg.mxu0
        %2553 = vmatpush.bf16.msra.mxu0 %v2341
        %2554 = vmatpush.bf16.msra.mxu0 %v2340
        %2555 = vmatpush.bf16.msra.mxu0 %v2339
        %2556 = vmatpush.bf16.msra.mxu0 %v2338
        %2557 = vmatpush.bf16.msra.mxu0 %v2337
        %2558 = vmatpush.bf16.msra.mxu0 %v2336
        %2559 = vmatpush.bf16.msra.mxu0 %v2335
        %2560 = vmatpush.bf16.msra.mxu0 %v2334
        %2561 = vmatmul.bf16.gmra.mxu0 %v2025
        %v2562 = vpop.f32.mrf.mxu0
        %v2563 = vadd.f32 %v2514, %v2562
        %v2564 = vpop.f32.mrf.mxu0
        %v2565 = vadd.f32 %v2516, %v2564
        %2566 = vmatmul.bf16.gmra.mxu0 %v2031
        %v2567 = vpop.f32.mrf.mxu0
        %v2568 = vadd.f32 %v2519, %v2567
        %v2569 = vpop.f32.mrf.mxu0
        %v2570 = vadd.f32 %v2521, %v2569
        %2571 = vmatmul.bf16.gmra.mxu0 %v2037
        %v2572 = vpop.f32.mrf.mxu0
        %v2573 = vadd.f32 %v2524, %v2572
        %v2574 = vpop.f32.mrf.mxu0
        %v2575 = vadd.f32 %v2526, %v2574
        %2576 = vmatmul.bf16.gmra.mxu0 %v2043
        %v2577 = vpop.f32.mrf.mxu0
        %v2578 = vadd.f32 %v2529, %v2577
        %v2579 = vpop.f32.mrf.mxu0
        %v2580 = vadd.f32 %v2531, %v2579
        %2581 = vmatmul.bf16.gmra.mxu0 %v2049
        %v2582 = vpop.f32.mrf.mxu0
        %v2583 = vadd.f32 %v2534, %v2582
        %v2584 = vpop.f32.mrf.mxu0
        %v2585 = vadd.f32 %v2536, %v2584
        %2586 = vmatmul.bf16.gmra.mxu0 %v2055
        %v2587 = vpop.f32.mrf.mxu0
        %v2588 = vadd.f32 %v2539, %v2587
        %v2589 = vpop.f32.mrf.mxu0
        %v2590 = vadd.f32 %v2541, %v2589
        %2591 = vmatmul.bf16.gmra.mxu0 %v2061
        %v2592 = vpop.f32.mrf.mxu0
        %v2593 = vadd.f32 %v2544, %v2592
        %v2594 = vpop.f32.mrf.mxu0
        %v2595 = vadd.f32 %v2546, %v2594
        %2596 = vmatmul.bf16.gmra.mxu0 %v2067
        %v2597 = vpop.f32.mrf.mxu0
        %v2598 = vadd.f32 %v2549, %v2597
        %v2599 = vpop.f32.mrf.mxu0
        %v2600 = vadd.f32 %v2551, %v2599
        %2601 = vdwg.mxu0
        %2602 = vmatpush.bf16.msra.mxu0 %v2349
        %2603 = vmatpush.bf16.msra.mxu0 %v2348
        %2604 = vmatpush.bf16.msra.mxu0 %v2347
        %2605 = vmatpush.bf16.msra.mxu0 %v2346
        %2606 = vmatpush.bf16.msra.mxu0 %v2345
        %2607 = vmatpush.bf16.msra.mxu0 %v2344
        %2608 = vmatpush.bf16.msra.mxu0 %v2343
        %2609 = vmatpush.bf16.msra.mxu0 %v2342
        %2610 = vmatmul.bf16.gmra.mxu0 %v2026
        %v2611 = vpop.f32.mrf.mxu0
        %v2612 = vadd.f32 %v2563, %v2611
        %v2613 = vpop.f32.mrf.mxu0
        %v2614 = vadd.f32 %v2565, %v2613
        %2615 = vmatmul.bf16.gmra.mxu0 %v2032
        %v2616 = vpop.f32.mrf.mxu0
        %v2617 = vadd.f32 %v2568, %v2616
        %v2618 = vpop.f32.mrf.mxu0
        %v2619 = vadd.f32 %v2570, %v2618
        %2620 = vmatmul.bf16.gmra.mxu0 %v2038
        %v2621 = vpop.f32.mrf.mxu0
        %v2622 = vadd.f32 %v2573, %v2621
        %v2623 = vpop.f32.mrf.mxu0
        %v2624 = vadd.f32 %v2575, %v2623
        %2625 = vmatmul.bf16.gmra.mxu0 %v2044
        %v2626 = vpop.f32.mrf.mxu0
        %v2627 = vadd.f32 %v2578, %v2626
        %v2628 = vpop.f32.mrf.mxu0
        %v2629 = vadd.f32 %v2580, %v2628
        %2630 = vmatmul.bf16.gmra.mxu0 %v2050
        %v2631 = vpop.f32.mrf.mxu0
        %v2632 = vadd.f32 %v2583, %v2631
        %v2633 = vpop.f32.mrf.mxu0
        %v2634 = vadd.f32 %v2585, %v2633
        %2635 = vmatmul.bf16.gmra.mxu0 %v2056
        %v2636 = vpop.f32.mrf.mxu0
        %v2637 = vadd.f32 %v2588, %v2636
        %v2638 = vpop.f32.mrf.mxu0
        %v2639 = vadd.f32 %v2590, %v2638
        %2640 = vmatmul.bf16.gmra.mxu0 %v2062
        %v2641 = vpop.f32.mrf.mxu0
        %v2642 = vadd.f32 %v2593, %v2641
        %v2643 = vpop.f32.mrf.mxu0
        %v2644 = vadd.f32 %v2595, %v2643
        %2645 = vmatmul.bf16.gmra.mxu0 %v2068
        %v2646 = vpop.f32.mrf.mxu0
        %v2647 = vadd.f32 %v2598, %v2646
        %v2648 = vpop.f32.mrf.mxu0
        %v2649 = vadd.f32 %v2600, %v2648
        %2650 = vdwg.mxu0
        %2651 = vmatpush.bf16.msra.mxu0 %v2357
        %2652 = vmatpush.bf16.msra.mxu0 %v2356
        %2653 = vmatpush.bf16.msra.mxu0 %v2355
        %2654 = vmatpush.bf16.msra.mxu0 %v2354
        %2655 = vmatpush.bf16.msra.mxu0 %v2353
        %2656 = vmatpush.bf16.msra.mxu0 %v2352
        %2657 = vmatpush.bf16.msra.mxu0 %v2351
        %2658 = vmatpush.bf16.msra.mxu0 %v2350
        %2659 = vmatmul.bf16.gmra.mxu0 %v2027
        %v2660 = vpop.f32.mrf.mxu0
        %v2661 = vadd.f32 %v2612, %v2660
        %v2662 = vpop.f32.mrf.mxu0
        %v2663 = vadd.f32 %v2614, %v2662
        %2664 = vmatmul.bf16.gmra.mxu0 %v2033
        %v2665 = vpop.f32.mrf.mxu0
        %v2666 = vadd.f32 %v2617, %v2665
        %v2667 = vpop.f32.mrf.mxu0
        %v2668 = vadd.f32 %v2619, %v2667
        %2669 = vmatmul.bf16.gmra.mxu0 %v2039
        %v2670 = vpop.f32.mrf.mxu0
        %v2671 = vadd.f32 %v2622, %v2670
        %v2672 = vpop.f32.mrf.mxu0
        %v2673 = vadd.f32 %v2624, %v2672
        %2674 = vmatmul.bf16.gmra.mxu0 %v2045
        %v2675 = vpop.f32.mrf.mxu0
        %v2676 = vadd.f32 %v2627, %v2675
        %v2677 = vpop.f32.mrf.mxu0
        %v2678 = vadd.f32 %v2629, %v2677
        %2679 = vmatmul.bf16.gmra.mxu0 %v2051
        %v2680 = vpop.f32.mrf.mxu0
        %v2681 = vadd.f32 %v2632, %v2680
        %v2682 = vpop.f32.mrf.mxu0
        %v2683 = vadd.f32 %v2634, %v2682
        %2684 = vmatmul.bf16.gmra.mxu0 %v2057
        %v2685 = vpop.f32.mrf.mxu0
        %v2686 = vadd.f32 %v2637, %v2685
        %v2687 = vpop.f32.mrf.mxu0
        %v2688 = vadd.f32 %v2639, %v2687
        %2689 = vmatmul.bf16.gmra.mxu0 %v2063
        %v2690 = vpop.f32.mrf.mxu0
        %v2691 = vadd.f32 %v2642, %v2690
        %v2692 = vpop.f32.mrf.mxu0
        %v2693 = vadd.f32 %v2644, %v2692
        %2694 = vmatmul.bf16.gmra.mxu0 %v2069
        %v2695 = vpop.f32.mrf.mxu0
        %v2696 = vadd.f32 %v2647, %v2695
        %v2697 = vpop.f32.mrf.mxu0
        %v2698 = vadd.f32 %v2649, %v2697
        %2699 = vdwg.mxu0
        %v2732 = vunpack.c.l.b16 %v1701
        %v2733 = vunpack.c.h.b16 %v1701
        %v2734 = vunpack.c.l.b16 %v1702
        %v2735 = vunpack.c.h.b16 %v1702
        %v2736 = vunpack.c.l.b16 %v1706
        %v2737 = vunpack.c.h.b16 %v1706
        %v2738 = vunpack.c.l.b16 %v1707
        %v2739 = vunpack.c.h.b16 %v1707
        %v2740 = vunpack.c.l.b16 %v1711
        %v2741 = vunpack.c.h.b16 %v1711
        %v2742 = vunpack.c.l.b16 %v1712
        %v2743 = vunpack.c.h.b16 %v1712
        %v2744 = vunpack.c.l.b16 %v1716
        %v2745 = vunpack.c.h.b16 %v1716
        %v2746 = vunpack.c.l.b16 %v1717
        %v2747 = vunpack.c.h.b16 %v1717
        %v2748 = vunpack.c.l.b16 %v1721
        %v2749 = vunpack.c.h.b16 %v1721
        %v2750 = vunpack.c.l.b16 %v1722
        %v2751 = vunpack.c.h.b16 %v1722
        %v2752 = vunpack.c.l.b16 %v1726
        %v2753 = vunpack.c.h.b16 %v1726
        %v2754 = vunpack.c.l.b16 %v1727
        %v2755 = vunpack.c.h.b16 %v1727
        %v2756 = vunpack.c.l.b16 %v1731
        %v2757 = vunpack.c.h.b16 %v1731
        %v2758 = vunpack.c.l.b16 %v1732
        %v2759 = vunpack.c.h.b16 %v1732
        %v2760 = vunpack.c.l.b16 %v1736
        %v2761 = vunpack.c.h.b16 %v1736
        %v2762 = vunpack.c.l.b16 %v1737
        %v2763 = vunpack.c.h.b16 %v1737
        %v2764 = vunpack.c.l.b16 %v1741
        %v2765 = vunpack.c.h.b16 %v1741
        %v2766 = vunpack.c.l.b16 %v1742
        %v2767 = vunpack.c.h.b16 %v1742
        %v2768 = vunpack.c.l.b16 %v1746
        %v2769 = vunpack.c.h.b16 %v1746
        %v2770 = vunpack.c.l.b16 %v1747
        %v2771 = vunpack.c.h.b16 %v1747
        %v2772 = vunpack.c.l.b16 %v1751
        %v2773 = vunpack.c.h.b16 %v1751
        %v2774 = vunpack.c.l.b16 %v1752
        %v2775 = vunpack.c.h.b16 %v1752
        %v2776 = vunpack.c.l.b16 %v1756
        %v2777 = vunpack.c.h.b16 %v1756
        %v2778 = vunpack.c.l.b16 %v1757
        %v2779 = vunpack.c.h.b16 %v1757
        %v2780 = vunpack.c.l.b16 %v1761
        %v2781 = vunpack.c.h.b16 %v1761
        %v2782 = vunpack.c.l.b16 %v1762
        %v2783 = vunpack.c.h.b16 %v1762
        %v2784 = vunpack.c.l.b16 %v1766
        %v2785 = vunpack.c.h.b16 %v1766
        %v2786 = vunpack.c.l.b16 %v1767
        %v2787 = vunpack.c.h.b16 %v1767
        %v2788 = vunpack.c.l.b16 %v1771
        %v2789 = vunpack.c.h.b16 %v1771
        %v2790 = vunpack.c.l.b16 %v1772
        %v2791 = vunpack.c.h.b16 %v1772
        %v2792 = vunpack.c.l.b16 %v1776
        %v2793 = vunpack.c.h.b16 %v1776
        %v2794 = vunpack.c.l.b16 %v1777
        %v2795 = vunpack.c.h.b16 %v1777
        %v2796 = vpack.c.b16 %v2736, %v2732
        %v2797 = vpack.c.b16 %v2737, %v2733
        %v2798 = vpack.c.b16 %v2738, %v2734
        %v2799 = vpack.c.b16 %v2739, %v2735
        %v2800 = vpack.c.b16 %v2744, %v2740
        %v2801 = vpack.c.b16 %v2745, %v2741
        %v2802 = vpack.c.b16 %v2746, %v2742
        %v2803 = vpack.c.b16 %v2747, %v2743
        %v2804 = vpack.c.b16 %v2752, %v2748
        %v2805 = vpack.c.b16 %v2753, %v2749
        %v2806 = vpack.c.b16 %v2754, %v2750
        %v2807 = vpack.c.b16 %v2755, %v2751
        %v2808 = vpack.c.b16 %v2760, %v2756
        %v2809 = vpack.c.b16 %v2761, %v2757
        %v2810 = vpack.c.b16 %v2762, %v2758
        %v2811 = vpack.c.b16 %v2763, %v2759
        %v2812 = vpack.c.b16 %v2768, %v2764
        %v2813 = vpack.c.b16 %v2769, %v2765
        %v2814 = vpack.c.b16 %v2770, %v2766
        %v2815 = vpack.c.b16 %v2771, %v2767
        %v2816 = vpack.c.b16 %v2776, %v2772
        %v2817 = vpack.c.b16 %v2777, %v2773
        %v2818 = vpack.c.b16 %v2778, %v2774
        %v2819 = vpack.c.b16 %v2779, %v2775
        %v2820 = vpack.c.b16 %v2784, %v2780
        %v2821 = vpack.c.b16 %v2785, %v2781
        %v2822 = vpack.c.b16 %v2786, %v2782
        %v2823 = vpack.c.b16 %v2787, %v2783
        %v2824 = vpack.c.b16 %v2792, %v2788
        %v2825 = vpack.c.b16 %v2793, %v2789
        %v2826 = vpack.c.b16 %v2794, %v2790
        %v2827 = vpack.c.b16 %v2795, %v2791
        %2860 = vmatpush.bf16.msra.mxu0 %v2317
        %2861 = vmatpush.bf16.msra.mxu0 %v2316
        %2862 = vmatpush.bf16.msra.mxu0 %v2315
        %2863 = vmatpush.bf16.msra.mxu0 %v2314
        %2864 = vmatpush.bf16.msra.mxu0 %v2313
        %2865 = vmatpush.bf16.msra.mxu0 %v2312
        %2866 = vmatpush.bf16.msra.mxu0 %v2311
        %2867 = vmatpush.bf16.msra.mxu0 %v2310
        %2868 = vmatmul.bf16.gmra.mxu0 %v2026
        %v2869 = vpop.f32.mrf.mxu0
        %v2870 = vadd.f32 %v1876, %v2869
        %v2871 = vpop.f32.mrf.mxu0
        %v2872 = vadd.f32 %v1876, %v2871
        %2873 = vmatmul.bf16.gmra.mxu0 %v2032
        %v2874 = vpop.f32.mrf.mxu0
        %v2875 = vadd.f32 %v1876, %v2874
        %v2876 = vpop.f32.mrf.mxu0
        %v2877 = vadd.f32 %v1876, %v2876
        %2878 = vmatmul.bf16.gmra.mxu0 %v2038
        %v2879 = vpop.f32.mrf.mxu0
        %v2880 = vadd.f32 %v1876, %v2879
        %v2881 = vpop.f32.mrf.mxu0
        %v2882 = vadd.f32 %v1876, %v2881
        %2883 = vmatmul.bf16.gmra.mxu0 %v2044
        %v2884 = vpop.f32.mrf.mxu0
        %v2885 = vadd.f32 %v1876, %v2884
        %v2886 = vpop.f32.mrf.mxu0
        %v2887 = vadd.f32 %v1876, %v2886
        %2888 = vmatmul.bf16.gmra.mxu0 %v2050
        %v2889 = vpop.f32.mrf.mxu0
        %v2890 = vadd.f32 %v1876, %v2889
        %v2891 = vpop.f32.mrf.mxu0
        %v2892 = vadd.f32 %v1876, %v2891
        %2893 = vmatmul.bf16.gmra.mxu0 %v2056
        %v2894 = vpop.f32.mrf.mxu0
        %v2895 = vadd.f32 %v1876, %v2894
        %v2896 = vpop.f32.mrf.mxu0
        %v2897 = vadd.f32 %v1876, %v2896
        %2898 = vmatmul.bf16.gmra.mxu0 %v2062
        %v2899 = vpop.f32.mrf.mxu0
        %v2900 = vadd.f32 %v1876, %v2899
        %v2901 = vpop.f32.mrf.mxu0
        %v2902 = vadd.f32 %v1876, %v2901
        %2903 = vmatmul.bf16.gmra.mxu0 %v2068
        %v2904 = vpop.f32.mrf.mxu0
        %v2905 = vadd.f32 %v1876, %v2904
        %v2906 = vpop.f32.mrf.mxu0
        %v2907 = vadd.f32 %v1876, %v2906
        %2908 = vdwg.mxu0
        %2909 = vmatpush.bf16.msra.mxu0 %v2325
        %2910 = vmatpush.bf16.msra.mxu0 %v2324
        %2911 = vmatpush.bf16.msra.mxu0 %v2323
        %2912 = vmatpush.bf16.msra.mxu0 %v2322
        %2913 = vmatpush.bf16.msra.mxu0 %v2321
        %2914 = vmatpush.bf16.msra.mxu0 %v2320
        %2915 = vmatpush.bf16.msra.mxu0 %v2319
        %2916 = vmatpush.bf16.msra.mxu0 %v2318
        %2917 = vmatmul.bf16.gmra.mxu0 %v2027
        %v2918 = vpop.f32.mrf.mxu0
        %v2919 = vadd.f32 %v2870, %v2918
        %v2920 = vpop.f32.mrf.mxu0
        %v2921 = vadd.f32 %v2872, %v2920
        %2922 = vmatmul.bf16.gmra.mxu0 %v2033
        %v2923 = vpop.f32.mrf.mxu0
        %v2924 = vadd.f32 %v2875, %v2923
        %v2925 = vpop.f32.mrf.mxu0
        %v2926 = vadd.f32 %v2877, %v2925
        %2927 = vmatmul.bf16.gmra.mxu0 %v2039
        %v2928 = vpop.f32.mrf.mxu0
        %v2929 = vadd.f32 %v2880, %v2928
        %v2930 = vpop.f32.mrf.mxu0
        %v2931 = vadd.f32 %v2882, %v2930
        %2932 = vmatmul.bf16.gmra.mxu0 %v2045
        %v2933 = vpop.f32.mrf.mxu0
        %v2934 = vadd.f32 %v2885, %v2933
        %v2935 = vpop.f32.mrf.mxu0
        %v2936 = vadd.f32 %v2887, %v2935
        %2937 = vmatmul.bf16.gmra.mxu0 %v2051
        %v2938 = vpop.f32.mrf.mxu0
        %v2939 = vadd.f32 %v2890, %v2938
        %v2940 = vpop.f32.mrf.mxu0
        %v2941 = vadd.f32 %v2892, %v2940
        %2942 = vmatmul.bf16.gmra.mxu0 %v2057
        %v2943 = vpop.f32.mrf.mxu0
        %v2944 = vadd.f32 %v2895, %v2943
        %v2945 = vpop.f32.mrf.mxu0
        %v2946 = vadd.f32 %v2897, %v2945
        %2947 = vmatmul.bf16.gmra.mxu0 %v2063
        %v2948 = vpop.f32.mrf.mxu0
        %v2949 = vadd.f32 %v2900, %v2948
        %v2950 = vpop.f32.mrf.mxu0
        %v2951 = vadd.f32 %v2902, %v2950
        %2952 = vmatmul.bf16.gmra.mxu0 %v2069
        %v2953 = vpop.f32.mrf.mxu0
        %v2954 = vadd.f32 %v2905, %v2953
        %v2955 = vpop.f32.mrf.mxu0
        %v2956 = vadd.f32 %v2907, %v2955
        %2957 = vdwg.mxu0
        %2958 = vmatpush.bf16.msra.mxu0 %v2333
        %2959 = vmatpush.bf16.msra.mxu0 %v2332
        %2960 = vmatpush.bf16.msra.mxu0 %v2331
        %2961 = vmatpush.bf16.msra.mxu0 %v2330
        %2962 = vmatpush.bf16.msra.mxu0 %v2329
        %2963 = vmatpush.bf16.msra.mxu0 %v2328
        %2964 = vmatpush.bf16.msra.mxu0 %v2327
        %2965 = vmatpush.bf16.msra.mxu0 %v2326
        %2966 = vmatmul.bf16.gmra.mxu0 %v2796
        %v2967 = vpop.f32.mrf.mxu0
        %v2968 = vadd.f32 %v2919, %v2967
        %v2969 = vpop.f32.mrf.mxu0
        %v2970 = vadd.f32 %v2921, %v2969
        %2971 = vmatmul.bf16.gmra.mxu0 %v2800
        %v2972 = vpop.f32.mrf.mxu0
        %v2973 = vadd.f32 %v2924, %v2972
        %v2974 = vpop.f32.mrf.mxu0
        %v2975 = vadd.f32 %v2926, %v2974
        %2976 = vmatmul.bf16.gmra.mxu0 %v2804
        %v2977 = vpop.f32.mrf.mxu0
        %v2978 = vadd.f32 %v2929, %v2977
        %v2979 = vpop.f32.mrf.mxu0
        %v2980 = vadd.f32 %v2931, %v2979
        %2981 = vmatmul.bf16.gmra.mxu0 %v2808
        %v2982 = vpop.f32.mrf.mxu0
        %v2983 = vadd.f32 %v2934, %v2982
        %v2984 = vpop.f32.mrf.mxu0
        %v2985 = vadd.f32 %v2936, %v2984
        %2986 = vmatmul.bf16.gmra.mxu0 %v2812
        %v2987 = vpop.f32.mrf.mxu0
        %v2988 = vadd.f32 %v2939, %v2987
        %v2989 = vpop.f32.mrf.mxu0
        %v2990 = vadd.f32 %v2941, %v2989
        %2991 = vmatmul.bf16.gmra.mxu0 %v2816
        %v2992 = vpop.f32.mrf.mxu0
        %v2993 = vadd.f32 %v2944, %v2992
        %v2994 = vpop.f32.mrf.mxu0
        %v2995 = vadd.f32 %v2946, %v2994
        %2996 = vmatmul.bf16.gmra.mxu0 %v2820
        %v2997 = vpop.f32.mrf.mxu0
        %v2998 = vadd.f32 %v2949, %v2997
        %v2999 = vpop.f32.mrf.mxu0
        %v3000 = vadd.f32 %v2951, %v2999
        %3001 = vmatmul.bf16.gmra.mxu0 %v2824
        %v3002 = vpop.f32.mrf.mxu0
        %v3003 = vadd.f32 %v2954, %v3002
        %v3004 = vpop.f32.mrf.mxu0
        %v3005 = vadd.f32 %v2956, %v3004
        %3006 = vdwg.mxu0
        %3007 = vmatpush.bf16.msra.mxu0 %v2341
        %3008 = vmatpush.bf16.msra.mxu0 %v2340
        %3009 = vmatpush.bf16.msra.mxu0 %v2339
        %3010 = vmatpush.bf16.msra.mxu0 %v2338
        %3011 = vmatpush.bf16.msra.mxu0 %v2337
        %3012 = vmatpush.bf16.msra.mxu0 %v2336
        %3013 = vmatpush.bf16.msra.mxu0 %v2335
        %3014 = vmatpush.bf16.msra.mxu0 %v2334
        %3015 = vmatmul.bf16.gmra.mxu0 %v2797
        %v3016 = vpop.f32.mrf.mxu0
        %v3017 = vadd.f32 %v2968, %v3016
        %v3018 = vpop.f32.mrf.mxu0
        %v3019 = vadd.f32 %v2970, %v3018
        %3020 = vmatmul.bf16.gmra.mxu0 %v2801
        %v3021 = vpop.f32.mrf.mxu0
        %v3022 = vadd.f32 %v2973, %v3021
        %v3023 = vpop.f32.mrf.mxu0
        %v3024 = vadd.f32 %v2975, %v3023
        %3025 = vmatmul.bf16.gmra.mxu0 %v2805
        %v3026 = vpop.f32.mrf.mxu0
        %v3027 = vadd.f32 %v2978, %v3026
        %v3028 = vpop.f32.mrf.mxu0
        %v3029 = vadd.f32 %v2980, %v3028
        %3030 = vmatmul.bf16.gmra.mxu0 %v2809
        %v3031 = vpop.f32.mrf.mxu0
        %v3032 = vadd.f32 %v2983, %v3031
        %v3033 = vpop.f32.mrf.mxu0
        %v3034 = vadd.f32 %v2985, %v3033
        %3035 = vmatmul.bf16.gmra.mxu0 %v2813
        %v3036 = vpop.f32.mrf.mxu0
        %v3037 = vadd.f32 %v2988, %v3036
        %v3038 = vpop.f32.mrf.mxu0
        %v3039 = vadd.f32 %v2990, %v3038
        %3040 = vmatmul.bf16.gmra.mxu0 %v2817
        %v3041 = vpop.f32.mrf.mxu0
        %v3042 = vadd.f32 %v2993, %v3041
        %v3043 = vpop.f32.mrf.mxu0
        %v3044 = vadd.f32 %v2995, %v3043
        %3045 = vmatmul.bf16.gmra.mxu0 %v2821
        %v3046 = vpop.f32.mrf.mxu0
        %v3047 = vadd.f32 %v2998, %v3046
        %v3048 = vpop.f32.mrf.mxu0
        %v3049 = vadd.f32 %v3000, %v3048
        %3050 = vmatmul.bf16.gmra.mxu0 %v2825
        %v3051 = vpop.f32.mrf.mxu0
        %v3052 = vadd.f32 %v3003, %v3051
        %v3053 = vpop.f32.mrf.mxu0
        %v3054 = vadd.f32 %v3005, %v3053
        %3055 = vdwg.mxu0
        %3056 = vmatpush.bf16.msra.mxu0 %v2349
        %3057 = vmatpush.bf16.msra.mxu0 %v2348
        %3058 = vmatpush.bf16.msra.mxu0 %v2347
        %3059 = vmatpush.bf16.msra.mxu0 %v2346
        %3060 = vmatpush.bf16.msra.mxu0 %v2345
        %3061 = vmatpush.bf16.msra.mxu0 %v2344
        %3062 = vmatpush.bf16.msra.mxu0 %v2343
        %3063 = vmatpush.bf16.msra.mxu0 %v2342
        %3064 = vmatmul.bf16.gmra.mxu0 %v2798
        %v3065 = vpop.f32.mrf.mxu0
        %v3066 = vadd.f32 %v3017, %v3065
        %v3067 = vpop.f32.mrf.mxu0
        %v3068 = vadd.f32 %v3019, %v3067
        %3069 = vmatmul.bf16.gmra.mxu0 %v2802
        %v3070 = vpop.f32.mrf.mxu0
        %v3071 = vadd.f32 %v3022, %v3070
        %v3072 = vpop.f32.mrf.mxu0
        %v3073 = vadd.f32 %v3024, %v3072
        %3074 = vmatmul.bf16.gmra.mxu0 %v2806
        %v3075 = vpop.f32.mrf.mxu0
        %v3076 = vadd.f32 %v3027, %v3075
        %v3077 = vpop.f32.mrf.mxu0
        %v3078 = vadd.f32 %v3029, %v3077
        %3079 = vmatmul.bf16.gmra.mxu0 %v2810
        %v3080 = vpop.f32.mrf.mxu0
        %v3081 = vadd.f32 %v3032, %v3080
        %v3082 = vpop.f32.mrf.mxu0
        %v3083 = vadd.f32 %v3034, %v3082
        %3084 = vmatmul.bf16.gmra.mxu0 %v2814
        %v3085 = vpop.f32.mrf.mxu0
        %v3086 = vadd.f32 %v3037, %v3085
        %v3087 = vpop.f32.mrf.mxu0
        %v3088 = vadd.f32 %v3039, %v3087
        %3089 = vmatmul.bf16.gmra.mxu0 %v2818
        %v3090 = vpop.f32.mrf.mxu0
        %v3091 = vadd.f32 %v3042, %v3090
        %v3092 = vpop.f32.mrf.mxu0
        %v3093 = vadd.f32 %v3044, %v3092
        %3094 = vmatmul.bf16.gmra.mxu0 %v2822
        %v3095 = vpop.f32.mrf.mxu0
        %v3096 = vadd.f32 %v3047, %v3095
        %v3097 = vpop.f32.mrf.mxu0
        %v3098 = vadd.f32 %v3049, %v3097
        %3099 = vmatmul.bf16.gmra.mxu0 %v2826
        %v3100 = vpop.f32.mrf.mxu0
        %v3101 = vadd.f32 %v3052, %v3100
        %v3102 = vpop.f32.mrf.mxu0
        %v3103 = vadd.f32 %v3054, %v3102
        %3104 = vdwg.mxu0
        %3105 = vmatpush.bf16.msra.mxu0 %v2357
        %3106 = vmatpush.bf16.msra.mxu0 %v2356
        %3107 = vmatpush.bf16.msra.mxu0 %v2355
        %3108 = vmatpush.bf16.msra.mxu0 %v2354
        %3109 = vmatpush.bf16.msra.mxu0 %v2353
        %3110 = vmatpush.bf16.msra.mxu0 %v2352
        %3111 = vmatpush.bf16.msra.mxu0 %v2351
        %3112 = vmatpush.bf16.msra.mxu0 %v2350
        %3113 = vmatmul.bf16.gmra.mxu0 %v2799
        %v3114 = vpop.f32.mrf.mxu0
        %v3115 = vadd.f32 %v3066, %v3114
        %v3116 = vpop.f32.mrf.mxu0
        %v3117 = vadd.f32 %v3068, %v3116
        %3118 = vmatmul.bf16.gmra.mxu0 %v2803
        %v3119 = vpop.f32.mrf.mxu0
        %v3120 = vadd.f32 %v3071, %v3119
        %v3121 = vpop.f32.mrf.mxu0
        %v3122 = vadd.f32 %v3073, %v3121
        %3123 = vmatmul.bf16.gmra.mxu0 %v2807
        %v3124 = vpop.f32.mrf.mxu0
        %v3125 = vadd.f32 %v3076, %v3124
        %v3126 = vpop.f32.mrf.mxu0
        %v3127 = vadd.f32 %v3078, %v3126
        %3128 = vmatmul.bf16.gmra.mxu0 %v2811
        %v3129 = vpop.f32.mrf.mxu0
        %v3130 = vadd.f32 %v3081, %v3129
        %v3131 = vpop.f32.mrf.mxu0
        %v3132 = vadd.f32 %v3083, %v3131
        %3133 = vmatmul.bf16.gmra.mxu0 %v2815
        %v3134 = vpop.f32.mrf.mxu0
        %v3135 = vadd.f32 %v3086, %v3134
        %v3136 = vpop.f32.mrf.mxu0
        %v3137 = vadd.f32 %v3088, %v3136
        %3138 = vmatmul.bf16.gmra.mxu0 %v2819
        %v3139 = vpop.f32.mrf.mxu0
        %v3140 = vadd.f32 %v3091, %v3139
        %v3141 = vpop.f32.mrf.mxu0
        %v3142 = vadd.f32 %v3093, %v3141
        %3143 = vmatmul.bf16.gmra.mxu0 %v2823
        %v3144 = vpop.f32.mrf.mxu0
        %v3145 = vadd.f32 %v3096, %v3144
        %v3146 = vpop.f32.mrf.mxu0
        %v3147 = vadd.f32 %v3098, %v3146
        %3148 = vmatmul.bf16.gmra.mxu0 %v2827
        %v3149 = vpop.f32.mrf.mxu0
        %v3150 = vadd.f32 %v3101, %v3149
        %v3151 = vpop.f32.mrf.mxu0
        %v3152 = vadd.f32 %v3103, %v3151
        %3153 = vdwg.mxu0
        %v3154 = vmul.f32 %v2661, 0.5
        %v3155 = vmul.f32 %v2663, 0.5
        %v3156 = vmul.f32 %v2666, 0.5
        %v3157 = vmul.f32 %v2668, 0.5
        %v3158 = vmul.f32 %v2671, 0.5
        %v3159 = vmul.f32 %v2673, 0.5
        %v3160 = vmul.f32 %v2676, 0.5
        %v3161 = vmul.f32 %v2678, 0.5
        %v3162 = vmul.f32 %v2681, 0.5
        %v3163 = vmul.f32 %v2683, 0.5
        %v3164 = vmul.f32 %v2686, 0.5
        %v3165 = vmul.f32 %v2688, 0.5
        %v3166 = vmul.f32 %v2691, 0.5
        %v3167 = vmul.f32 %v2693, 0.5
        %v3168 = vmul.f32 %v2696, 0.5
        %v3169 = vmul.f32 %v2698, 0.5
        %v3170 = vtanh.pop %v3154
        %v3171 = vtanh.pop %v3155
        %v3172 = vtanh.pop %v3156
        %v3173 = vtanh.pop %v3157
        %v3174 = vtanh.pop %v3158
        %v3175 = vtanh.pop %v3159
        %v3176 = vtanh.pop %v3160
        %v3177 = vtanh.pop %v3161
        %v3178 = vtanh.pop %v3162
        %v3179 = vtanh.pop %v3163
        %v3180 = vtanh.pop %v3164
        %v3181 = vtanh.pop %v3165
        %v3182 = vtanh.pop %v3166
        %v3183 = vtanh.pop %v3167
        %v3184 = vtanh.pop %v3168
        %v3185 = vtanh.pop %v3169
        %v3186 = vmul.f32 %v3170, 0.5
        %v3187 = vmul.f32 %v3171, 0.5
        %v3188 = vmul.f32 %v3172, 0.5
        %v3189 = vmul.f32 %v3173, 0.5
        %v3190 = vmul.f32 %v3174, 0.5
        %v3191 = vmul.f32 %v3175, 0.5
        %v3192 = vmul.f32 %v3176, 0.5
        %v3193 = vmul.f32 %v3177, 0.5
        %v3194 = vmul.f32 %v3178, 0.5
        %v3195 = vmul.f32 %v3179, 0.5
        %v3196 = vmul.f32 %v3180, 0.5
        %v3197 = vmul.f32 %v3181, 0.5
        %v3198 = vmul.f32 %v3182, 0.5
        %v3199 = vmul.f32 %v3183, 0.5
        %v3200 = vmul.f32 %v3184, 0.5
        %v3201 = vmul.f32 %v3185, 0.5
        %v3202 = vadd.f32 %v3186, 0.5
        %v3203 = vadd.f32 %v3187, 0.5
        %v3204 = vadd.f32 %v3188, 0.5
        %v3205 = vadd.f32 %v3189, 0.5
        %v3206 = vadd.f32 %v3190, 0.5
        %v3207 = vadd.f32 %v3191, 0.5
        %v3208 = vadd.f32 %v3192, 0.5
        %v3209 = vadd.f32 %v3193, 0.5
        %v3210 = vadd.f32 %v3194, 0.5
        %v3211 = vadd.f32 %v3195, 0.5
        %v3212 = vadd.f32 %v3196, 0.5
        %v3213 = vadd.f32 %v3197, 0.5
        %v3214 = vadd.f32 %v3198, 0.5
        %v3215 = vadd.f32 %v3199, 0.5
        %v3216 = vadd.f32 %v3200, 0.5
        %v3217 = vadd.f32 %v3201, 0.5
        %v3218 = vpack.c.bf16 %v3202, %v3202
        %v3219 = vpack.c.bf16 %v3203, %v3203
        %v3220 = vpack.c.bf16 %v3204, %v3204
        %v3221 = vpack.c.bf16 %v3205, %v3205
        %v3222 = vpack.c.bf16 %v3206, %v3206
        %v3223 = vpack.c.bf16 %v3207, %v3207
        %v3224 = vpack.c.bf16 %v3208, %v3208
        %v3225 = vpack.c.bf16 %v3209, %v3209
        %v3226 = vpack.c.bf16 %v3210, %v3210
        %v3227 = vpack.c.bf16 %v3211, %v3211
        %v3228 = vpack.c.bf16 %v3212, %v3212
        %v3229 = vpack.c.bf16 %v3213, %v3213
        %v3230 = vpack.c.bf16 %v3214, %v3214
        %v3231 = vpack.c.bf16 %v3215, %v3215
        %v3232 = vpack.c.bf16 %v3216, %v3216
        %v3233 = vpack.c.bf16 %v3217, %v3217
        %v3234 = vmul.f32 %v3115, 0.5
        %v3235 = vmul.f32 %v3117, 0.5
        %v3236 = vmul.f32 %v3120, 0.5
        %v3237 = vmul.f32 %v3122, 0.5
        %v3238 = vmul.f32 %v3125, 0.5
        %v3239 = vmul.f32 %v3127, 0.5
        %v3240 = vmul.f32 %v3130, 0.5
        %v3241 = vmul.f32 %v3132, 0.5
        %v3242 = vmul.f32 %v3135, 0.5
        %v3243 = vmul.f32 %v3137, 0.5
        %v3244 = vmul.f32 %v3140, 0.5
        %v3245 = vmul.f32 %v3142, 0.5
        %v3246 = vmul.f32 %v3145, 0.5
        %v3247 = vmul.f32 %v3147, 0.5
        %v3248 = vmul.f32 %v3150, 0.5
        %v3249 = vmul.f32 %v3152, 0.5
        %v3250 = vtanh.pop %v3234
        %v3251 = vtanh.pop %v3235
        %v3252 = vtanh.pop %v3236
        %v3253 = vtanh.pop %v3237
        %v3254 = vtanh.pop %v3238
        %v3255 = vtanh.pop %v3239
        %v3256 = vtanh.pop %v3240
        %v3257 = vtanh.pop %v3241
        %v3258 = vtanh.pop %v3242
        %v3259 = vtanh.pop %v3243
        %v3260 = vtanh.pop %v3244
        %v3261 = vtanh.pop %v3245
        %v3262 = vtanh.pop %v3246
        %v3263 = vtanh.pop %v3247
        %v3264 = vtanh.pop %v3248
        %v3265 = vtanh.pop %v3249
        %v3266 = vmul.f32 %v3250, 0.5
        %v3267 = vmul.f32 %v3251, 0.5
        %v3268 = vmul.f32 %v3252, 0.5
        %v3269 = vmul.f32 %v3253, 0.5
        %v3270 = vmul.f32 %v3254, 0.5
        %v3271 = vmul.f32 %v3255, 0.5
        %v3272 = vmul.f32 %v3256, 0.5
        %v3273 = vmul.f32 %v3257, 0.5
        %v3274 = vmul.f32 %v3258, 0.5
        %v3275 = vmul.f32 %v3259, 0.5
        %v3276 = vmul.f32 %v3260, 0.5
        %v3277 = vmul.f32 %v3261, 0.5
        %v3278 = vmul.f32 %v3262, 0.5
        %v3279 = vmul.f32 %v3263, 0.5
        %v3280 = vmul.f32 %v3264, 0.5
        %v3281 = vmul.f32 %v3265, 0.5
        %v3282 = vadd.f32 %v3266, 0.5
        %v3283 = vadd.f32 %v3267, 0.5
        %v3284 = vadd.f32 %v3268, 0.5
        %v3285 = vadd.f32 %v3269, 0.5
        %v3286 = vadd.f32 %v3270, 0.5
        %v3287 = vadd.f32 %v3271, 0.5
        %v3288 = vadd.f32 %v3272, 0.5
        %v3289 = vadd.f32 %v3273, 0.5
        %v3290 = vadd.f32 %v3274, 0.5
        %v3291 = vadd.f32 %v3275, 0.5
        %v3292 = vadd.f32 %v3276, 0.5
        %v3293 = vadd.f32 %v3277, 0.5
        %v3294 = vadd.f32 %v3278, 0.5
        %v3295 = vadd.f32 %v3279, 0.5
        %v3296 = vadd.f32 %v3280, 0.5
        %v3297 = vadd.f32 %v3281, 0.5
        %v3298 = vpack.c.bf16 %v3282, %v3282
        %v3299 = vpack.c.bf16 %v3283, %v3283
        %v3300 = vpack.c.bf16 %v3284, %v3284
        %v3301 = vpack.c.bf16 %v3285, %v3285
        %v3302 = vpack.c.bf16 %v3286, %v3286
        %v3303 = vpack.c.bf16 %v3287, %v3287
        %v3304 = vpack.c.bf16 %v3288, %v3288
        %v3305 = vpack.c.bf16 %v3289, %v3289
        %v3306 = vpack.c.bf16 %v3290, %v3290
        %v3307 = vpack.c.bf16 %v3291, %v3291
        %v3308 = vpack.c.bf16 %v3292, %v3292
        %v3309 = vpack.c.bf16 %v3293, %v3293
        %v3310 = vpack.c.bf16 %v3294, %v3294
        %v3311 = vpack.c.bf16 %v3295, %v3295
        %v3312 = vpack.c.bf16 %v3296, %v3296
        %v3313 = vpack.c.bf16 %v3297, %v3297
        %v3330 = vunpack.c.l.b16 %v3218
        %v3331 = vunpack.c.l.b16 %v3219
        %v3332 = vunpack.c.l.b16 %v3220
        %v3333 = vunpack.c.l.b16 %v3221
        %v3334 = vunpack.c.l.b16 %v3222
        %v3335 = vunpack.c.l.b16 %v3223
        %v3336 = vunpack.c.l.b16 %v3224
        %v3337 = vunpack.c.l.b16 %v3225
        %v3338 = vunpack.c.l.b16 %v3226
        %v3339 = vunpack.c.l.b16 %v3227
        %v3340 = vunpack.c.l.b16 %v3228
        %v3341 = vunpack.c.l.b16 %v3229
        %v3342 = vunpack.c.l.b16 %v3230
        %v3343 = vunpack.c.l.b16 %v3231
        %v3344 = vunpack.c.l.b16 %v3232
        %v3345 = vunpack.c.l.b16 %v3233
        %v3346 = vpack.c.b16 %v3331, %v3330
        %v3347 = vpack.c.b16 %v3333, %v3332
        %v3348 = vpack.c.b16 %v3335, %v3334
        %v3349 = vpack.c.b16 %v3337, %v3336
        %v3350 = vpack.c.b16 %v3339, %v3338
        %v3351 = vpack.c.b16 %v3341, %v3340
        %v3352 = vpack.c.b16 %v3343, %v3342
        %v3353 = vpack.c.b16 %v3345, %v3344
        %v3378 = vunpack.c.l.b16 %v3298
        %v3379 = vunpack.c.l.b16 %v3299
        %v3380 = vunpack.c.l.b16 %v3300
        %v3381 = vunpack.c.l.b16 %v3301
        %v3382 = vunpack.c.l.b16 %v3302
        %v3383 = vunpack.c.l.b16 %v3303
        %v3384 = vunpack.c.l.b16 %v3304
        %v3385 = vunpack.c.l.b16 %v3305
        %v3386 = vunpack.c.l.b16 %v3306
        %v3387 = vunpack.c.l.b16 %v3307
        %v3388 = vunpack.c.l.b16 %v3308
        %v3389 = vunpack.c.l.b16 %v3309
        %v3390 = vunpack.c.l.b16 %v3310
        %v3391 = vunpack.c.l.b16 %v3311
        %v3392 = vunpack.c.l.b16 %v3312
        %v3393 = vunpack.c.l.b16 %v3313
        %v3394 = vpack.c.b16 %v3379, %v3378
        %v3395 = vpack.c.b16 %v3381, %v3380
        %v3396 = vpack.c.b16 %v3383, %v3382
        %v3397 = vpack.c.b16 %v3385, %v3384
        %v3398 = vpack.c.b16 %v3387, %v3386
        %v3399 = vpack.c.b16 %v3389, %v3388
        %v3400 = vpack.c.b16 %v3391, %v3390
        %v3401 = vpack.c.b16 %v3393, %v3392
        %v3410 = vld [vmem:[%s3] sm:$0xf]
        %v3411 = vld [vmem:[%s3 + $0x4] sm:$0xf]
        %v3412 = vld [vmem:[%s3 + $0x8] sm:$0xf]
        %v3413 = vld [vmem:[%s3 + $0xc] sm:$0xf]
        %v3414 = vld [vmem:[%s3 + $0x10] sm:$0xf]
        %v3415 = vld [vmem:[%s3 + $0x14] sm:$0xf]
        %v3416 = vld [vmem:[%s3 + $0x18] sm:$0xf]
        %v3417 = vld [vmem:[%s3 + $0x1c] sm:$0xf]
        %v3418 = vld [vmem:[%s3 + $0x20] sm:$0xf]
        %v3419 = vld [vmem:[%s3 + $0x24] sm:$0xf]
        %v3420 = vld [vmem:[%s3 + $0x28] sm:$0xf]
        %v3421 = vld [vmem:[%s3 + $0x2c] sm:$0xf]
        %v3422 = vld [vmem:[%s3 + $0x30] sm:$0xf]
        %v3423 = vld [vmem:[%s3 + $0x34] sm:$0xf]
        %v3424 = vld [vmem:[%s3 + $0x38] sm:$0xf]
        %v3425 = vld [vmem:[%s3 + $0x3c] sm:$0xf]
        %v3426 = vld [vmem:[%s3 + $0x40] sm:$0xf]
        %v3427 = vld [vmem:[%s3 + $0x44] sm:$0xf]
        %v3428 = vld [vmem:[%s3 + $0x48] sm:$0xf]
        %v3429 = vld [vmem:[%s3 + $0x4c] sm:$0xf]
        %v3430 = vld [vmem:[%s3 + $0x50] sm:$0xf]
        %v3431 = vld [vmem:[%s3 + $0x54] sm:$0xf]
        %v3432 = vld [vmem:[%s3 + $0x58] sm:$0xf]
        %v3433 = vld [vmem:[%s3 + $0x5c] sm:$0xf]
        %v3434 = vld [vmem:[%s3 + $0x60] sm:$0xf]
        %v3435 = vld [vmem:[%s3 + $0x64] sm:$0xf]
        %v3436 = vld [vmem:[%s3 + $0x68] sm:$0xf]
        %v3437 = vld [vmem:[%s3 + $0x6c] sm:$0xf]
        %v3438 = vld [vmem:[%s3 + $0x70] sm:$0xf]
        %v3439 = vld [vmem:[%s3 + $0x74] sm:$0xf]
        %v3440 = vld [vmem:[%s3 + $0x78] sm:$0xf]
        %v3441 = vld [vmem:[%s3 + $0x7c] sm:$0xf]
        %v3442 = vld [vmem:[%s7] sm:$0x1]
        %v3444 = vperm.slane %v3442, 0
        %v3478 = vunpack.c.l.b16 %v3410
        %v3479 = vunpack.c.l.b16 %v3411
        %v3480 = vunpack.c.l.b16 %v3412
        %v3481 = vunpack.c.l.b16 %v3413
        %v3482 = vunpack.c.l.b16 %v3414
        %v3483 = vunpack.c.l.b16 %v3415
        %v3484 = vunpack.c.l.b16 %v3416
        %v3485 = vunpack.c.l.b16 %v3417
        %v3486 = vunpack.c.l.b16 %v3418
        %v3487 = vunpack.c.l.b16 %v3419
        %v3488 = vunpack.c.l.b16 %v3420
        %v3489 = vunpack.c.l.b16 %v3421
        %v3490 = vunpack.c.l.b16 %v3422
        %v3491 = vunpack.c.l.b16 %v3423
        %v3492 = vunpack.c.l.b16 %v3424
        %v3493 = vunpack.c.l.b16 %v3425
        %v3494 = vunpack.c.l.b16 %v3426
        %v3495 = vunpack.c.l.b16 %v3427
        %v3496 = vunpack.c.l.b16 %v3428
        %v3497 = vunpack.c.l.b16 %v3429
        %v3498 = vunpack.c.l.b16 %v3430
        %v3499 = vunpack.c.l.b16 %v3431
        %v3500 = vunpack.c.l.b16 %v3432
        %v3501 = vunpack.c.l.b16 %v3433
        %v3502 = vunpack.c.l.b16 %v3434
        %v3503 = vunpack.c.l.b16 %v3435
        %v3504 = vunpack.c.l.b16 %v3436
        %v3505 = vunpack.c.l.b16 %v3437
        %v3506 = vunpack.c.l.b16 %v3438
        %v3507 = vunpack.c.l.b16 %v3439
        %v3508 = vunpack.c.l.b16 %v3440
        %v3509 = vunpack.c.l.b16 %v3441
        %v3510 = vpack.c.b16 %v3479, %v3478
        %v3511 = vpack.c.b16 %v3481, %v3480
        %v3512 = vpack.c.b16 %v3483, %v3482
        %v3513 = vpack.c.b16 %v3485, %v3484
        %v3514 = vpack.c.b16 %v3487, %v3486
        %v3515 = vpack.c.b16 %v3489, %v3488
        %v3516 = vpack.c.b16 %v3491, %v3490
        %v3517 = vpack.c.b16 %v3493, %v3492
        %v3518 = vpack.c.b16 %v3495, %v3494
        %v3519 = vpack.c.b16 %v3497, %v3496
        %v3520 = vpack.c.b16 %v3499, %v3498
        %v3521 = vpack.c.b16 %v3501, %v3500
        %v3522 = vpack.c.b16 %v3503, %v3502
        %v3523 = vpack.c.b16 %v3505, %v3504
        %v3524 = vpack.c.b16 %v3507, %v3506
        %v3525 = vpack.c.b16 %v3509, %v3508
        %3542 = vmatpush.bf16.msra.mxu0 %v3517
        %3543 = vmatpush.bf16.msra.mxu0 %v3516
        %3544 = vmatpush.bf16.msra.mxu0 %v3515
        %3545 = vmatpush.bf16.msra.mxu0 %v3514
        %3546 = vmatpush.bf16.msra.mxu0 %v3513
        %3547 = vmatpush.bf16.msra.mxu0 %v3512
        %3548 = vmatpush.bf16.msra.mxu0 %v3511
        %3549 = vmatpush.bf16.msra.mxu0 %v3510
        %3550 = vmatmul.bf16.gmra.mxu0 %v3346
        %v3551 = vpop.f32.mrf.mxu0
        %v3552 = vadd.f32 %v3444, %v3551
        %v3553 = vpop.f32.mrf.mxu0
        %v3554 = vadd.f32 %v3444, %v3553
        %3555 = vmatmul.bf16.gmra.mxu0 %v3347
        %v3556 = vpop.f32.mrf.mxu0
        %v3557 = vadd.f32 %v3444, %v3556
        %v3558 = vpop.f32.mrf.mxu0
        %v3559 = vadd.f32 %v3444, %v3558
        %3560 = vmatmul.bf16.gmra.mxu0 %v3348
        %v3561 = vpop.f32.mrf.mxu0
        %v3562 = vadd.f32 %v3444, %v3561
        %v3563 = vpop.f32.mrf.mxu0
        %v3564 = vadd.f32 %v3444, %v3563
        %3565 = vmatmul.bf16.gmra.mxu0 %v3349
        %v3566 = vpop.f32.mrf.mxu0
        %v3567 = vadd.f32 %v3444, %v3566
        %v3568 = vpop.f32.mrf.mxu0
        %v3569 = vadd.f32 %v3444, %v3568
        %3570 = vmatmul.bf16.gmra.mxu0 %v3350
        %v3571 = vpop.f32.mrf.mxu0
        %v3572 = vadd.f32 %v3444, %v3571
        %v3573 = vpop.f32.mrf.mxu0
        %v3574 = vadd.f32 %v3444, %v3573
        %3575 = vmatmul.bf16.gmra.mxu0 %v3351
        %v3576 = vpop.f32.mrf.mxu0
        %v3577 = vadd.f32 %v3444, %v3576
        %v3578 = vpop.f32.mrf.mxu0
        %v3579 = vadd.f32 %v3444, %v3578
        %3580 = vmatmul.bf16.gmra.mxu0 %v3352
        %v3581 = vpop.f32.mrf.mxu0
        %v3582 = vadd.f32 %v3444, %v3581
        %v3583 = vpop.f32.mrf.mxu0
        %v3584 = vadd.f32 %v3444, %v3583
        %3585 = vmatmul.bf16.gmra.mxu0 %v3353
        %v3586 = vpop.f32.mrf.mxu0
        %v3587 = vadd.f32 %v3444, %v3586
        %v3588 = vpop.f32.mrf.mxu0
        %v3589 = vadd.f32 %v3444, %v3588
        %3590 = vdwg.mxu0
        %3591 = vmatpush.bf16.msra.mxu0 %v3525
        %3592 = vmatpush.bf16.msra.mxu0 %v3524
        %3593 = vmatpush.bf16.msra.mxu0 %v3523
        %3594 = vmatpush.bf16.msra.mxu0 %v3522
        %3595 = vmatpush.bf16.msra.mxu0 %v3521
        %3596 = vmatpush.bf16.msra.mxu0 %v3520
        %3597 = vmatpush.bf16.msra.mxu0 %v3519
        %3598 = vmatpush.bf16.msra.mxu0 %v3518
        %3599 = vmatmul.bf16.gmra.mxu0 %v3394
        %v3600 = vpop.f32.mrf.mxu0
        %v3601 = vadd.f32 %v3552, %v3600
        %v3602 = vpop.f32.mrf.mxu0
        %v3603 = vadd.f32 %v3554, %v3602
        %3604 = vmatmul.bf16.gmra.mxu0 %v3395
        %v3605 = vpop.f32.mrf.mxu0
        %v3606 = vadd.f32 %v3557, %v3605
        %v3607 = vpop.f32.mrf.mxu0
        %v3608 = vadd.f32 %v3559, %v3607
        %3609 = vmatmul.bf16.gmra.mxu0 %v3396
        %v3610 = vpop.f32.mrf.mxu0
        %v3611 = vadd.f32 %v3562, %v3610
        %v3612 = vpop.f32.mrf.mxu0
        %v3613 = vadd.f32 %v3564, %v3612
        %3614 = vmatmul.bf16.gmra.mxu0 %v3397
        %v3615 = vpop.f32.mrf.mxu0
        %v3616 = vadd.f32 %v3567, %v3615
        %v3617 = vpop.f32.mrf.mxu0
        %v3618 = vadd.f32 %v3569, %v3617
        %3619 = vmatmul.bf16.gmra.mxu0 %v3398
        %v3620 = vpop.f32.mrf.mxu0
        %v3621 = vadd.f32 %v3572, %v3620
        %v3622 = vpop.f32.mrf.mxu0
        %v3623 = vadd.f32 %v3574, %v3622
        %3624 = vmatmul.bf16.gmra.mxu0 %v3399
        %v3625 = vpop.f32.mrf.mxu0
        %v3626 = vadd.f32 %v3577, %v3625
        %v3627 = vpop.f32.mrf.mxu0
        %v3628 = vadd.f32 %v3579, %v3627
        %3629 = vmatmul.bf16.gmra.mxu0 %v3400
        %v3630 = vpop.f32.mrf.mxu0
        %v3631 = vadd.f32 %v3582, %v3630
        %v3632 = vpop.f32.mrf.mxu0
        %v3633 = vadd.f32 %v3584, %v3632
        %3634 = vmatmul.bf16.gmra.mxu0 %v3401
        %v3635 = vpop.f32.mrf.mxu0
        %v3636 = vadd.f32 %v3587, %v3635
        %v3637 = vpop.f32.mrf.mxu0
        %v3638 = vadd.f32 %v3589, %v3637
        %3639 = vdwg.mxu0
        %v3640 = vmul.f32 %v3601, 0.5
        %v3641 = vmul.f32 %v3603, 0.5
        %v3642 = vmul.f32 %v3606, 0.5
        %v3643 = vmul.f32 %v3608, 0.5
        %v3644 = vmul.f32 %v3611, 0.5
        %v3645 = vmul.f32 %v3613, 0.5
        %v3646 = vmul.f32 %v3616, 0.5
        %v3647 = vmul.f32 %v3618, 0.5
        %v3648 = vmul.f32 %v3621, 0.5
        %v3649 = vmul.f32 %v3623, 0.5
        %v3650 = vmul.f32 %v3626, 0.5
        %v3651 = vmul.f32 %v3628, 0.5
        %v3652 = vmul.f32 %v3631, 0.5
        %v3653 = vmul.f32 %v3633, 0.5
        %v3654 = vmul.f32 %v3636, 0.5
        %v3655 = vmul.f32 %v3638, 0.5
        %v3656 = vtanh.pop %v3640
        %v3657 = vtanh.pop %v3641
        %v3658 = vtanh.pop %v3642
        %v3659 = vtanh.pop %v3643
        %v3660 = vtanh.pop %v3644
        %v3661 = vtanh.pop %v3645
        %v3662 = vtanh.pop %v3646
        %v3663 = vtanh.pop %v3647
        %v3664 = vtanh.pop %v3648
        %v3665 = vtanh.pop %v3649
        %v3666 = vtanh.pop %v3650
        %v3667 = vtanh.pop %v3651
        %v3668 = vtanh.pop %v3652
        %v3669 = vtanh.pop %v3653
        %v3670 = vtanh.pop %v3654
        %v3671 = vtanh.pop %v3655
        %v3672 = vmul.f32 %v3656, 0.5
        %v3673 = vmul.f32 %v3657, 0.5
        %v3674 = vmul.f32 %v3658, 0.5
        %v3675 = vmul.f32 %v3659, 0.5
        %v3676 = vmul.f32 %v3660, 0.5
        %v3677 = vmul.f32 %v3661, 0.5
        %v3678 = vmul.f32 %v3662, 0.5
        %v3679 = vmul.f32 %v3663, 0.5
        %v3680 = vmul.f32 %v3664, 0.5
        %v3681 = vmul.f32 %v3665, 0.5
        %v3682 = vmul.f32 %v3666, 0.5
        %v3683 = vmul.f32 %v3667, 0.5
        %v3684 = vmul.f32 %v3668, 0.5
        %v3685 = vmul.f32 %v3669, 0.5
        %v3686 = vmul.f32 %v3670, 0.5
        %v3687 = vmul.f32 %v3671, 0.5
        %v3688 = vadd.f32 %v3672, 0.5
        %v3689 = vadd.f32 %v3673, 0.5
        %v3690 = vadd.f32 %v3674, 0.5
        %v3691 = vadd.f32 %v3675, 0.5
        %v3692 = vadd.f32 %v3676, 0.5
        %v3693 = vadd.f32 %v3677, 0.5
        %v3694 = vadd.f32 %v3678, 0.5
        %v3695 = vadd.f32 %v3679, 0.5
        %v3696 = vadd.f32 %v3680, 0.5
        %v3697 = vadd.f32 %v3681, 0.5
        %v3698 = vadd.f32 %v3682, 0.5
        %v3699 = vadd.f32 %v3683, 0.5
        %v3700 = vadd.f32 %v3684, 0.5
        %v3701 = vadd.f32 %v3685, 0.5
        %v3702 = vadd.f32 %v3686, 0.5
        %v3703 = vadd.f32 %v3687, 0.5
        %v3704 = vpack.c.bf16 %v3689, %v3688
        %v3705 = vpack.c.bf16 %v3691, %v3690
        %v3706 = vpack.c.bf16 %v3693, %v3692
        %v3707 = vpack.c.bf16 %v3695, %v3694
        %v3708 = vpack.c.bf16 %v3697, %v3696
        %v3709 = vpack.c.bf16 %v3699, %v3698
        %v3710 = vpack.c.bf16 %v3701, %v3700
        %v3711 = vpack.c.bf16 %v3703, %v3702
        %v3712 = vld [vmem:[%s4] sm:$0xf]
        %v3713 = vld [vmem:[%s4 + $0x4] sm:$0xf]
        %v3714 = vld [vmem:[%s4 + $0x8] sm:$0xf]
        %v3715 = vld [vmem:[%s4 + $0xc] sm:$0xf]
        %v3716 = vld [vmem:[%s8] sm:$0x1]
        %v3718 = vperm.slane %v3716, 0
        %v3724 = vunpack.c.l.b16 %v3712
        %v3725 = vunpack.c.l.b16 %v3713
        %v3726 = vunpack.c.l.b16 %v3714
        %v3727 = vunpack.c.l.b16 %v3715
        %v3728 = vpack.c.b16 %v3725, %v3724
        %v3729 = vpack.c.b16 %v3727, %v3726
        %vm3732 = vcmask 261120
        %v3734 = vsel %vm3732, %v3704, 0
        %v3737 = vsel %vm3732, %v3705, 0
        %v3740 = vsel %vm3732, %v3706, 0
        %v3743 = vsel %vm3732, %v3707, 0
        %v3746 = vsel %vm3732, %v3708, 0
        %v3749 = vsel %vm3732, %v3709, 0
        %v3752 = vsel %vm3732, %v3710, 0
        %v3755 = vsel %vm3732, %v3711, 0
        %3757 = vmatpush.bf16.msra.mxu0 0
        %3758 = vmatpush.bf16.msra.mxu0 0
        %3759 = vmatpush.bf16.msra.mxu0 0
        %3760 = vmatpush.bf16.msra.mxu0 0
        %3761 = vmatpush.bf16.msra.mxu0 0
        %3762 = vmatpush.bf16.msra.mxu0 0
        %3763 = vmatpush.bf16.msra.mxu0 %v3729
        %3764 = vmatpush.bf16.msra.mxu0 %v3728
        %3765 = vmatmul.bf16.gmra.mxu0 %v3734
        %v3766 = vpop.f32.mrf.mxu0
        %v3767 = vadd.f32 %v3718, %v3766
        %v3768 = vpop.f32.mrf.mxu0
        %v3769 = vadd.f32 %v3718, %v3768
        %3770 = vmatmul.bf16.gmra.mxu0 %v3737
        %v3771 = vpop.f32.mrf.mxu0
        %v3772 = vadd.f32 %v3718, %v3771
        %v3773 = vpop.f32.mrf.mxu0
        %v3774 = vadd.f32 %v3718, %v3773
        %3775 = vmatmul.bf16.gmra.mxu0 %v3740
        %v3776 = vpop.f32.mrf.mxu0
        %v3777 = vadd.f32 %v3718, %v3776
        %v3778 = vpop.f32.mrf.mxu0
        %v3779 = vadd.f32 %v3718, %v3778
        %3780 = vmatmul.bf16.gmra.mxu0 %v3743
        %v3781 = vpop.f32.mrf.mxu0
        %v3782 = vadd.f32 %v3718, %v3781
        %v3783 = vpop.f32.mrf.mxu0
        %v3784 = vadd.f32 %v3718, %v3783
        %3785 = vmatmul.bf16.gmra.mxu0 %v3746
        %v3786 = vpop.f32.mrf.mxu0
        %v3787 = vadd.f32 %v3718, %v3786
        %v3788 = vpop.f32.mrf.mxu0
        %v3789 = vadd.f32 %v3718, %v3788
        %3790 = vmatmul.bf16.gmra.mxu0 %v3749
        %v3791 = vpop.f32.mrf.mxu0
        %v3792 = vadd.f32 %v3718, %v3791
        %v3793 = vpop.f32.mrf.mxu0
        %v3794 = vadd.f32 %v3718, %v3793
        %3795 = vmatmul.bf16.gmra.mxu0 %v3752
        %v3796 = vpop.f32.mrf.mxu0
        %v3797 = vadd.f32 %v3718, %v3796
        %v3798 = vpop.f32.mrf.mxu0
        %v3799 = vadd.f32 %v3718, %v3798
        %3800 = vmatmul.bf16.gmra.mxu0 %v3755
        %v3801 = vpop.f32.mrf.mxu0
        %v3802 = vadd.f32 %v3718, %v3801
        %v3803 = vpop.f32.mrf.mxu0
        %v3804 = vadd.f32 %v3718, %v3803
        %3805 = vdwg.mxu0
        %v3806 = vmax.f32 %v3767, 0.0
        %v3807 = vmax.f32 %v3769, 0.0
        %v3808 = vmax.f32 %v3772, 0.0
        %v3809 = vmax.f32 %v3774, 0.0
        %v3810 = vmax.f32 %v3777, 0.0
        %v3811 = vmax.f32 %v3779, 0.0
        %v3812 = vmax.f32 %v3782, 0.0
        %v3813 = vmax.f32 %v3784, 0.0
        %v3814 = vmax.f32 %v3787, 0.0
        %v3815 = vmax.f32 %v3789, 0.0
        %v3816 = vmax.f32 %v3792, 0.0
        %v3817 = vmax.f32 %v3794, 0.0
        %v3818 = vmax.f32 %v3797, 0.0
        %v3819 = vmax.f32 %v3799, 0.0
        %v3820 = vmax.f32 %v3802, 0.0
        %v3821 = vmax.f32 %v3804, 0.0
        %3822 = vst [vmem:[%s351] sm:$0xff] %v3806
        %3823 = vst [vmem:[%s351 + $0x8] sm:$0xff] %v3807
        %3824 = vst [vmem:[%s351 + $0x10] sm:$0xff] %v3808
        %3825 = vst [vmem:[%s351 + $0x18] sm:$0xff] %v3809
        %3826 = vst [vmem:[%s351 + $0x20] sm:$0xff] %v3810
        %3827 = vst [vmem:[%s351 + $0x28] sm:$0xff] %v3811
        %3828 = vst [vmem:[%s351 + $0x30] sm:$0xff] %v3812
        %3829 = vst [vmem:[%s351 + $0x38] sm:$0xff] %v3813
        %3830 = vst [vmem:[%s351 + $0x40] sm:$0xff] %v3814
        %3831 = vst [vmem:[%s351 + $0x48] sm:$0xff] %v3815
        %3832 = vst [vmem:[%s351 + $0x50] sm:$0xff] %v3816
        %3833 = vst [vmem:[%s351 + $0x58] sm:$0xff] %v3817
        %3834 = vst [vmem:[%s351 + $0x60] sm:$0xff] %v3818
        %3835 = vst [vmem:[%s351 + $0x68] sm:$0xff] %v3819
        %3836 = vst [vmem:[%s351 + $0x70] sm:$0xff] %v3820
        %3837 = vst [vmem:[%s351 + $0x78] sm:$0xff] %v3821
        %s3838 = smul.u32 16, %s21
        %p3839 = scmp.lt.s32.totalorder %s3838, 31
        %s3840 = scalar_select %p3839, %s3838, 31
        %s3841 = smul.addr %s3840, 8
        %s3842 = scalar_lea.vmem %s9, %s3841
        // Predicated region
        $region61: #{conv1d_pose_classifier.1} parent=55 // pred_check
          %p3843 = pneg %p233
        $region62: #{conv1d_pose_classifier.1} parent=55 // pred_check_branch
          %3845 = sbr.rel (%p3843) target = $region64
        $region63: #{conv1d_pose_classifier.1} parent=55 // pred_region
          %s3846 = smul.u32 16, %s21
        $region64: #{conv1d_pose_classifier.1} parent=55 // pred_fallthru
          _
      $region56: #{conv1d_pose_classifier.1} parent=5 // pred_fallthru
        _
      %p3847 = scmp.le.s32.totalorder 2, %s16
      // Predicated region
      $region65: #{conv1d_pose_classifier.1} parent=5 // pred_check
        %p3848 = pneg %p3847
      $region66: #{conv1d_pose_classifier.1} parent=5 // pred_check_branch
        %3850 = sbr.rel (%p3848) target = $region68
      $region67: #{conv1d_pose_classifier.1} parent=5 // pred_region
        %s3851 = ssub.s32 %s16, 2
        // Predicated region
        $region69: #{conv1d_pose_classifier.1} parent=67 // pred_check
          %p3852 = pneg %p239
        $region70: #{conv1d_pose_classifier.1} parent=67 // pred_check_branch
          %3854 = sbr.rel (%p3852) target = $region72
        $region71: #{conv1d_pose_classifier.1} parent=67 // pred_region
          %s3855 = smul.u32 16, %s22
          %p3856 = scmp.lt.s32.totalorder %s3855, 31
          %s3857 = scalar_select %p3856, %s3855, 31
          %s3858 = smul.addr %s3857, 8
          %s3859 = scalar_lea.vmem %s9, %s3858
        $region72: #{conv1d_pose_classifier.1} parent=67 // pred_fallthru
          _
      $region68: #{conv1d_pose_classifier.1} parent=5 // pred_fallthru
        _
    $region6: #{conv1d_pose_classifier.1} parent=1 // loop_footer
      %s20 = sadd.s32 1, %s16
    $region7: #{conv1d_pose_classifier.1} parent=1 // loop_footer_branch
      %15 = sbr.rel target = $region3
    $region8: #{conv1d_pose_classifier.1} parent=1 // loop_exit
      _
    %3860 = vsyncpa [#allocation3], 1
    %s3861 = scalar_lea.sflag [#allocation3], 1
    %3862 = vsyncpa %s3861, 1

</llo_original>
